<compile_context>
chip_gen: v7x
topology: tpu7x:2x2x1
jax: 0.10.0
libtpu: 0.0.40
codegen_flags: <defaults>
</compile_context>

<pallas_src>
import functools

import jax
import jax.numpy as jnp
from jax.experimental import pallas as pl
from jax.experimental.pallas import tpu as pltpu

EPS = 1e-5  # torch.nn.LayerNorm default eps


def _layernorm(x, gamma, beta):
    mean = jnp.mean(x, axis=-1, keepdims=True)
    var = jnp.mean((x - mean) ** 2, axis=-1, keepdims=True)
    return (x - mean) * jax.lax.rsqrt(var + EPS) * gamma + beta


# ----------------------------- fused Pallas kernel ---------------------------


def encoder_kernel(x_ref, pos_ref,
                   ag_ref, ab_ref, wq_ref, bq_ref, wk_ref, bk_ref,
                   wv_ref, bv_ref, wo_ref, bo_ref,
                   fg_ref, fb_ref, w1_ref, b1_ref, w2_ref, b2_ref,
                   o_ref, *, nb_layers, n_heads, d_head, matmul_dtype):
    """Full encoder forward for one batch element; activation stays in VMEM."""
    T, D = o_ref.shape[1], o_ref.shape[2]
    scale = 1.0 / float(d_head) ** 0.5

    x = x_ref[0] + pos_ref[...]                       # fused positional-embedding add

    for l in range(nb_layers):                        # static unroll; weights resident in VMEM
        # ------------- self-attention sub-layer: x = x + att(LN(x)) -------------
        xn = _layernorm(x, ag_ref[l], ab_ref[l]).astype(matmul_dtype)
        q = jnp.dot(xn, wq_ref[l], preferred_element_type=jnp.float32) + bq_ref[l]
        k = jnp.dot(xn, wk_ref[l], preferred_element_type=jnp.float32) + bk_ref[l]
        v = jnp.dot(xn, wv_ref[l], preferred_element_type=jnp.float32) + bv_ref[l]
        q = q * scale                                 # hoisted 1/sqrt(d_head)

        # batch all heads into one MXU stream: (T, H*dh) -> (H, T, dh)
        qh = jnp.transpose(q.reshape(T, n_heads, d_head), (1, 0, 2)).astype(matmul_dtype)
        kh = jnp.transpose(k.reshape(T, n_heads, d_head), (1, 0, 2)).astype(matmul_dtype)
        vh = jnp.transpose(v.reshape(T, n_heads, d_head), (1, 0, 2)).astype(matmul_dtype)

        s = jnp.einsum("htd,hsd->hts", qh, kh, preferred_element_type=jnp.float32)
        s = s - jnp.max(s, axis=-1, keepdims=True)    # safe softmax (f32)
        p = jnp.exp(s)
        p = p * pl.reciprocal(jnp.sum(p, axis=-1, keepdims=True), approx=True)
        # TODO(synk): torch.nn.Dropout is identity in eval/inference mode; omitted here.
        oh = jnp.einsum("hts,hsd->htd", p.astype(matmul_dtype), vh,
                        preferred_element_type=jnp.float32)
        att = jnp.transpose(oh, (1, 0, 2)).reshape(T, n_heads * d_head)
        proj = jnp.dot(att.astype(matmul_dtype), wo_ref[l],
                       preferred_element_type=jnp.float32) + bo_ref[l]
        x = x + proj                                  # residual

        # ------------- feed-forward sub-layer: x = x + ff(LN(x)) ----------------
        xn = _layernorm(x, fg_ref[l], fb_ref[l]).astype(matmul_dtype)
        h = jnp.dot(xn, w1_ref[l], preferred_element_type=jnp.float32) + b1_ref[l]
        h = jnp.maximum(h, 0.0)                       # ReLU
        # TODO(synk): torch.nn.Dropout is identity in eval/inference mode; omitted here.
        out = jnp.dot(h.astype(matmul_dtype), w2_ref[l],
                      preferred_element_type=jnp.float32) + b2_ref[l]
        x = x + out                                   # residual

    o_ref[0] = x


# ----------------------------- wrapper ---------------------------------------


def _const_spec(shape):
    # whole array as one block, same block index every grid step -> loaded once
    return pl.BlockSpec(shape, lambda b: tuple(0 for _ in shape))


def encoder_forward(x, params, *, n_heads, d_head, matmul_dtype=jnp.bfloat16):
    B, T, D = x.shape
    a, f = params["att"], params["ff"]
    nb_layers = a["wq"].shape[0]
    mm = lambda w: w.astype(matmul_dtype)             # bf16 MXU operands; f32 accumulate
    pos = params["pos"][0, :T, :]                     # (T, D)
    weights = (pos,
               a["ln_g"], a["ln_b"], mm(a["wq"]), a["bq"], mm(a["wk"]), a["bk"],
               mm(a["wv"]), a["bv"], mm(a["wo"]), a["bo"],
               f["ln_g"], f["ln_b"], mm(f["w1"]), f["b1"], mm(f["w2"]), f["b2"])
    kernel = functools.partial(encoder_kernel, nb_layers=nb_layers,
                               n_heads=n_heads, d_head=d_head,
                               matmul_dtype=matmul_dtype)
    # NOTE: at production sizes (d_model=512, d_ff=1024, 6 layers) the stacked weights
    # are tens of MB; then budget VMEM explicitly (vmem_limit_bytes, single-buffered
    # constants via pl.Buffered(1) or memory_space=pl.ANY + one-shot copies) and tile
    # T / d_ff flash-style. At these toy sizes everything fits comfortably.
    return pl.pallas_call(
        kernel,
        out_shape=jax.ShapeDtypeStruct((B, T, D), jnp.float32),
        grid=(B,),
        in_specs=[pl.BlockSpec((1, T, D), lambda b: (b, 0, 0))]
        + [_const_spec(w.shape) for w in weights],
        out_specs=pl.BlockSpec((1, T, D), lambda b: (b, 0, 0)),
        compiler_params=pltpu.CompilerParams(dimension_semantics=("parallel",)),
    )(x, *weights)


# ----------------------------- pure-JAX reference ----------------------------


def ref_encoder(x, params, n_heads, d_head):
    B, T, D = x.shape
    a, f = params["att"], params["ff"]
    x = x + params["pos"][:, :T, :]
    for l in range(a["wq"].shape[0]):
        xn = _layernorm(x, a["ln_g"][l], a["ln_b"][l])
        q = (xn @ a["wq"][l] + a["bq"][l]).reshape(B, T, n_heads, d_head)
        k = (xn @ a["wk"][l] + a["bk"][l]).reshape(B, T, n_heads, d_head)
        v = (xn @ a["wv"][l] + a["bv"][l]).reshape(B, T, n_heads, d_head)
        s = jnp.einsum("bihd,bjhd->bhij", q, k) / jnp.sqrt(jnp.float32(d_head))
        p = jax.nn.softmax(s, axis=-1)
        o = jnp.einsum("bhij,bjhd->bihd", p, v).reshape(B, T, n_heads * d_head)
        x = x + (o @ a["wo"][l] + a["bo"][l])
        xn = _layernorm(x, f["ln_g"][l], f["ln_b"][l])
        h = jnp.maximum(xn @ f["w1"][l] + f["b1"][l], 0.0)
        x = x + (h @ f["w2"][l] + f["b2"][l])
    return x


# ----------------------------- params -----------------------------------------


def init_params(key, *, nb_layers, seq_len, d_model, n_heads, d_head, d_ff):
    dh = n_heads * d_head
    kpos, key = jax.random.split(key)

    def lin(k, fan_in, fan_out):
        kw, kb = jax.random.split(k)
        s = 1.0 / float(fan_in) ** 0.5
        w = jax.random.uniform(kw, (nb_layers, fan_in, fan_out), jnp.float32, -s, s)
        b = jax.random.uniform(kb, (nb_layers, 1, fan_out), jnp.float32, -s, s)
        return w, b

    ks = jax.random.split(key, 6)
    wq, bq = lin(ks[0], d_model, dh)
    wk, bk = lin(ks[1], d_model, dh)
    wv, bv = lin(ks[2], d_model, dh)
    wo, bo = lin(ks[3], dh, d_model)
    w1, b1 = lin(ks[4], d_model, d_ff)
    w2, b2 = lin(ks[5], d_ff, d_model)
    ones = jnp.ones((nb_layers, 1, d_model), jnp.float32)
    zeros = jnp.zeros((nb_layers, 1, d_model), jnp.float32)
    return {
        "pos": jax.random.normal(kpos, (1, seq_len, d_model), jnp.float32),
        "att": dict(ln_g=ones, ln_b=zeros, wq=wq, bq=bq, wk=wk, bk=bk,
                    wv=wv, bv=bv, wo=wo, bo=bo),
        "ff": dict(ln_g=ones, ln_b=zeros, w1=w1, b1=b1, w2=w2, b2=b2),
    }


# ----------------------------- main --------------------------------------------

if __name__ == "__main__":
    B, T, D = 2, 8, 32
    N_HEADS, D_HEAD, D_FF, NB_LAYERS = 4, 8, 64, 2

    key = jax.random.PRNGKey(0)
    kx, kp = jax.random.split(key)
    x = jax.random.normal(kx, (B, T, D), jnp.float32)
    params = init_params(kp, nb_layers=NB_LAYERS, seq_len=T, d_model=D,
                         n_heads=N_HEADS, d_head=D_HEAD, d_ff=D_FF)

    out = jax.block_until_ready(
        encoder_forward(x, params, n_heads=N_HEADS, d_head=D_HEAD))

    ref = jax.block_until_ready(ref_encoder(x, params, N_HEADS, D_HEAD))
    assert out.shape == (B, T, D)
    # bf16 MXU operands + approx reciprocal in the kernel vs. pure-f32 reference
    # -> loosened tolerance (per review note on bf16).
    assert jnp.allclose(out, ref, rtol=5e-2, atol=5e-2), "mismatch vs pure-JAX reference"

    print("KERNEL_OK")
</pallas_src>

<mosaic_0001>
module attributes {stable_mosaic.version = 11 : i64} {
  func.func @encoder_kernel(%arg0: i32, %arg1: memref<1x8x32xf32, #tpu.memory_space<vmem>>, %arg2: memref<8x32xf32, #tpu.memory_space<vmem>>, %arg3: memref<2x1x32xf32, #tpu.memory_space<vmem>>, %arg4: memref<2x1x32xf32, #tpu.memory_space<vmem>>, %arg5: memref<2x32x32xbf16, #tpu.memory_space<vmem>>, %arg6: memref<2x1x32xf32, #tpu.memory_space<vmem>>, %arg7: memref<2x32x32xbf16, #tpu.memory_space<vmem>>, %arg8: memref<2x1x32xf32, #tpu.memory_space<vmem>>, %arg9: memref<2x32x32xbf16, #tpu.memory_space<vmem>>, %arg10: memref<2x1x32xf32, #tpu.memory_space<vmem>>, %arg11: memref<2x32x32xbf16, #tpu.memory_space<vmem>>, %arg12: memref<2x1x32xf32, #tpu.memory_space<vmem>>, %arg13: memref<2x1x32xf32, #tpu.memory_space<vmem>>, %arg14: memref<2x1x32xf32, #tpu.memory_space<vmem>>, %arg15: memref<2x32x64xbf16, #tpu.memory_space<vmem>>, %arg16: memref<2x1x64xf32, #tpu.memory_space<vmem>>, %arg17: memref<2x64x32xbf16, #tpu.memory_space<vmem>>, %arg18: memref<2x1x32xf32, #tpu.memory_space<vmem>>, %arg19: memref<1x8x32xf32, #tpu.memory_space<vmem>>) attributes {dimension_semantics = [#tpu.dimension_semantics<parallel>], iteration_bounds = array<i64: 2>, scalar_prefetch = 0 : i64, scratch_operands = 0 : i64, tpu.core_type = #tpu.core_type<tc>, window_params = [{transform_indices = @transform_0, window_bounds = array<i64: 1, 8, 32>}, {pipeline_mode = #tpu.pipeline_mode<synchronous>, transform_indices = @transform_1, window_bounds = array<i64: 8, 32>}, {pipeline_mode = #tpu.pipeline_mode<synchronous>, transform_indices = @transform_2, window_bounds = array<i64: 2, 1, 32>}, {pipeline_mode = #tpu.pipeline_mode<synchronous>, transform_indices = @transform_3, window_bounds = array<i64: 2, 1, 32>}, {pipeline_mode = #tpu.pipeline_mode<synchronous>, transform_indices = @transform_4, window_bounds = array<i64: 2, 32, 32>}, {pipeline_mode = #tpu.pipeline_mode<synchronous>, transform_indices = @transform_5, window_bounds = array<i64: 2, 1, 32>}, {pipeline_mode = #tpu.pipeline_mode<synchronous>, transform_indices = @transform_6, window_bounds = array<i64: 2, 32, 32>}, {pipeline_mode = #tpu.pipeline_mode<synchronous>, transform_indices = @transform_7, window_bounds = array<i64: 2, 1, 32>}, {pipeline_mode = #tpu.pipeline_mode<synchronous>, transform_indices = @transform_8, window_bounds = array<i64: 2, 32, 32>}, {pipeline_mode = #tpu.pipeline_mode<synchronous>, transform_indices = @transform_9, window_bounds = array<i64: 2, 1, 32>}, {pipeline_mode = #tpu.pipeline_mode<synchronous>, transform_indices = @transform_10, window_bounds = array<i64: 2, 32, 32>}, {pipeline_mode = #tpu.pipeline_mode<synchronous>, transform_indices = @transform_11, window_bounds = array<i64: 2, 1, 32>}, {pipeline_mode = #tpu.pipeline_mode<synchronous>, transform_indices = @transform_12, window_bounds = array<i64: 2, 1, 32>}, {pipeline_mode = #tpu.pipeline_mode<synchronous>, transform_indices = @transform_13, window_bounds = array<i64: 2, 1, 32>}, {pipeline_mode = #tpu.pipeline_mode<synchronous>, transform_indices = @transform_14, window_bounds = array<i64: 2, 32, 64>}, {pipeline_mode = #tpu.pipeline_mode<synchronous>, transform_indices = @transform_15, window_bounds = array<i64: 2, 1, 64>}, {pipeline_mode = #tpu.pipeline_mode<synchronous>, transform_indices = @transform_16, window_bounds = array<i64: 2, 64, 32>}, {pipeline_mode = #tpu.pipeline_mode<synchronous>, transform_indices = @transform_17, window_bounds = array<i64: 2, 1, 32>}, {transform_indices = @transform_18, window_bounds = array<i64: 1, 8, 32>}]} {
    %c0 = arith.constant 0 : index
    %c0_0 = arith.constant 0 : index
    %c0_1 = arith.constant 0 : index
    %0 = vector.load %arg1[%c0, %c0_0, %c0_1] : memref<1x8x32xf32, #tpu.memory_space<vmem>>, vector<1x8x32xf32>
    %1 = vector.shape_cast %0 : vector<1x8x32xf32> to vector<8x32xf32>
    %c0_2 = arith.constant 0 : index
    %c0_3 = arith.constant 0 : index
    %2 = vector.load %arg2[%c0_2, %c0_3] : memref<8x32xf32, #tpu.memory_space<vmem>>, vector<8x32xf32>
    %3 = arith.addf %1, %2 : vector<8x32xf32>
    %c0_4 = arith.constant 0 : index
    %c0_5 = arith.constant 0 : index
    %c0_6 = arith.constant 0 : index
    %4 = vector.load %arg3[%c0_4, %c0_5, %c0_6] : memref<2x1x32xf32, #tpu.memory_space<vmem>>, vector<1x1x32xf32>
    %5 = vector.shape_cast %4 : vector<1x1x32xf32> to vector<1x32xf32>
    %c0_7 = arith.constant 0 : index
    %c0_8 = arith.constant 0 : index
    %c0_9 = arith.constant 0 : index
    %6 = vector.load %arg4[%c0_7, %c0_8, %c0_9] : memref<2x1x32xf32, #tpu.memory_space<vmem>>, vector<1x1x32xf32>
    %7 = vector.shape_cast %6 : vector<1x1x32xf32> to vector<1x32xf32>
    %cst = arith.constant dense<0.000000e+00> : vector<8xf32>
    %8 = vector.multi_reduction <add>, %3, %cst [1] : vector<8x32xf32> to vector<8xf32>
    %9 = vector.shape_cast %8 : vector<8xf32> to vector<8x1xf32>
    %cst_10 = arith.constant 3.200000e+01 : f32
    %10 = vector.broadcast %cst_10 : f32 to vector<8x1xf32>
    %11 = arith.divf %9, %10 : vector<8x1xf32>
    %12 = vector.broadcast %11 : vector<8x1xf32> to vector<8x32xf32>
    %13 = arith.subf %3, %12 : vector<8x32xf32>
    %14 = arith.mulf %13, %13 : vector<8x32xf32>
    %cst_11 = arith.constant dense<0.000000e+00> : vector<8xf32>
    %15 = vector.multi_reduction <add>, %14, %cst_11 [1] : vector<8x32xf32> to vector<8xf32>
    %16 = vector.shape_cast %15 : vector<8xf32> to vector<8x1xf32>
    %cst_12 = arith.constant 3.200000e+01 : f32
    %17 = vector.broadcast %cst_12 : f32 to vector<8x1xf32>
    %18 = arith.divf %16, %17 : vector<8x1xf32>
    %19 = vector.broadcast %11 : vector<8x1xf32> to vector<8x32xf32>
    %20 = arith.subf %3, %19 : vector<8x32xf32>
    %cst_13 = arith.constant 9.99999974E-6 : f32
    %21 = vector.broadcast %cst_13 : f32 to vector<8x1xf32>
    %22 = arith.addf %18, %21 : vector<8x1xf32>
    %23 = math.rsqrt %22 : vector<8x1xf32>
    %24 = vector.broadcast %23 : vector<8x1xf32> to vector<8x32xf32>
    %25 = arith.mulf %20, %24 : vector<8x32xf32>
    %26 = vector.broadcast %5 : vector<1x32xf32> to vector<8x32xf32>
    %27 = arith.mulf %25, %26 : vector<8x32xf32>
    %28 = vector.broadcast %7 : vector<1x32xf32> to vector<8x32xf32>
    %29 = arith.addf %27, %28 : vector<8x32xf32>
    %30 = arith.truncf %29 : vector<8x32xf32> to vector<8x32xbf16>
    %c0_14 = arith.constant 0 : index
    %c0_15 = arith.constant 0 : index
    %c0_16 = arith.constant 0 : index
    %31 = vector.load %arg5[%c0_14, %c0_15, %c0_16] : memref<2x32x32xbf16, #tpu.memory_space<vmem>>, vector<1x32x32xbf16>
    %32 = vector.shape_cast %31 : vector<1x32x32xbf16> to vector<32x32xbf16>
    %cst_17 = arith.constant dense<0.000000e+00> : vector<8x32xf32>
    %33 = tpu.matmul %30, %32, %cst_17 {dimension_numbers = #tpu.dot_dimension_numbers<[1], [0], [0], [1], [0, 0, 1, 1], [], []>} : vector<8x32xbf16>, vector<32x32xbf16>, vector<8x32xf32> -> vector<8x32xf32>
    %c0_18 = arith.constant 0 : index
    %c0_19 = arith.constant 0 : index
    %c0_20 = arith.constant 0 : index
    %34 = vector.load %arg6[%c0_18, %c0_19, %c0_20] : memref<2x1x32xf32, #tpu.memory_space<vmem>>, vector<1x1x32xf32>
    %35 = vector.shape_cast %34 : vector<1x1x32xf32> to vector<1x32xf32>
    %36 = vector.broadcast %35 : vector<1x32xf32> to vector<8x32xf32>
    %37 = arith.addf %33, %36 : vector<8x32xf32>
    %c0_21 = arith.constant 0 : index
    %c0_22 = arith.constant 0 : index
    %c0_23 = arith.constant 0 : index
    %38 = vector.load %arg7[%c0_21, %c0_22, %c0_23] : memref<2x32x32xbf16, #tpu.memory_space<vmem>>, vector<1x32x32xbf16>
    %39 = vector.shape_cast %38 : vector<1x32x32xbf16> to vector<32x32xbf16>
    %cst_24 = arith.constant dense<0.000000e+00> : vector<8x32xf32>
    %40 = tpu.matmul %30, %39, %cst_24 {dimension_numbers = #tpu.dot_dimension_numbers<[1], [0], [0], [1], [0, 0, 1, 1], [], []>} : vector<8x32xbf16>, vector<32x32xbf16>, vector<8x32xf32> -> vector<8x32xf32>
    %c0_25 = arith.constant 0 : index
    %c0_26 = arith.constant 0 : index
    %c0_27 = arith.constant 0 : index
    %41 = vector.load %arg8[%c0_25, %c0_26, %c0_27] : memref<2x1x32xf32, #tpu.memory_space<vmem>>, vector<1x1x32xf32>
    %42 = vector.shape_cast %41 : vector<1x1x32xf32> to vector<1x32xf32>
    %43 = vector.broadcast %42 : vector<1x32xf32> to vector<8x32xf32>
    %44 = arith.addf %40, %43 : vector<8x32xf32>
    %c0_28 = arith.constant 0 : index
    %c0_29 = arith.constant 0 : index
    %c0_30 = arith.constant 0 : index
    %45 = vector.load %arg9[%c0_28, %c0_29, %c0_30] : memref<2x32x32xbf16, #tpu.memory_space<vmem>>, vector<1x32x32xbf16>
    %46 = vector.shape_cast %45 : vector<1x32x32xbf16> to vector<32x32xbf16>
    %cst_31 = arith.constant dense<0.000000e+00> : vector<8x32xf32>
    %47 = tpu.matmul %30, %46, %cst_31 {dimension_numbers = #tpu.dot_dimension_numbers<[1], [0], [0], [1], [0, 0, 1, 1], [], []>} : vector<8x32xbf16>, vector<32x32xbf16>, vector<8x32xf32> -> vector<8x32xf32>
    %c0_32 = arith.constant 0 : index
    %c0_33 = arith.constant 0 : index
    %c0_34 = arith.constant 0 : index
    %48 = vector.load %arg10[%c0_32, %c0_33, %c0_34] : memref<2x1x32xf32, #tpu.memory_space<vmem>>, vector<1x1x32xf32>
    %49 = vector.shape_cast %48 : vector<1x1x32xf32> to vector<1x32xf32>
    %50 = vector.broadcast %49 : vector<1x32xf32> to vector<8x32xf32>
    %51 = arith.addf %47, %50 : vector<8x32xf32>
    %cst_35 = arith.constant 0.353553385 : f32
    %52 = vector.broadcast %cst_35 : f32 to vector<8x32xf32>
    %53 = arith.mulf %37, %52 : vector<8x32xf32>
    %54 = vector.shape_cast %53 : vector<8x32xf32> to vector<8x4x8xf32>
    %55 = tpu.transpose %54, [1, 0, 2] : vector<8x4x8xf32> -> vector<4x8x8xf32>
    %56 = arith.truncf %55 : vector<4x8x8xf32> to vector<4x8x8xbf16>
    %57 = vector.shape_cast %44 : vector<8x32xf32> to vector<8x4x8xf32>
    %58 = tpu.transpose %57, [1, 0, 2] : vector<8x4x8xf32> -> vector<4x8x8xf32>
    %59 = arith.truncf %58 : vector<4x8x8xf32> to vector<4x8x8xbf16>
    %60 = vector.shape_cast %51 : vector<8x32xf32> to vector<8x4x8xf32>
    %61 = tpu.transpose %60, [1, 0, 2] : vector<8x4x8xf32> -> vector<4x8x8xf32>
    %62 = arith.truncf %61 : vector<4x8x8xf32> to vector<4x8x8xbf16>
    "tpu.trace_start"() <{level = 10 : i32, message = "htd,hsd->hts"}> : () -> ()
    %cst_36 = arith.constant dense<0.000000e+00> : vector<4x8x8xf32>
    %63 = tpu.matmul %56, %59, %cst_36 {dimension_numbers = #tpu.dot_dimension_numbers<[2], [2], [1], [1], [0, 0, 0, 1, 1, 1], [0], [0]>} : vector<4x8x8xbf16>, vector<4x8x8xbf16>, vector<4x8x8xf32> -> vector<4x8x8xf32>
    "tpu.trace_stop"() : () -> ()
    %cst_37 = arith.constant dense<0xFF800000> : vector<4x8xf32>
    %64 = vector.multi_reduction <maximumf>, %63, %cst_37 [2] : vector<4x8x8xf32> to vector<4x8xf32>
    %65 = vector.shape_cast %64 : vector<4x8xf32> to vector<4x8x1xf32>
    %66 = vector.broadcast %65 : vector<4x8x1xf32> to vector<4x8x8xf32>
    %67 = arith.subf %63, %66 : vector<4x8x8xf32>
    %68 = math.exp %67 : vector<4x8x8xf32>
    %cst_38 = arith.constant dense<0.000000e+00> : vector<4x8xf32>
    %69 = vector.multi_reduction <add>, %68, %cst_38 [2] : vector<4x8x8xf32> to vector<4x8xf32>
    %70 = vector.shape_cast %69 : vector<4x8xf32> to vector<4x8x1xf32>
    %71 = tpu.reciprocal %70 {approx = true} : vector<4x8x1xf32> -> vector<4x8x1xf32>
    %72 = vector.broadcast %71 : vector<4x8x1xf32> to vector<4x8x8xf32>
    %73 = arith.mulf %68, %72 : vector<4x8x8xf32>
    %74 = arith.truncf %73 : vector<4x8x8xf32> to vector<4x8x8xbf16>
    "tpu.trace_start"() <{level = 10 : i32, message = "hts,hsd->htd"}> : () -> ()
    %cst_39 = arith.constant dense<0.000000e+00> : vector<4x8x8xf32>
    %75 = tpu.matmul %74, %62, %cst_39 {dimension_numbers = #tpu.dot_dimension_numbers<[2], [1], [1], [2], [0, 0, 0, 1, 1, 2], [0], [0]>} : vector<4x8x8xbf16>, vector<4x8x8xbf16>, vector<4x8x8xf32> -> vector<4x8x8xf32>
    "tpu.trace_stop"() : () -> ()
    %76 = tpu.transpose %75, [1, 0, 2] : vector<4x8x8xf32> -> vector<8x4x8xf32>
    %77 = vector.shape_cast %76 : vector<8x4x8xf32> to vector<8x32xf32>
    %78 = arith.truncf %77 : vector<8x32xf32> to vector<8x32xbf16>
    %c0_40 = arith.constant 0 : index
    %c0_41 = arith.constant 0 : index
    %c0_42 = arith.constant 0 : index
    %79 = vector.load %arg11[%c0_40, %c0_41, %c0_42] : memref<2x32x32xbf16, #tpu.memory_space<vmem>>, vector<1x32x32xbf16>
    %80 = vector.shape_cast %79 : vector<1x32x32xbf16> to vector<32x32xbf16>
    %cst_43 = arith.constant dense<0.000000e+00> : vector<8x32xf32>
    %81 = tpu.matmul %78, %80, %cst_43 {dimension_numbers = #tpu.dot_dimension_numbers<[1], [0], [0], [1], [0, 0, 1, 1], [], []>} : vector<8x32xbf16>, vector<32x32xbf16>, vector<8x32xf32> -> vector<8x32xf32>
    %c0_44 = arith.constant 0 : index
    %c0_45 = arith.constant 0 : index
    %c0_46 = arith.constant 0 : index
    %82 = vector.load %arg12[%c0_44, %c0_45, %c0_46] : memref<2x1x32xf32, #tpu.memory_space<vmem>>, vector<1x1x32xf32>
    %83 = vector.shape_cast %82 : vector<1x1x32xf32> to vector<1x32xf32>
    %84 = vector.broadcast %83 : vector<1x32xf32> to vector<8x32xf32>
    %85 = arith.addf %81, %84 : vector<8x32xf32>
    %86 = arith.addf %3, %85 : vector<8x32xf32>
    %c0_47 = arith.constant 0 : index
    %c0_48 = arith.constant 0 : index
    %c0_49 = arith.constant 0 : index
    %87 = vector.load %arg13[%c0_47, %c0_48, %c0_49] : memref<2x1x32xf32, #tpu.memory_space<vmem>>, vector<1x1x32xf32>
    %88 = vector.shape_cast %87 : vector<1x1x32xf32> to vector<1x32xf32>
    %c0_50 = arith.constant 0 : index
    %c0_51 = arith.constant 0 : index
    %c0_52 = arith.constant 0 : index
    %89 = vector.load %arg14[%c0_50, %c0_51, %c0_52] : memref<2x1x32xf32, #tpu.memory_space<vmem>>, vector<1x1x32xf32>
    %90 = vector.shape_cast %89 : vector<1x1x32xf32> to vector<1x32xf32>
    %cst_53 = arith.constant dense<0.000000e+00> : vector<8xf32>
    %91 = vector.multi_reduction <add>, %86, %cst_53 [1] : vector<8x32xf32> to vector<8xf32>
    %92 = vector.shape_cast %91 : vector<8xf32> to vector<8x1xf32>
    %cst_54 = arith.constant 3.200000e+01 : f32
    %93 = vector.broadcast %cst_54 : f32 to vector<8x1xf32>
    %94 = arith.divf %92, %93 : vector<8x1xf32>
    %95 = vector.broadcast %94 : vector<8x1xf32> to vector<8x32xf32>
    %96 = arith.subf %86, %95 : vector<8x32xf32>
    %97 = arith.mulf %96, %96 : vector<8x32xf32>
    %cst_55 = arith.constant dense<0.000000e+00> : vector<8xf32>
    %98 = vector.multi_reduction <add>, %97, %cst_55 [1] : vector<8x32xf32> to vector<8xf32>
    %99 = vector.shape_cast %98 : vector<8xf32> to vector<8x1xf32>
    %cst_56 = arith.constant 3.200000e+01 : f32
    %100 = vector.broadcast %cst_56 : f32 to vector<8x1xf32>
    %101 = arith.divf %99, %100 : vector<8x1xf32>
    %102 = vector.broadcast %94 : vector<8x1xf32> to vector<8x32xf32>
    %103 = arith.subf %86, %102 : vector<8x32xf32>
    %cst_57 = arith.constant 9.99999974E-6 : f32
    %104 = vector.broadcast %cst_57 : f32 to vector<8x1xf32>
    %105 = arith.addf %101, %104 : vector<8x1xf32>
    %106 = math.rsqrt %105 : vector<8x1xf32>
    %107 = vector.broadcast %106 : vector<8x1xf32> to vector<8x32xf32>
    %108 = arith.mulf %103, %107 : vector<8x32xf32>
    %109 = vector.broadcast %88 : vector<1x32xf32> to vector<8x32xf32>
    %110 = arith.mulf %108, %109 : vector<8x32xf32>
    %111 = vector.broadcast %90 : vector<1x32xf32> to vector<8x32xf32>
    %112 = arith.addf %110, %111 : vector<8x32xf32>
    %113 = arith.truncf %112 : vector<8x32xf32> to vector<8x32xbf16>
    %c0_58 = arith.constant 0 : index
    %c0_59 = arith.constant 0 : index
    %c0_60 = arith.constant 0 : index
    %114 = vector.load %arg15[%c0_58, %c0_59, %c0_60] : memref<2x32x64xbf16, #tpu.memory_space<vmem>>, vector<1x32x64xbf16>
    %115 = vector.shape_cast %114 : vector<1x32x64xbf16> to vector<32x64xbf16>
    %cst_61 = arith.constant dense<0.000000e+00> : vector<8x64xf32>
    %116 = tpu.matmul %113, %115, %cst_61 {dimension_numbers = #tpu.dot_dimension_numbers<[1], [0], [0], [1], [0, 0, 1, 1], [], []>} : vector<8x32xbf16>, vector<32x64xbf16>, vector<8x64xf32> -> vector<8x64xf32>
    %c0_62 = arith.constant 0 : index
    %c0_63 = arith.constant 0 : index
    %c0_64 = arith.constant 0 : index
    %117 = vector.load %arg16[%c0_62, %c0_63, %c0_64] : memref<2x1x64xf32, #tpu.memory_space<vmem>>, vector<1x1x64xf32>
    %118 = vector.shape_cast %117 : vector<1x1x64xf32> to vector<1x64xf32>
    %119 = vector.broadcast %118 : vector<1x64xf32> to vector<8x64xf32>
    %120 = arith.addf %116, %119 : vector<8x64xf32>
    %cst_65 = arith.constant 0.000000e+00 : f32
    %121 = vector.broadcast %cst_65 : f32 to vector<8x64xf32>
    %122 = arith.maximumf %120, %121 : vector<8x64xf32>
    %123 = arith.truncf %122 : vector<8x64xf32> to vector<8x64xbf16>
    %c0_66 = arith.constant 0 : index
    %c0_67 = arith.constant 0 : index
    %c0_68 = arith.constant 0 : index
    %124 = vector.load %arg17[%c0_66, %c0_67, %c0_68] : memref<2x64x32xbf16, #tpu.memory_space<vmem>>, vector<1x64x32xbf16>
    %125 = vector.shape_cast %124 : vector<1x64x32xbf16> to vector<64x32xbf16>
    %cst_69 = arith.constant dense<0.000000e+00> : vector<8x32xf32>
    %126 = tpu.matmul %123, %125, %cst_69 {dimension_numbers = #tpu.dot_dimension_numbers<[1], [0], [0], [1], [0, 0, 1, 1], [], []>} : vector<8x64xbf16>, vector<64x32xbf16>, vector<8x32xf32> -> vector<8x32xf32>
    %c0_70 = arith.constant 0 : index
    %c0_71 = arith.constant 0 : index
    %c0_72 = arith.constant 0 : index
    %127 = vector.load %arg18[%c0_70, %c0_71, %c0_72] : memref<2x1x32xf32, #tpu.memory_space<vmem>>, vector<1x1x32xf32>
    %128 = vector.shape_cast %127 : vector<1x1x32xf32> to vector<1x32xf32>
    %129 = vector.broadcast %128 : vector<1x32xf32> to vector<8x32xf32>
    %130 = arith.addf %126, %129 : vector<8x32xf32>
    %131 = arith.addf %86, %130 : vector<8x32xf32>
    %c1 = arith.constant 1 : index
    %c0_73 = arith.constant 0 : index
    %c0_74 = arith.constant 0 : index
    %132 = vector.load %arg3[%c1, %c0_73, %c0_74] : memref<2x1x32xf32, #tpu.memory_space<vmem>>, vector<1x1x32xf32>
    %133 = vector.shape_cast %132 : vector<1x1x32xf32> to vector<1x32xf32>
    %c1_75 = arith.constant 1 : index
    %c0_76 = arith.constant 0 : index
    %c0_77 = arith.constant 0 : index
    %134 = vector.load %arg4[%c1_75, %c0_76, %c0_77] : memref<2x1x32xf32, #tpu.memory_space<vmem>>, vector<1x1x32xf32>
    %135 = vector.shape_cast %134 : vector<1x1x32xf32> to vector<1x32xf32>
    %cst_78 = arith.constant dense<0.000000e+00> : vector<8xf32>
    %136 = vector.multi_reduction <add>, %131, %cst_78 [1] : vector<8x32xf32> to vector<8xf32>
    %137 = vector.shape_cast %136 : vector<8xf32> to vector<8x1xf32>
    %cst_79 = arith.constant 3.200000e+01 : f32
    %138 = vector.broadcast %cst_79 : f32 to vector<8x1xf32>
    %139 = arith.divf %137, %138 : vector<8x1xf32>
    %140 = vector.broadcast %139 : vector<8x1xf32> to vector<8x32xf32>
    %141 = arith.subf %131, %140 : vector<8x32xf32>
    %142 = arith.mulf %141, %141 : vector<8x32xf32>
    %cst_80 = arith.constant dense<0.000000e+00> : vector<8xf32>
    %143 = vector.multi_reduction <add>, %142, %cst_80 [1] : vector<8x32xf32> to vector<8xf32>
    %144 = vector.shape_cast %143 : vector<8xf32> to vector<8x1xf32>
    %cst_81 = arith.constant 3.200000e+01 : f32
    %145 = vector.broadcast %cst_81 : f32 to vector<8x1xf32>
    %146 = arith.divf %144, %145 : vector<8x1xf32>
    %147 = vector.broadcast %139 : vector<8x1xf32> to vector<8x32xf32>
    %148 = arith.subf %131, %147 : vector<8x32xf32>
    %cst_82 = arith.constant 9.99999974E-6 : f32
    %149 = vector.broadcast %cst_82 : f32 to vector<8x1xf32>
    %150 = arith.addf %146, %149 : vector<8x1xf32>
    %151 = math.rsqrt %150 : vector<8x1xf32>
    %152 = vector.broadcast %151 : vector<8x1xf32> to vector<8x32xf32>
    %153 = arith.mulf %148, %152 : vector<8x32xf32>
    %154 = vector.broadcast %133 : vector<1x32xf32> to vector<8x32xf32>
    %155 = arith.mulf %153, %154 : vector<8x32xf32>
    %156 = vector.broadcast %135 : vector<1x32xf32> to vector<8x32xf32>
    %157 = arith.addf %155, %156 : vector<8x32xf32>
    %158 = arith.truncf %157 : vector<8x32xf32> to vector<8x32xbf16>
    %c1_83 = arith.constant 1 : index
    %c0_84 = arith.constant 0 : index
    %c0_85 = arith.constant 0 : index
    %159 = vector.load %arg5[%c1_83, %c0_84, %c0_85] : memref<2x32x32xbf16, #tpu.memory_space<vmem>>, vector<1x32x32xbf16>
    %160 = vector.shape_cast %159 : vector<1x32x32xbf16> to vector<32x32xbf16>
    %cst_86 = arith.constant dense<0.000000e+00> : vector<8x32xf32>
    %161 = tpu.matmul %158, %160, %cst_86 {dimension_numbers = #tpu.dot_dimension_numbers<[1], [0], [0], [1], [0, 0, 1, 1], [], []>} : vector<8x32xbf16>, vector<32x32xbf16>, vector<8x32xf32> -> vector<8x32xf32>
    %c1_87 = arith.constant 1 : index
    %c0_88 = arith.constant 0 : index
    %c0_89 = arith.constant 0 : index
    %162 = vector.load %arg6[%c1_87, %c0_88, %c0_89] : memref<2x1x32xf32, #tpu.memory_space<vmem>>, vector<1x1x32xf32>
    %163 = vector.shape_cast %162 : vector<1x1x32xf32> to vector<1x32xf32>
    %164 = vector.broadcast %163 : vector<1x32xf32> to vector<8x32xf32>
    %165 = arith.addf %161, %164 : vector<8x32xf32>
    %c1_90 = arith.constant 1 : index
    %c0_91 = arith.constant 0 : index
    %c0_92 = arith.constant 0 : index
    %166 = vector.load %arg7[%c1_90, %c0_91, %c0_92] : memref<2x32x32xbf16, #tpu.memory_space<vmem>>, vector<1x32x32xbf16>
    %167 = vector.shape_cast %166 : vector<1x32x32xbf16> to vector<32x32xbf16>
    %cst_93 = arith.constant dense<0.000000e+00> : vector<8x32xf32>
    %168 = tpu.matmul %158, %167, %cst_93 {dimension_numbers = #tpu.dot_dimension_numbers<[1], [0], [0], [1], [0, 0, 1, 1], [], []>} : vector<8x32xbf16>, vector<32x32xbf16>, vector<8x32xf32> -> vector<8x32xf32>
    %c1_94 = arith.constant 1 : index
    %c0_95 = arith.constant 0 : index
    %c0_96 = arith.constant 0 : index
    %169 = vector.load %arg8[%c1_94, %c0_95, %c0_96] : memref<2x1x32xf32, #tpu.memory_space<vmem>>, vector<1x1x32xf32>
    %170 = vector.shape_cast %169 : vector<1x1x32xf32> to vector<1x32xf32>
    %171 = vector.broadcast %170 : vector<1x32xf32> to vector<8x32xf32>
    %172 = arith.addf %168, %171 : vector<8x32xf32>
    %c1_97 = arith.constant 1 : index
    %c0_98 = arith.constant 0 : index
    %c0_99 = arith.constant 0 : index
    %173 = vector.load %arg9[%c1_97, %c0_98, %c0_99] : memref<2x32x32xbf16, #tpu.memory_space<vmem>>, vector<1x32x32xbf16>
    %174 = vector.shape_cast %173 : vector<1x32x32xbf16> to vector<32x32xbf16>
    %cst_100 = arith.constant dense<0.000000e+00> : vector<8x32xf32>
    %175 = tpu.matmul %158, %174, %cst_100 {dimension_numbers = #tpu.dot_dimension_numbers<[1], [0], [0], [1], [0, 0, 1, 1], [], []>} : vector<8x32xbf16>, vector<32x32xbf16>, vector<8x32xf32> -> vector<8x32xf32>
    %c1_101 = arith.constant 1 : index
    %c0_102 = arith.constant 0 : index
    %c0_103 = arith.constant 0 : index
    %176 = vector.load %arg10[%c1_101, %c0_102, %c0_103] : memref<2x1x32xf32, #tpu.memory_space<vmem>>, vector<1x1x32xf32>
    %177 = vector.shape_cast %176 : vector<1x1x32xf32> to vector<1x32xf32>
    %178 = vector.broadcast %177 : vector<1x32xf32> to vector<8x32xf32>
    %179 = arith.addf %175, %178 : vector<8x32xf32>
    %cst_104 = arith.constant 0.353553385 : f32
    %180 = vector.broadcast %cst_104 : f32 to vector<8x32xf32>
    %181 = arith.mulf %165, %180 : vector<8x32xf32>
    %182 = vector.shape_cast %181 : vector<8x32xf32> to vector<8x4x8xf32>
    %183 = tpu.transpose %182, [1, 0, 2] : vector<8x4x8xf32> -> vector<4x8x8xf32>
    %184 = arith.truncf %183 : vector<4x8x8xf32> to vector<4x8x8xbf16>
    %185 = vector.shape_cast %172 : vector<8x32xf32> to vector<8x4x8xf32>
    %186 = tpu.transpose %185, [1, 0, 2] : vector<8x4x8xf32> -> vector<4x8x8xf32>
    %187 = arith.truncf %186 : vector<4x8x8xf32> to vector<4x8x8xbf16>
    %188 = vector.shape_cast %179 : vector<8x32xf32> to vector<8x4x8xf32>
    %189 = tpu.transpose %188, [1, 0, 2] : vector<8x4x8xf32> -> vector<4x8x8xf32>
    %190 = arith.truncf %189 : vector<4x8x8xf32> to vector<4x8x8xbf16>
    "tpu.trace_start"() <{level = 10 : i32, message = "htd,hsd->hts"}> : () -> ()
    %cst_105 = arith.constant dense<0.000000e+00> : vector<4x8x8xf32>
    %191 = tpu.matmul %184, %187, %cst_105 {dimension_numbers = #tpu.dot_dimension_numbers<[2], [2], [1], [1], [0, 0, 0, 1, 1, 1], [0], [0]>} : vector<4x8x8xbf16>, vector<4x8x8xbf16>, vector<4x8x8xf32> -> vector<4x8x8xf32>
    "tpu.trace_stop"() : () -> ()
    %cst_106 = arith.constant dense<0xFF800000> : vector<4x8xf32>
    %192 = vector.multi_reduction <maximumf>, %191, %cst_106 [2] : vector<4x8x8xf32> to vector<4x8xf32>
    %193 = vector.shape_cast %192 : vector<4x8xf32> to vector<4x8x1xf32>
    %194 = vector.broadcast %193 : vector<4x8x1xf32> to vector<4x8x8xf32>
    %195 = arith.subf %191, %194 : vector<4x8x8xf32>
    %196 = math.exp %195 : vector<4x8x8xf32>
    %cst_107 = arith.constant dense<0.000000e+00> : vector<4x8xf32>
    %197 = vector.multi_reduction <add>, %196, %cst_107 [2] : vector<4x8x8xf32> to vector<4x8xf32>
    %198 = vector.shape_cast %197 : vector<4x8xf32> to vector<4x8x1xf32>
    %199 = tpu.reciprocal %198 {approx = true} : vector<4x8x1xf32> -> vector<4x8x1xf32>
    %200 = vector.broadcast %199 : vector<4x8x1xf32> to vector<4x8x8xf32>
    %201 = arith.mulf %196, %200 : vector<4x8x8xf32>
    %202 = arith.truncf %201 : vector<4x8x8xf32> to vector<4x8x8xbf16>
    "tpu.trace_start"() <{level = 10 : i32, message = "hts,hsd->htd"}> : () -> ()
    %cst_108 = arith.constant dense<0.000000e+00> : vector<4x8x8xf32>
    %203 = tpu.matmul %202, %190, %cst_108 {dimension_numbers = #tpu.dot_dimension_numbers<[2], [1], [1], [2], [0, 0, 0, 1, 1, 2], [0], [0]>} : vector<4x8x8xbf16>, vector<4x8x8xbf16>, vector<4x8x8xf32> -> vector<4x8x8xf32>
    "tpu.trace_stop"() : () -> ()
    %204 = tpu.transpose %203, [1, 0, 2] : vector<4x8x8xf32> -> vector<8x4x8xf32>
    %205 = vector.shape_cast %204 : vector<8x4x8xf32> to vector<8x32xf32>
    %206 = arith.truncf %205 : vector<8x32xf32> to vector<8x32xbf16>
    %c1_109 = arith.constant 1 : index
    %c0_110 = arith.constant 0 : index
    %c0_111 = arith.constant 0 : index
    %207 = vector.load %arg11[%c1_109, %c0_110, %c0_111] : memref<2x32x32xbf16, #tpu.memory_space<vmem>>, vector<1x32x32xbf16>
    %208 = vector.shape_cast %207 : vector<1x32x32xbf16> to vector<32x32xbf16>
    %cst_112 = arith.constant dense<0.000000e+00> : vector<8x32xf32>
    %209 = tpu.matmul %206, %208, %cst_112 {dimension_numbers = #tpu.dot_dimension_numbers<[1], [0], [0], [1], [0, 0, 1, 1], [], []>} : vector<8x32xbf16>, vector<32x32xbf16>, vector<8x32xf32> -> vector<8x32xf32>
    %c1_113 = arith.constant 1 : index
    %c0_114 = arith.constant 0 : index
    %c0_115 = arith.constant 0 : index
    %210 = vector.load %arg12[%c1_113, %c0_114, %c0_115] : memref<2x1x32xf32, #tpu.memory_space<vmem>>, vector<1x1x32xf32>
    %211 = vector.shape_cast %210 : vector<1x1x32xf32> to vector<1x32xf32>
    %212 = vector.broadcast %211 : vector<1x32xf32> to vector<8x32xf32>
    %213 = arith.addf %209, %212 : vector<8x32xf32>
    %214 = arith.addf %131, %213 : vector<8x32xf32>
    %c1_116 = arith.constant 1 : index
    %c0_117 = arith.constant 0 : index
    %c0_118 = arith.constant 0 : index
    %215 = vector.load %arg13[%c1_116, %c0_117, %c0_118] : memref<2x1x32xf32, #tpu.memory_space<vmem>>, vector<1x1x32xf32>
    %216 = vector.shape_cast %215 : vector<1x1x32xf32> to vector<1x32xf32>
    %c1_119 = arith.constant 1 : index
    %c0_120 = arith.constant 0 : index
    %c0_121 = arith.constant 0 : index
    %217 = vector.load %arg14[%c1_119, %c0_120, %c0_121] : memref<2x1x32xf32, #tpu.memory_space<vmem>>, vector<1x1x32xf32>
    %218 = vector.shape_cast %217 : vector<1x1x32xf32> to vector<1x32xf32>
    %cst_122 = arith.constant dense<0.000000e+00> : vector<8xf32>
    %219 = vector.multi_reduction <add>, %214, %cst_122 [1] : vector<8x32xf32> to vector<8xf32>
    %220 = vector.shape_cast %219 : vector<8xf32> to vector<8x1xf32>
    %cst_123 = arith.constant 3.200000e+01 : f32
    %221 = vector.broadcast %cst_123 : f32 to vector<8x1xf32>
    %222 = arith.divf %220, %221 : vector<8x1xf32>
    %223 = vector.broadcast %222 : vector<8x1xf32> to vector<8x32xf32>
    %224 = arith.subf %214, %223 : vector<8x32xf32>
    %225 = arith.mulf %224, %224 : vector<8x32xf32>
    %cst_124 = arith.constant dense<0.000000e+00> : vector<8xf32>
    %226 = vector.multi_reduction <add>, %225, %cst_124 [1] : vector<8x32xf32> to vector<8xf32>
    %227 = vector.shape_cast %226 : vector<8xf32> to vector<8x1xf32>
    %cst_125 = arith.constant 3.200000e+01 : f32
    %228 = vector.broadcast %cst_125 : f32 to vector<8x1xf32>
    %229 = arith.divf %227, %228 : vector<8x1xf32>
    %230 = vector.broadcast %222 : vector<8x1xf32> to vector<8x32xf32>
    %231 = arith.subf %214, %230 : vector<8x32xf32>
    %cst_126 = arith.constant 9.99999974E-6 : f32
    %232 = vector.broadcast %cst_126 : f32 to vector<8x1xf32>
    %233 = arith.addf %229, %232 : vector<8x1xf32>
    %234 = math.rsqrt %233 : vector<8x1xf32>
    %235 = vector.broadcast %234 : vector<8x1xf32> to vector<8x32xf32>
    %236 = arith.mulf %231, %235 : vector<8x32xf32>
    %237 = vector.broadcast %216 : vector<1x32xf32> to vector<8x32xf32>
    %238 = arith.mulf %236, %237 : vector<8x32xf32>
    %239 = vector.broadcast %218 : vector<1x32xf32> to vector<8x32xf32>
    %240 = arith.addf %238, %239 : vector<8x32xf32>
    %241 = arith.truncf %240 : vector<8x32xf32> to vector<8x32xbf16>
    %c1_127 = arith.constant 1 : index
    %c0_128 = arith.constant 0 : index
    %c0_129 = arith.constant 0 : index
    %242 = vector.load %arg15[%c1_127, %c0_128, %c0_129] : memref<2x32x64xbf16, #tpu.memory_space<vmem>>, vector<1x32x64xbf16>
    %243 = vector.shape_cast %242 : vector<1x32x64xbf16> to vector<32x64xbf16>
    %cst_130 = arith.constant dense<0.000000e+00> : vector<8x64xf32>
    %244 = tpu.matmul %241, %243, %cst_130 {dimension_numbers = #tpu.dot_dimension_numbers<[1], [0], [0], [1], [0, 0, 1, 1], [], []>} : vector<8x32xbf16>, vector<32x64xbf16>, vector<8x64xf32> -> vector<8x64xf32>
    %c1_131 = arith.constant 1 : index
    %c0_132 = arith.constant 0 : index
    %c0_133 = arith.constant 0 : index
    %245 = vector.load %arg16[%c1_131, %c0_132, %c0_133] : memref<2x1x64xf32, #tpu.memory_space<vmem>>, vector<1x1x64xf32>
    %246 = vector.shape_cast %245 : vector<1x1x64xf32> to vector<1x64xf32>
    %247 = vector.broadcast %246 : vector<1x64xf32> to vector<8x64xf32>
    %248 = arith.addf %244, %247 : vector<8x64xf32>
    %cst_134 = arith.constant 0.000000e+00 : f32
    %249 = vector.broadcast %cst_134 : f32 to vector<8x64xf32>
    %250 = arith.maximumf %248, %249 : vector<8x64xf32>
    %251 = arith.truncf %250 : vector<8x64xf32> to vector<8x64xbf16>
    %c1_135 = arith.constant 1 : index
    %c0_136 = arith.constant 0 : index
    %c0_137 = arith.constant 0 : index
    %252 = vector.load %arg17[%c1_135, %c0_136, %c0_137] : memref<2x64x32xbf16, #tpu.memory_space<vmem>>, vector<1x64x32xbf16>
    %253 = vector.shape_cast %252 : vector<1x64x32xbf16> to vector<64x32xbf16>
    %cst_138 = arith.constant dense<0.000000e+00> : vector<8x32xf32>
    %254 = tpu.matmul %251, %253, %cst_138 {dimension_numbers = #tpu.dot_dimension_numbers<[1], [0], [0], [1], [0, 0, 1, 1], [], []>} : vector<8x64xbf16>, vector<64x32xbf16>, vector<8x32xf32> -> vector<8x32xf32>
    %c1_139 = arith.constant 1 : index
    %c0_140 = arith.constant 0 : index
    %c0_141 = arith.constant 0 : index
    %255 = vector.load %arg18[%c1_139, %c0_140, %c0_141] : memref<2x1x32xf32, #tpu.memory_space<vmem>>, vector<1x1x32xf32>
    %256 = vector.shape_cast %255 : vector<1x1x32xf32> to vector<1x32xf32>
    %257 = vector.broadcast %256 : vector<1x32xf32> to vector<8x32xf32>
    %258 = arith.addf %254, %257 : vector<8x32xf32>
    %259 = arith.addf %214, %258 : vector<8x32xf32>
    %c0_142 = arith.constant 0 : index
    %c0_143 = arith.constant 0 : index
    %c0_144 = arith.constant 0 : index
    %260 = vector.load %arg19[%c0_142, %c0_143, %c0_144] : memref<1x8x32xf32, #tpu.memory_space<vmem>>, vector<1x8x32xf32>
    %261 = vector.shape_cast %260 : vector<1x8x32xf32> to vector<8x32xf32>
    %262 = vector.shape_cast %259 : vector<8x32xf32> to vector<1x8x32xf32>
    tpu.vector_store %arg19[%c0_142, %c0_143, %c0_144], %262 {strides = array<i32>} : memref<1x8x32xf32, #tpu.memory_space<vmem>>, vector<1x8x32xf32>,
    return
  }
  func.func @transform_0(%arg0: i32) -> (i32, i32, i32) {
    %c0_i32 = arith.constant 0 : i32
    %c0_i32_0 = arith.constant 0 : i32
    %c0_i32_1 = arith.constant 0 : i32
    return %arg0, %c0_i32, %c0_i32_0 : i32, i32, i32
  }
  func.func @transform_1(%arg0: i32) -> (i32, i32) {
    %c0_i32 = arith.constant 0 : i32
    %c0_i32_0 = arith.constant 0 : i32
    %c0_i32_1 = arith.constant 0 : i32
    return %c0_i32, %c0_i32_0 : i32, i32
  }
  func.func @transform_2(%arg0: i32) -> (i32, i32, i32) {
    %c0_i32 = arith.constant 0 : i32
    %c0_i32_0 = arith.constant 0 : i32
    %c0_i32_1 = arith.constant 0 : i32
    %c0_i32_2 = arith.constant 0 : i32
    return %c0_i32, %c0_i32_0, %c0_i32_1 : i32, i32, i32
  }
  func.func @transform_3(%arg0: i32) -> (i32, i32, i32) {
    %c0_i32 = arith.constant 0 : i32
    %c0_i32_0 = arith.constant 0 : i32
    %c0_i32_1 = arith.constant 0 : i32
    %c0_i32_2 = arith.constant 0 : i32
    return %c0_i32, %c0_i32_0, %c0_i32_1 : i32, i32, i32
  }
  func.func @transform_4(%arg0: i32) -> (i32, i32, i32) {
    %c0_i32 = arith.constant 0 : i32
    %c0_i32_0 = arith.constant 0 : i32
    %c0_i32_1 = arith.constant 0 : i32
    %c0_i32_2 = arith.constant 0 : i32
    return %c0_i32, %c0_i32_0, %c0_i32_1 : i32, i32, i32
  }
  func.func @transform_5(%arg0: i32) -> (i32, i32, i32) {
    %c0_i32 = arith.constant 0 : i32
    %c0_i32_0 = arith.constant 0 : i32
    %c0_i32_1 = arith.constant 0 : i32
    %c0_i32_2 = arith.constant 0 : i32
    return %c0_i32, %c0_i32_0, %c0_i32_1 : i32, i32, i32
  }
  func.func @transform_6(%arg0: i32) -> (i32, i32, i32) {
    %c0_i32 = arith.constant 0 : i32
    %c0_i32_0 = arith.constant 0 : i32
    %c0_i32_1 = arith.constant 0 : i32
    %c0_i32_2 = arith.constant 0 : i32
    return %c0_i32, %c0_i32_0, %c0_i32_1 : i32, i32, i32
  }
  func.func @transform_7(%arg0: i32) -> (i32, i32, i32) {
    %c0_i32 = arith.constant 0 : i32
    %c0_i32_0 = arith.constant 0 : i32
    %c0_i32_1 = arith.constant 0 : i32
    %c0_i32_2 = arith.constant 0 : i32
    return %c0_i32, %c0_i32_0, %c0_i32_1 : i32, i32, i32
  }
  func.func @transform_8(%arg0: i32) -> (i32, i32, i32) {
    %c0_i32 = arith.constant 0 : i32
    %c0_i32_0 = arith.constant 0 : i32
    %c0_i32_1 = arith.constant 0 : i32
    %c0_i32_2 = arith.constant 0 : i32
    return %c0_i32, %c0_i32_0, %c0_i32_1 : i32, i32, i32
  }
  func.func @transform_9(%arg0: i32) -> (i32, i32, i32) {
    %c0_i32 = arith.constant 0 : i32
    %c0_i32_0 = arith.constant 0 : i32
    %c0_i32_1 = arith.constant 0 : i32
    %c0_i32_2 = arith.constant 0 : i32
    return %c0_i32, %c0_i32_0, %c0_i32_1 : i32, i32, i32
  }
  func.func @transform_10(%arg0: i32) -> (i32, i32, i32) {
    %c0_i32 = arith.constant 0 : i32
    %c0_i32_0 = arith.constant 0 : i32
    %c0_i32_1 = arith.constant 0 : i32
    %c0_i32_2 = arith.constant 0 : i32
    return %c0_i32, %c0_i32_0, %c0_i32_1 : i32, i32, i32
  }
  func.func @transform_11(%arg0: i32) -> (i32, i32, i32) {
    %c0_i32 = arith.constant 0 : i32
    %c0_i32_0 = arith.constant 0 : i32
    %c0_i32_1 = arith.constant 0 : i32
    %c0_i32_2 = arith.constant 0 : i32
    return %c0_i32, %c0_i32_0, %c0_i32_1 : i32, i32, i32
  }
  func.func @transform_12(%arg0: i32) -> (i32, i32, i32) {
    %c0_i32 = arith.constant 0 : i32
    %c0_i32_0 = arith.constant 0 : i32
    %c0_i32_1 = arith.constant 0 : i32
    %c0_i32_2 = arith.constant 0 : i32
    return %c0_i32, %c0_i32_0, %c0_i32_1 : i32, i32, i32
  }
  func.func @transform_13(%arg0: i32) -> (i32, i32, i32) {
    %c0_i32 = arith.constant 0 : i32
    %c0_i32_0 = arith.constant 0 : i32
    %c0_i32_1 = arith.constant 0 : i32
    %c0_i32_2 = arith.constant 0 : i32
    return %c0_i32, %c0_i32_0, %c0_i32_1 : i32, i32, i32
  }
  func.func @transform_14(%arg0: i32) -> (i32, i32, i32) {
    %c0_i32 = arith.constant 0 : i32
    %c0_i32_0 = arith.constant 0 : i32
    %c0_i32_1 = arith.constant 0 : i32
    %c0_i32_2 = arith.constant 0 : i32
    return %c0_i32, %c0_i32_0, %c0_i32_1 : i32, i32, i32
  }
  func.func @transform_15(%arg0: i32) -> (i32, i32, i32) {
    %c0_i32 = arith.constant 0 : i32
    %c0_i32_0 = arith.constant 0 : i32
    %c0_i32_1 = arith.constant 0 : i32
    %c0_i32_2 = arith.constant 0 : i32
    return %c0_i32, %c0_i32_0, %c0_i32_1 : i32, i32, i32
  }
  func.func @transform_16(%arg0: i32) -> (i32, i32, i32) {
    %c0_i32 = arith.constant 0 : i32
    %c0_i32_0 = arith.constant 0 : i32
    %c0_i32_1 = arith.constant 0 : i32
    %c0_i32_2 = arith.constant 0 : i32
    return %c0_i32, %c0_i32_0, %c0_i32_1 : i32, i32, i32
  }
  func.func @transform_17(%arg0: i32) -> (i32, i32, i32) {
    %c0_i32 = arith.constant 0 : i32
    %c0_i32_0 = arith.constant 0 : i32
    %c0_i32_1 = arith.constant 0 : i32
    %c0_i32_2 = arith.constant 0 : i32
    return %c0_i32, %c0_i32_0, %c0_i32_1 : i32, i32, i32
  }
  func.func @transform_18(%arg0: i32) -> (i32, i32, i32) {
    %c0_i32 = arith.constant 0 : i32
    %c0_i32_0 = arith.constant 0 : i32
    %c0_i32_1 = arith.constant 0 : i32
    return %arg0, %c0_i32, %c0_i32_0 : i32, i32, i32
  }
}

</mosaic_0001>

<llo_original>
// kernel: tpu_custom_call.1
$region0: #{tpu_custom_call.1}
  #allocation0 [shape = 'u32[]', space=smem, size = 0x4, offset = 0x4, fixed_abs, tag = 'smem constant byte address 0x4 - core index']
  #allocation1 [shape = 'u32[144,128]{1,0:T(1,128)}', space=vmem, size = 0x12000, scoped, tag = 'internal scratch']
  %s0 = inlined_call_operand.hbm [shape: f32[2,8,32], index: 0, kind: input, shape index: {}]
  %s1 = inlined_call_operand.hbm [shape: f32[8,32], index: 1, kind: input, shape index: {}]
  %s2 = inlined_call_operand.vmem [shape: f32[2,1,32], index: 2, kind: input, shape index: {}]
  %s3 = inlined_call_operand.vmem [shape: f32[2,1,32], index: 3, kind: input, shape index: {}]
  %s4 = inlined_call_operand.vmem [shape: bf16[2,32,32], index: 4, kind: input, shape index: {}]
  %s5 = inlined_call_operand.vmem [shape: f32[2,1,32], index: 5, kind: input, shape index: {}]
  %s6 = inlined_call_operand.vmem [shape: bf16[2,32,32], index: 6, kind: input, shape index: {}]
  %s7 = inlined_call_operand.vmem [shape: f32[2,1,32], index: 7, kind: input, shape index: {}]
  %s8 = inlined_call_operand.vmem [shape: bf16[2,32,32], index: 8, kind: input, shape index: {}]
  %s9 = inlined_call_operand.vmem [shape: f32[2,1,32], index: 9, kind: input, shape index: {}]
  %s10 = inlined_call_operand.hbm [shape: bf16[2,32,32], index: 10, kind: input, shape index: {}]
  %s11 = inlined_call_operand.vmem [shape: f32[2,1,32], index: 11, kind: input, shape index: {}]
  %s12 = inlined_call_operand.vmem [shape: f32[2,1,32], index: 12, kind: input, shape index: {}]
  %s13 = inlined_call_operand.vmem [shape: f32[2,1,32], index: 13, kind: input, shape index: {}]
  %s14 = inlined_call_operand.hbm [shape: bf16[2,32,64], index: 14, kind: input, shape index: {}]
  %s15 = inlined_call_operand.vmem [shape: f32[2,1,64], index: 15, kind: input, shape index: {}]
  %s16 = inlined_call_operand.vmem [shape: bf16[2,64,32], index: 16, kind: input, shape index: {}]
  %s17 = inlined_call_operand.vmem [shape: f32[2,1,32], index: 17, kind: input, shape index: {}]
  %s18 = inlined_call_operand.hbm [shape: f32[2,8,32], index: 18, kind: output, shape index: {}]
  %s19 = sld [smem:[#allocation0]]
  $region121: #{tpu_custom_call.1} parent=0
    _
  %s21 = ssub.s32 1, %s19
  %s22 = scalar_select 0, %s21, %s19
  $region1: #{tpu_custom_call.1} parent=0
    #allocation2 [shape = 'u8[8192]{0}', space=vmem, size = 0x2000, scoped, tag = 'input window, operand 0']
    #allocation3 [shape = 's32[2]{0}', space=sflag, size = 0x8, scoped, tag = 'scoped memory for tpu_custom_call.1']
    #allocation4 [shape = 's32[2]{0}', space=sflag, size = 0x8, scoped, tag = 'scoped memory for tpu_custom_call.1']
    #allocation5 [shape = 'u8[4096]{0}', space=vmem, size = 0x1000, scoped, tag = 'input window, operand 1, single buffered']
    #allocation6 [shape = 's32[1]{0}', space=sflag, size = 0x4, scoped, tag = 'scoped memory for tpu_custom_call.1']
    #allocation7 [shape = 'u8[16384]{0}', space=vmem, size = 0x4000, scoped, tag = 'input window, operand 10, single buffered']
    #allocation8 [shape = 'u8[16384]{0}', space=vmem, size = 0x4000, scoped, tag = 'input window, operand 14, single buffered']
    #allocation9 [shape = 's32[1]{0}', space=sflag, size = 0x4, scoped, tag = 'scoped memory for tpu_custom_call.1']
    #allocation10 [shape = 'u8[8192]{0}', space=vmem, size = 0x2000, scoped, tag = 'output window, operand 0']
    %23 = vsyncpa [#allocation3], 0
    %s24 = scalar_lea.sflag [#allocation3], 1
    %25 = vsyncpa %s24, 0
    %26 = vsyncpa [#allocation6], 0
    %27 = vsyncpa [#allocation9], 0
    %28 = vsyncpa [#allocation4], 0
    %s29 = scalar_lea.sflag [#allocation4], 1
    %30 = vsyncpa %s29, 0
    loop: start=0, step=1, limit=4
    $region2: #{tpu_custom_call.1} parent=1 // loop_pre_header
      _
    $region3: #{tpu_custom_call.1} parent=1 // loop_header
      %s32 = sphi 0, %s36
      %p33 = scmp.ge.s32.totalorder %s32, 4
      %s42 = sphi 0, %s44
      %s45 = sphi 0, %s42
      %s46 = sphi 0, %s45
      %s62 = sphi 0, %s46
      %s66 = sphi 0, %s66
      %s68 = sphi 0, %s66
      %s69 = sphi 0, %s68
      %s83 = sphi 0, %s69
      %s87 = sphi 0, %s87
      %s89 = sphi 0, %s87
      %s90 = sphi 0, %s89
      %s104 = sphi 0, %s90
      %s108 = sphi 0, %s108
      %s110 = sphi 0, %s108
      %s111 = sphi 0, %s110
      %s125 = sphi 0, %s111
      %s129 = sphi 0, %s129
      %s131 = sphi 0, %s129
      %s132 = sphi 0, %s131
      %s146 = sphi 0, %s132
      %s150 = sphi 0, %s150
      %s152 = sphi 0, %s150
      %s153 = sphi 0, %s152
      %s167 = sphi 0, %s153
      %s171 = sphi 0, %s171
      %s173 = sphi 0, %s171
      %s174 = sphi 0, %s173
      %s188 = sphi 0, %s174
      %s192 = sphi 0, %s192
      %s194 = sphi 0, %s192
      %s195 = sphi 0, %s194
      %s209 = sphi 0, %s195
      %s213 = sphi 0, %s213
      %s215 = sphi 0, %s213
      %s216 = sphi 0, %s215
      %s230 = sphi 0, %s216
      %s234 = sphi 0, %s234
      %s236 = sphi 0, %s234
      %s237 = sphi 0, %s236
      %s251 = sphi 0, %s237
      %s255 = sphi 0, %s255
      %s257 = sphi 0, %s255
      %s258 = sphi 0, %s257
      %s272 = sphi 0, %s258
      %s276 = sphi 0, %s276
      %s278 = sphi 0, %s276
      %s279 = sphi 0, %s278
      %s293 = sphi 0, %s279
      %s297 = sphi 0, %s297
      %s299 = sphi 0, %s297
      %s300 = sphi 0, %s299
      %s314 = sphi 0, %s300
      %s318 = sphi 0, %s318
      %s320 = sphi 0, %s318
      %s321 = sphi 0, %s320
      %s335 = sphi 0, %s321
      %s339 = sphi 0, %s339
      %s341 = sphi 0, %s339
      %s342 = sphi 0, %s341
      %s356 = sphi 0, %s342
      %s360 = sphi 0, %s360
      %s362 = sphi 0, %s360
      %s363 = sphi 0, %s362
      %s377 = sphi 0, %s363
      %s381 = sphi 0, %s381
      %s383 = sphi 0, %s381
      %s384 = sphi 0, %s383
      %s398 = sphi 0, %s384
      %s402 = sphi 0, %s402
      %s404 = sphi 0, %s402
      %s405 = sphi 0, %s404
      %s419 = sphi 0, %s405
      %s425 = sphi 0, %s427
      %s428 = sphi 0, %s425
      %s429 = sphi 0, %s428
      %s445 = sphi 0, %s429
    $region4: #{tpu_custom_call.1} parent=1 // loop_header_branch
      %35 = sbr.rel (%p33) target = $region8
    $region5: #{tpu_custom_call.1} parent=1 // loop_body
      %s37 = ssub.s32 %s32, 1
      %s38 = ssub.s32 %s32, 2
      %s39 = sadd.s32 %s32, 1
      %s40 = ssub.s32 %s32, %s39
      %p41 = scmp.eq.s32.totalorder %s40, 0
      %s43 = sadd.s32 %s42, 1
      %s44 = scalar_select %p41, %s42, %s43
      %p47 = pneg %p41
      %p48 = scmp.eq.s32.totalorder %s32, 1
      %p49 = por %p47, %p48
      %p50 = scmp.ne.s32.totalorder %s42, %s45
      %p51 = scmp.eq.s32.totalorder %s32, 0
      %p52 = por %p50, %p51
      %p53 = scmp.ne.s32.totalorder %s42, %s45
      %p54 = scmp.eq.s32.totalorder %s37, 1
      %p55 = por %p53, %p54
      %p56 = scmp.ne.s32.totalorder %s45, %s46
      %p57 = scmp.eq.s32.totalorder %s37, 0
      %p58 = por %p56, %p57
      %p59 = scmp.ne.s32.totalorder %s45, %s46
      %p60 = scmp.eq.s32.totalorder %s38, 1
      %p61 = por %p59, %p60
      %p63 = scmp.ne.s32.totalorder %s46, %s62
      %p64 = scmp.eq.s32.totalorder %s38, 0
      %p65 = por %p63, %p64
      %s67 = sadd.s32 %s66, 1
      %p70 = scmp.eq.s32.totalorder %s32, 1
      %p71 = scmp.ne.s32.totalorder %s66, %s68
      %p72 = scmp.eq.s32.totalorder %s32, 0
      %p73 = por %p71, %p72
      %p74 = scmp.ne.s32.totalorder %s66, %s68
      %p75 = scmp.eq.s32.totalorder %s37, 1
      %p76 = por %p74, %p75
      %p77 = scmp.ne.s32.totalorder %s68, %s69
      %p78 = scmp.eq.s32.totalorder %s37, 0
      %p79 = por %p77, %p78
      %p80 = scmp.ne.s32.totalorder %s68, %s69
      %p81 = scmp.eq.s32.totalorder %s38, 1
      %p82 = por %p80, %p81
      %p84 = scmp.ne.s32.totalorder %s69, %s83
      %p85 = scmp.eq.s32.totalorder %s38, 0
      %p86 = por %p84, %p85
      %s88 = sadd.s32 %s87, 1
      %p91 = scmp.eq.s32.totalorder %s32, 1
      %p92 = scmp.ne.s32.totalorder %s87, %s89
      %p93 = scmp.eq.s32.totalorder %s32, 0
      %p94 = por %p92, %p93
      %p95 = scmp.ne.s32.totalorder %s87, %s89
      %p96 = scmp.eq.s32.totalorder %s37, 1
      %p97 = por %p95, %p96
      %p98 = scmp.ne.s32.totalorder %s89, %s90
      %p99 = scmp.eq.s32.totalorder %s37, 0
      %p100 = por %p98, %p99
      %p101 = scmp.ne.s32.totalorder %s89, %s90
      %p102 = scmp.eq.s32.totalorder %s38, 1
      %p103 = por %p101, %p102
      %p105 = scmp.ne.s32.totalorder %s90, %s104
      %p106 = scmp.eq.s32.totalorder %s38, 0
      %p107 = por %p105, %p106
      %s109 = sadd.s32 %s108, 1
      %p112 = scmp.eq.s32.totalorder %s32, 1
      %p113 = scmp.ne.s32.totalorder %s108, %s110
      %p114 = scmp.eq.s32.totalorder %s32, 0
      %p115 = por %p113, %p114
      %p116 = scmp.ne.s32.totalorder %s108, %s110
      %p117 = scmp.eq.s32.totalorder %s37, 1
      %p118 = por %p116, %p117
      %p119 = scmp.ne.s32.totalorder %s110, %s111
      %p120 = scmp.eq.s32.totalorder %s37, 0
      %p121 = por %p119, %p120
      %p122 = scmp.ne.s32.totalorder %s110, %s111
      %p123 = scmp.eq.s32.totalorder %s38, 1
      %p124 = por %p122, %p123
      %p126 = scmp.ne.s32.totalorder %s111, %s125
      %p127 = scmp.eq.s32.totalorder %s38, 0
      %p128 = por %p126, %p127
      %s130 = sadd.s32 %s129, 1
      %p133 = scmp.eq.s32.totalorder %s32, 1
      %p134 = scmp.ne.s32.totalorder %s129, %s131
      %p135 = scmp.eq.s32.totalorder %s32, 0
      %p136 = por %p134, %p135
      %p137 = scmp.ne.s32.totalorder %s129, %s131
      %p138 = scmp.eq.s32.totalorder %s37, 1
      %p139 = por %p137, %p138
      %p140 = scmp.ne.s32.totalorder %s131, %s132
      %p141 = scmp.eq.s32.totalorder %s37, 0
      %p142 = por %p140, %p141
      %p143 = scmp.ne.s32.totalorder %s131, %s132
      %p144 = scmp.eq.s32.totalorder %s38, 1
      %p145 = por %p143, %p144
      %p147 = scmp.ne.s32.totalorder %s132, %s146
      %p148 = scmp.eq.s32.totalorder %s38, 0
      %p149 = por %p147, %p148
      %s151 = sadd.s32 %s150, 1
      %p154 = scmp.eq.s32.totalorder %s32, 1
      %p155 = scmp.ne.s32.totalorder %s150, %s152
      %p156 = scmp.eq.s32.totalorder %s32, 0
      %p157 = por %p155, %p156
      %p158 = scmp.ne.s32.totalorder %s150, %s152
      %p159 = scmp.eq.s32.totalorder %s37, 1
      %p160 = por %p158, %p159
      %p161 = scmp.ne.s32.totalorder %s152, %s153
      %p162 = scmp.eq.s32.totalorder %s37, 0
      %p163 = por %p161, %p162
      %p164 = scmp.ne.s32.totalorder %s152, %s153
      %p165 = scmp.eq.s32.totalorder %s38, 1
      %p166 = por %p164, %p165
      %p168 = scmp.ne.s32.totalorder %s153, %s167
      %p169 = scmp.eq.s32.totalorder %s38, 0
      %p170 = por %p168, %p169
      %s172 = sadd.s32 %s171, 1
      %p175 = scmp.eq.s32.totalorder %s32, 1
      %p176 = scmp.ne.s32.totalorder %s171, %s173
      %p177 = scmp.eq.s32.totalorder %s32, 0
      %p178 = por %p176, %p177
      %p179 = scmp.ne.s32.totalorder %s171, %s173
      %p180 = scmp.eq.s32.totalorder %s37, 1
      %p181 = por %p179, %p180
      %p182 = scmp.ne.s32.totalorder %s173, %s174
      %p183 = scmp.eq.s32.totalorder %s37, 0
      %p184 = por %p182, %p183
      %p185 = scmp.ne.s32.totalorder %s173, %s174
      %p186 = scmp.eq.s32.totalorder %s38, 1
      %p187 = por %p185, %p186
      %p189 = scmp.ne.s32.totalorder %s174, %s188
      %p190 = scmp.eq.s32.totalorder %s38, 0
      %p191 = por %p189, %p190
      %s193 = sadd.s32 %s192, 1
      %p196 = scmp.eq.s32.totalorder %s32, 1
      %p197 = scmp.ne.s32.totalorder %s192, %s194
      %p198 = scmp.eq.s32.totalorder %s32, 0
      %p199 = por %p197, %p198
      %p200 = scmp.ne.s32.totalorder %s192, %s194
      %p201 = scmp.eq.s32.totalorder %s37, 1
      %p202 = por %p200, %p201
      %p203 = scmp.ne.s32.totalorder %s194, %s195
      %p204 = scmp.eq.s32.totalorder %s37, 0
      %p205 = por %p203, %p204
      %p206 = scmp.ne.s32.totalorder %s194, %s195
      %p207 = scmp.eq.s32.totalorder %s38, 1
      %p208 = por %p206, %p207
      %p210 = scmp.ne.s32.totalorder %s195, %s209
      %p211 = scmp.eq.s32.totalorder %s38, 0
      %p212 = por %p210, %p211
      %s214 = sadd.s32 %s213, 1
      %p217 = scmp.eq.s32.totalorder %s32, 1
      %p218 = scmp.ne.s32.totalorder %s213, %s215
      %p219 = scmp.eq.s32.totalorder %s32, 0
      %p220 = por %p218, %p219
      %p221 = scmp.ne.s32.totalorder %s213, %s215
      %p222 = scmp.eq.s32.totalorder %s37, 1
      %p223 = por %p221, %p222
      %p224 = scmp.ne.s32.totalorder %s215, %s216
      %p225 = scmp.eq.s32.totalorder %s37, 0
      %p226 = por %p224, %p225
      %p227 = scmp.ne.s32.totalorder %s215, %s216
      %p228 = scmp.eq.s32.totalorder %s38, 1
      %p229 = por %p227, %p228
      %p231 = scmp.ne.s32.totalorder %s216, %s230
      %p232 = scmp.eq.s32.totalorder %s38, 0
      %p233 = por %p231, %p232
      %s235 = sadd.s32 %s234, 1
      %p238 = scmp.eq.s32.totalorder %s32, 1
      %p239 = scmp.ne.s32.totalorder %s234, %s236
      %p240 = scmp.eq.s32.totalorder %s32, 0
      %p241 = por %p239, %p240
      %p242 = scmp.ne.s32.totalorder %s234, %s236
      %p243 = scmp.eq.s32.totalorder %s37, 1
      %p244 = por %p242, %p243
      %p245 = scmp.ne.s32.totalorder %s236, %s237
      %p246 = scmp.eq.s32.totalorder %s37, 0
      %p247 = por %p245, %p246
      %p248 = scmp.ne.s32.totalorder %s236, %s237
      %p249 = scmp.eq.s32.totalorder %s38, 1
      %p250 = por %p248, %p249
      %p252 = scmp.ne.s32.totalorder %s237, %s251
      %p253 = scmp.eq.s32.totalorder %s38, 0
      %p254 = por %p252, %p253
      %s256 = sadd.s32 %s255, 1
      %p259 = scmp.eq.s32.totalorder %s32, 1
      %p260 = scmp.ne.s32.totalorder %s255, %s257
      %p261 = scmp.eq.s32.totalorder %s32, 0
      %p262 = por %p260, %p261
      %p263 = scmp.ne.s32.totalorder %s255, %s257
      %p264 = scmp.eq.s32.totalorder %s37, 1
      %p265 = por %p263, %p264
      %p266 = scmp.ne.s32.totalorder %s257, %s258
      %p267 = scmp.eq.s32.totalorder %s37, 0
      %p268 = por %p266, %p267
      %p269 = scmp.ne.s32.totalorder %s257, %s258
      %p270 = scmp.eq.s32.totalorder %s38, 1
      %p271 = por %p269, %p270
      %p273 = scmp.ne.s32.totalorder %s258, %s272
      %p274 = scmp.eq.s32.totalorder %s38, 0
      %p275 = por %p273, %p274
      %s277 = sadd.s32 %s276, 1
      %p280 = scmp.eq.s32.totalorder %s32, 1
      %p281 = scmp.ne.s32.totalorder %s276, %s278
      %p282 = scmp.eq.s32.totalorder %s32, 0
      %p283 = por %p281, %p282
      %p284 = scmp.ne.s32.totalorder %s276, %s278
      %p285 = scmp.eq.s32.totalorder %s37, 1
      %p286 = por %p284, %p285
      %p287 = scmp.ne.s32.totalorder %s278, %s279
      %p288 = scmp.eq.s32.totalorder %s37, 0
      %p289 = por %p287, %p288
      %p290 = scmp.ne.s32.totalorder %s278, %s279
      %p291 = scmp.eq.s32.totalorder %s38, 1
      %p292 = por %p290, %p291
      %p294 = scmp.ne.s32.totalorder %s279, %s293
      %p295 = scmp.eq.s32.totalorder %s38, 0
      %p296 = por %p294, %p295
      %s298 = sadd.s32 %s297, 1
      %p301 = scmp.eq.s32.totalorder %s32, 1
      %p302 = scmp.ne.s32.totalorder %s297, %s299
      %p303 = scmp.eq.s32.totalorder %s32, 0
      %p304 = por %p302, %p303
      %p305 = scmp.ne.s32.totalorder %s297, %s299
      %p306 = scmp.eq.s32.totalorder %s37, 1
      %p307 = por %p305, %p306
      %p308 = scmp.ne.s32.totalorder %s299, %s300
      %p309 = scmp.eq.s32.totalorder %s37, 0
      %p310 = por %p308, %p309
      %p311 = scmp.ne.s32.totalorder %s299, %s300
      %p312 = scmp.eq.s32.totalorder %s38, 1
      %p313 = por %p311, %p312
      %p315 = scmp.ne.s32.totalorder %s300, %s314
      %p316 = scmp.eq.s32.totalorder %s38, 0
      %p317 = por %p315, %p316
      %s319 = sadd.s32 %s318, 1
      %p322 = scmp.eq.s32.totalorder %s32, 1
      %p323 = scmp.ne.s32.totalorder %s318, %s320
      %p324 = scmp.eq.s32.totalorder %s32, 0
      %p325 = por %p323, %p324
      %p326 = scmp.ne.s32.totalorder %s318, %s320
      %p327 = scmp.eq.s32.totalorder %s37, 1
      %p328 = por %p326, %p327
      %p329 = scmp.ne.s32.totalorder %s320, %s321
      %p330 = scmp.eq.s32.totalorder %s37, 0
      %p331 = por %p329, %p330
      %p332 = scmp.ne.s32.totalorder %s320, %s321
      %p333 = scmp.eq.s32.totalorder %s38, 1
      %p334 = por %p332, %p333
      %p336 = scmp.ne.s32.totalorder %s321, %s335
      %p337 = scmp.eq.s32.totalorder %s38, 0
      %p338 = por %p336, %p337
      %s340 = sadd.s32 %s339, 1
      %p343 = scmp.eq.s32.totalorder %s32, 1
      %p344 = scmp.ne.s32.totalorder %s339, %s341
      %p345 = scmp.eq.s32.totalorder %s32, 0
      %p346 = por %p344, %p345
      %p347 = scmp.ne.s32.totalorder %s339, %s341
      %p348 = scmp.eq.s32.totalorder %s37, 1
      %p349 = por %p347, %p348
      %p350 = scmp.ne.s32.totalorder %s341, %s342
      %p351 = scmp.eq.s32.totalorder %s37, 0
      %p352 = por %p350, %p351
      %p353 = scmp.ne.s32.totalorder %s341, %s342
      %p354 = scmp.eq.s32.totalorder %s38, 1
      %p355 = por %p353, %p354
      %p357 = scmp.ne.s32.totalorder %s342, %s356
      %p358 = scmp.eq.s32.totalorder %s38, 0
      %p359 = por %p357, %p358
      %s361 = sadd.s32 %s360, 1
      %p364 = scmp.eq.s32.totalorder %s32, 1
      %p365 = scmp.ne.s32.totalorder %s360, %s362
      %p366 = scmp.eq.s32.totalorder %s32, 0
      %p367 = por %p365, %p366
      %p368 = scmp.ne.s32.totalorder %s360, %s362
      %p369 = scmp.eq.s32.totalorder %s37, 1
      %p370 = por %p368, %p369
      %p371 = scmp.ne.s32.totalorder %s362, %s363
      %p372 = scmp.eq.s32.totalorder %s37, 0
      %p373 = por %p371, %p372
      %p374 = scmp.ne.s32.totalorder %s362, %s363
      %p375 = scmp.eq.s32.totalorder %s38, 1
      %p376 = por %p374, %p375
      %p378 = scmp.ne.s32.totalorder %s363, %s377
      %p379 = scmp.eq.s32.totalorder %s38, 0
      %p380 = por %p378, %p379
      %s382 = sadd.s32 %s381, 1
      %p385 = scmp.eq.s32.totalorder %s32, 1
      %p386 = scmp.ne.s32.totalorder %s381, %s383
      %p387 = scmp.eq.s32.totalorder %s32, 0
      %p388 = por %p386, %p387
      %p389 = scmp.ne.s32.totalorder %s381, %s383
      %p390 = scmp.eq.s32.totalorder %s37, 1
      %p391 = por %p389, %p390
      %p392 = scmp.ne.s32.totalorder %s383, %s384
      %p393 = scmp.eq.s32.totalorder %s37, 0
      %p394 = por %p392, %p393
      %p395 = scmp.ne.s32.totalorder %s383, %s384
      %p396 = scmp.eq.s32.totalorder %s38, 1
      %p397 = por %p395, %p396
      %p399 = scmp.ne.s32.totalorder %s384, %s398
      %p400 = scmp.eq.s32.totalorder %s38, 0
      %p401 = por %p399, %p400
      %s403 = sadd.s32 %s402, 1
      %p406 = scmp.eq.s32.totalorder %s32, 1
      %p407 = scmp.ne.s32.totalorder %s402, %s404
      %p408 = scmp.eq.s32.totalorder %s32, 0
      %p409 = por %p407, %p408
      %p410 = scmp.ne.s32.totalorder %s402, %s404
      %p411 = scmp.eq.s32.totalorder %s37, 1
      %p412 = por %p410, %p411
      %p413 = scmp.ne.s32.totalorder %s404, %s405
      %p414 = scmp.eq.s32.totalorder %s37, 0
      %p415 = por %p413, %p414
      %p416 = scmp.ne.s32.totalorder %s404, %s405
      %p417 = scmp.eq.s32.totalorder %s38, 1
      %p418 = por %p416, %p417
      %p420 = scmp.ne.s32.totalorder %s405, %s419
      %p421 = scmp.eq.s32.totalorder %s38, 0
      %p422 = por %p420, %p421
      %s423 = ssub.s32 %s32, %s39
      %p424 = scmp.eq.s32.totalorder %s423, 0
      %s426 = sadd.s32 %s425, 1
      %s427 = scalar_select %p424, %s425, %s426
      %p430 = pneg %p424
      %p431 = scmp.eq.s32.totalorder %s32, 1
      %p432 = por %p430, %p431
      %p433 = scmp.ne.s32.totalorder %s425, %s428
      %p434 = scmp.eq.s32.totalorder %s32, 0
      %p435 = por %p433, %p434
      %p436 = scmp.ne.s32.totalorder %s425, %s428
      %p437 = scmp.eq.s32.totalorder %s37, 1
      %p438 = por %p436, %p437
      %p439 = scmp.ne.s32.totalorder %s428, %s429
      %p440 = scmp.eq.s32.totalorder %s37, 0
      %p441 = por %p439, %p440
      %p442 = scmp.ne.s32.totalorder %s428, %s429
      %p443 = scmp.eq.s32.totalorder %s38, 1
      %p444 = por %p442, %p443
      %p446 = scmp.ne.s32.totalorder %s429, %s445
      %p447 = scmp.eq.s32.totalorder %s38, 0
      %p448 = por %p446, %p447
      %p449 = scmp.le.s32.totalorder 1, %s32
      %p450 = scmp.lt.s32.totalorder %s32, 3
      %p451 = pnand %p449, %p450
      %p452 = pneg %p451
      // Predicated region
      $region9: #{tpu_custom_call.1} parent=5 // pred_check
        _
      $region10: #{tpu_custom_call.1} parent=5 // pred_check_branch
        %454 = sbr.rel (%p451) target = $region12
      $region11: #{tpu_custom_call.1} parent=5 // pred_region
        %s455 = ssub.s32 %s32, 1
        // Predicated region
        $region13: #{tpu_custom_call.1} parent=11 // pred_check
          %p456 = pneg %p79
        $region14: #{tpu_custom_call.1} parent=11 // pred_check_branch
          %458 = sbr.rel (%p456) target = $region16
        $region15: #{tpu_custom_call.1} parent=11 // pred_region
          %s460 = ssub.s32 128, 128
          %461 = vsyncadd [#allocation6], %s460
          %s463 = sshll.u32 [#allocation5], 4
          %s464 = int_to_ptr.vmem [resolvable:$true] %s463
          %466 = dma.hbm_to_vmem [thread:$0]  %s1, 128, %s464, [#allocation6]
        $region16: #{tpu_custom_call.1} parent=11 // pred_fallthru
          _
        // Predicated region
        $region17: #{tpu_custom_call.1} parent=11 // pred_check
          %p467 = pneg %p100
        $region18: #{tpu_custom_call.1} parent=11 // pred_check_branch
          %469 = sbr.rel (%p467) target = $region20
        $region19: #{tpu_custom_call.1} parent=11 // pred_region
          _
        $region20: #{tpu_custom_call.1} parent=11 // pred_fallthru
          _
        // Predicated region
        $region21: #{tpu_custom_call.1} parent=11 // pred_check
          %p470 = pneg %p121
        $region22: #{tpu_custom_call.1} parent=11 // pred_check_branch
          %472 = sbr.rel (%p470) target = $region24
        $region23: #{tpu_custom_call.1} parent=11 // pred_region
          _
        $region24: #{tpu_custom_call.1} parent=11 // pred_fallthru
          _
        // Predicated region
        $region25: #{tpu_custom_call.1} parent=11 // pred_check
          %p473 = pneg %p142
        $region26: #{tpu_custom_call.1} parent=11 // pred_check_branch
          %475 = sbr.rel (%p473) target = $region28
        $region27: #{tpu_custom_call.1} parent=11 // pred_region
          _
        $region28: #{tpu_custom_call.1} parent=11 // pred_fallthru
          _
        // Predicated region
        $region29: #{tpu_custom_call.1} parent=11 // pred_check
          %p476 = pneg %p163
        $region30: #{tpu_custom_call.1} parent=11 // pred_check_branch
          %478 = sbr.rel (%p476) target = $region32
        $region31: #{tpu_custom_call.1} parent=11 // pred_region
          _
        $region32: #{tpu_custom_call.1} parent=11 // pred_fallthru
          _
        // Predicated region
        $region33: #{tpu_custom_call.1} parent=11 // pred_check
          %p479 = pneg %p184
        $region34: #{tpu_custom_call.1} parent=11 // pred_check_branch
          %481 = sbr.rel (%p479) target = $region36
        $region35: #{tpu_custom_call.1} parent=11 // pred_region
          _
        $region36: #{tpu_custom_call.1} parent=11 // pred_fallthru
          _
        // Predicated region
        $region37: #{tpu_custom_call.1} parent=11 // pred_check
          %p482 = pneg %p205
        $region38: #{tpu_custom_call.1} parent=11 // pred_check_branch
          %484 = sbr.rel (%p482) target = $region40
        $region39: #{tpu_custom_call.1} parent=11 // pred_region
          _
        $region40: #{tpu_custom_call.1} parent=11 // pred_fallthru
          _
        // Predicated region
        $region41: #{tpu_custom_call.1} parent=11 // pred_check
          %p485 = pneg %p226
        $region42: #{tpu_custom_call.1} parent=11 // pred_check_branch
          %487 = sbr.rel (%p485) target = $region44
        $region43: #{tpu_custom_call.1} parent=11 // pred_region
          _
        $region44: #{tpu_custom_call.1} parent=11 // pred_fallthru
          _
        // Predicated region
        $region45: #{tpu_custom_call.1} parent=11 // pred_check
          %p488 = pneg %p247
        $region46: #{tpu_custom_call.1} parent=11 // pred_check_branch
          %490 = sbr.rel (%p488) target = $region48
        $region47: #{tpu_custom_call.1} parent=11 // pred_region
          _
        $region48: #{tpu_custom_call.1} parent=11 // pred_fallthru
          _
        // Predicated region
        $region49: #{tpu_custom_call.1} parent=11 // pred_check
          %p491 = pneg %p268
        $region50: #{tpu_custom_call.1} parent=11 // pred_check_branch
          %493 = sbr.rel (%p491) target = $region52
        $region51: #{tpu_custom_call.1} parent=11 // pred_region
          %s495 = ssub.s32 512, 512
          %496 = vsyncadd [#allocation6], %s495
          %s497 = sshll.u32 [#allocation7], 4
          %s498 = int_to_ptr.vmem [resolvable:$true] %s497
          %503 = dma.hbm_to_vmem [thread:$0]  %s10, 512, %s498, [#allocation6], 64, 64, 4
        $region52: #{tpu_custom_call.1} parent=11 // pred_fallthru
          _
        // Predicated region
        $region53: #{tpu_custom_call.1} parent=11 // pred_check
          %p504 = pneg %p289
        $region54: #{tpu_custom_call.1} parent=11 // pred_check_branch
          %506 = sbr.rel (%p504) target = $region56
        $region55: #{tpu_custom_call.1} parent=11 // pred_region
          _
        $region56: #{tpu_custom_call.1} parent=11 // pred_fallthru
          _
        // Predicated region
        $region57: #{tpu_custom_call.1} parent=11 // pred_check
          %p507 = pneg %p310
        $region58: #{tpu_custom_call.1} parent=11 // pred_check_branch
          %509 = sbr.rel (%p507) target = $region60
        $region59: #{tpu_custom_call.1} parent=11 // pred_region
          _
        $region60: #{tpu_custom_call.1} parent=11 // pred_fallthru
          _
        // Predicated region
        $region61: #{tpu_custom_call.1} parent=11 // pred_check
          %p510 = pneg %p331
        $region62: #{tpu_custom_call.1} parent=11 // pred_check_branch
          %512 = sbr.rel (%p510) target = $region64
        $region63: #{tpu_custom_call.1} parent=11 // pred_region
          _
        $region64: #{tpu_custom_call.1} parent=11 // pred_fallthru
          _
        // Predicated region
        $region65: #{tpu_custom_call.1} parent=11 // pred_check
          %p513 = pneg %p352
        $region66: #{tpu_custom_call.1} parent=11 // pred_check_branch
          %515 = sbr.rel (%p513) target = $region68
        $region67: #{tpu_custom_call.1} parent=11 // pred_region
          %s517 = ssub.s32 512, 512
          %518 = vsyncadd [#allocation9], %s517
          %s519 = sshll.u32 [#allocation8], 4
          %s520 = int_to_ptr.vmem [resolvable:$true] %s519
          %525 = dma.hbm_to_vmem [thread:$0]  %s14, 512, %s520, [#allocation9], 64, 64, 4
        $region68: #{tpu_custom_call.1} parent=11 // pred_fallthru
          _
        // Predicated region
        $region69: #{tpu_custom_call.1} parent=11 // pred_check
          %p526 = pneg %p373
        $region70: #{tpu_custom_call.1} parent=11 // pred_check_branch
          %528 = sbr.rel (%p526) target = $region72
        $region71: #{tpu_custom_call.1} parent=11 // pred_region
          _
        $region72: #{tpu_custom_call.1} parent=11 // pred_fallthru
          _
        // Predicated region
        $region73: #{tpu_custom_call.1} parent=11 // pred_check
          %p529 = pneg %p394
        $region74: #{tpu_custom_call.1} parent=11 // pred_check_branch
          %531 = sbr.rel (%p529) target = $region76
        $region75: #{tpu_custom_call.1} parent=11 // pred_region
          _
        $region76: #{tpu_custom_call.1} parent=11 // pred_fallthru
          _
        // Predicated region
        $region77: #{tpu_custom_call.1} parent=11 // pred_check
          %p532 = pneg %p415
        $region78: #{tpu_custom_call.1} parent=11 // pred_check_branch
          %534 = sbr.rel (%p532) target = $region80
        $region79: #{tpu_custom_call.1} parent=11 // pred_region
          _
        $region80: #{tpu_custom_call.1} parent=11 // pred_fallthru
          _
      $region12: #{tpu_custom_call.1} parent=5 // pred_fallthru
        _
      %p535 = scmp.lt.s32.totalorder %s32, 2
      // Predicated region
      $region81: #{tpu_custom_call.1} parent=5 // pred_check
        %p536 = pneg %p535
      $region82: #{tpu_custom_call.1} parent=5 // pred_check_branch
        %538 = sbr.rel (%p536) target = $region84
      $region83: #{tpu_custom_call.1} parent=5 // pred_region
        // Predicated region
        $region85: #{tpu_custom_call.1} parent=83 // pred_check
          %p539 = pneg %p52
        $region86: #{tpu_custom_call.1} parent=83 // pred_check_branch
          %541 = sbr.rel (%p539) target = $region88
        $region87: #{tpu_custom_call.1} parent=83 // pred_region
          %s542 = sand.u32 %s42, 1
          %s543 = scalar_lea.sflag [#allocation3], %s542
          %s544 = sand.u32 %s42, 1
          %s545 = smul.addr %s544, 8
          %s546 = scalar_lea.vmem [#allocation2], %s545
          %s548 = ssub.s32 128, 128
          %549 = vsyncadd %s543, %s548
          %s550 = smul.addr %s32, 128
          %s551 = scalar_lea.hbm %s0, %s550
          %s553 = sshll.u32 %s546, 4
          %s554 = int_to_ptr.vmem [resolvable:$true] %s553
          %556 = dma.hbm_to_vmem [thread:$0]  %s551, 128, %s554, %s543
        $region88: #{tpu_custom_call.1} parent=83 // pred_fallthru
          _
      $region84: #{tpu_custom_call.1} parent=5 // pred_fallthru
        _
      %p557 = scmp.le.s32.totalorder 1, %s32
      %p558 = scmp.lt.s32.totalorder %s32, 3
      %p559 = pnand %p557, %p558
      %p560 = pneg %p559
      // Predicated region
      $region89: #{tpu_custom_call.1} parent=5 // pred_check
        _
      $region90: #{tpu_custom_call.1} parent=5 // pred_check_branch
        %562 = sbr.rel (%p559) target = $region92
      $region91: #{tpu_custom_call.1} parent=5 // pred_region
        %s563 = ssub.s32 %s32, 1
        %s564 = sand.u32 %s45, 1
        %s565 = scalar_lea.sflag [#allocation3], %s564
        %s566 = sand.u32 %s45, 1
        %s567 = smul.addr %s566, 8
        %s568 = scalar_lea.vmem [#allocation2], %s567
        // Predicated region
        $region93: #{tpu_custom_call.1} parent=91 // pred_check
          %p569 = pneg %p58
        $region94: #{tpu_custom_call.1} parent=91 // pred_check_branch
          %571 = sbr.rel (%p569) target = $region96
        $region95: #{tpu_custom_call.1} parent=91 // pred_region
          %572 = dma.done %s565, 128
        $region96: #{tpu_custom_call.1} parent=91 // pred_fallthru
          _
        // Predicated region
        $region97: #{tpu_custom_call.1} parent=91 // pred_check
          %p573 = pneg %p79
        $region98: #{tpu_custom_call.1} parent=91 // pred_check_branch
          %575 = sbr.rel (%p573) target = $region100
        $region99: #{tpu_custom_call.1} parent=91 // pred_region
          %576 = dma.done [#allocation6], 128
        $region100: #{tpu_custom_call.1} parent=91 // pred_fallthru
          _
        // Predicated region
        $region101: #{tpu_custom_call.1} parent=91 // pred_check
          %p577 = pneg %p268
        $region102: #{tpu_custom_call.1} parent=91 // pred_check_branch
          %579 = sbr.rel (%p577) target = $region104
        $region103: #{tpu_custom_call.1} parent=91 // pred_region
          %580 = dma.done [#allocation6], 512
        $region104: #{tpu_custom_call.1} parent=91 // pred_fallthru
          _
        // Predicated region
        $region105: #{tpu_custom_call.1} parent=91 // pred_check
          %p581 = pneg %p352
        $region106: #{tpu_custom_call.1} parent=91 // pred_check_branch
          %583 = sbr.rel (%p581) target = $region108
        $region107: #{tpu_custom_call.1} parent=91 // pred_region
          %584 = dma.done [#allocation9], 512
        $region108: #{tpu_custom_call.1} parent=91 // pred_fallthru
          _
        %s585 = sand.u32 %s45, 1
        %s586 = scalar_lea.sflag [#allocation3], %s585
        %s587 = sand.u32 %s45, 1
        %s588 = smul.addr %s587, 8
        %s589 = scalar_lea.vmem [#allocation2], %s588
        %p590 = pneg %p58
        %p591 = pneg %p55
        %p592 = pneg %p79
        %p593 = pneg %p76
        %p594 = pneg %p100
        %p595 = pneg %p97
        %p596 = pneg %p121
        %p597 = pneg %p118
        %p598 = pneg %p142
        %p599 = pneg %p139
        %p600 = pneg %p163
        %p601 = pneg %p160
        %p602 = pneg %p184
        %p603 = pneg %p181
        %p604 = pneg %p205
        %p605 = pneg %p202
        %p606 = pneg %p226
        %p607 = pneg %p223
        %p608 = pneg %p247
        %p609 = pneg %p244
        %p610 = pneg %p268
        %p611 = pneg %p265
        %p612 = pneg %p289
        %p613 = pneg %p286
        %p614 = pneg %p310
        %p615 = pneg %p307
        %p616 = pneg %p331
        %p617 = pneg %p328
        %p618 = pneg %p352
        %p619 = pneg %p349
        %p620 = pneg %p373
        %p621 = pneg %p370
        %p622 = pneg %p394
        %p623 = pneg %p391
        %p624 = pneg %p415
        %p625 = pneg %p412
        %p626 = pneg %p441
        %p627 = pneg %p438
        %s628 = sand.u32 %s428, 1
        %s629 = scalar_lea.sflag [#allocation4], %s628
        %s630 = sand.u32 %s428, 1
        %s631 = smul.addr %s630, 8
        %s632 = scalar_lea.vmem [#allocation10], %s631
        %v634 = vld [vmem:[%s568] sm:$0xff]
        %v635 = vld [vmem:[#allocation5] sm:$0xff]
        %v636 = vadd.f32 %v634, %v635
        %v637 = vld [vmem:[%s2] sm:$0x1]
        %v638 = vld [vmem:[%s3] sm:$0x1]
        %vm639 = vcmask 261120
        %v640 = vsel %vm639, %v636, 0.0
        %641 = vadd.xlane.f32.xlu0 %v640
        %v642 = vpop.xlane.xlu0 %641
        %v643 = vrcp.pop 32.0
        %v644 = vmul.f32 %v642, %v643
        %v645 = vsub.f32 %v636, %v644
        %v646 = vmul.f32 %v645, %v645
        %v647 = vsel %vm639, %v646, 0.0
        %648 = vadd.xlane.f32.xlu0 %v647
        %v649 = vpop.xlane.xlu0 %648
        %v650 = vmul.f32 %v649, %v643
        %v651 = vadd.f32 %v650, 1e-05
        %v652 = vrsqrt.pop %v651
        %v653 = vmul.f32 %v645, %v652
        %v655 = vlaneseq
        %v656 = vshrl.u32 %v655, 7
        %v657 = vsub.s32 0, %v656
        %v658 = vrot.slane %v637, %v657
        %v660 = vmul.f32 %v653, %v658
        %v662 = vlaneseq
        %v663 = vshrl.u32 %v662, 7
        %v664 = vsub.s32 0, %v663
        %v665 = vrot.slane %v638, %v664
        %v667 = vadd.f32 %v660, %v665
        %v668 = vpack.c.bf16 %v667, %v667
        %v669 = vld [vmem:[%s4] sm:$0xf]
        %v670 = vld [vmem:[%s4 + $0x4] sm:$0xf]
        %v671 = vld [vmem:[%s4 + $0x8] sm:$0xf]
        %v672 = vld [vmem:[%s4 + $0xc] sm:$0xf]
        %v673 = vld [vmem:[%s5] sm:$0x1]
        %v675 = vlaneseq
        %v676 = vshrl.u32 %v675, 7
        %v677 = vsub.s32 0, %v676
        %v678 = vrot.slane %v673, %v677
        %v684 = vunpack.c.l.b16 %v669
        %v685 = vunpack.c.l.b16 %v670
        %v686 = vunpack.c.l.b16 %v671
        %v687 = vunpack.c.l.b16 %v672
        %v688 = vpack.c.b16 %v685, %v684
        %v689 = vpack.c.b16 %v687, %v686
        %v693 = vsel %vm639, %v668, 0
        %695 = vmatprep.subr.bf16.mxu0 0
        %696 = vmatpush1.bf16.msra.mxu0 %v688
        %697 = vmatprep.subr.bf16.mxu0 0
        %698 = vmatpush1.bf16.msra.mxu0 %v689
        %699 = vmatprep.subr.bf16.mxu0 0
        %700 = vmatpush1.bf16.msra.mxu0 0
        %701 = vmatprep.subr.bf16.mxu0 0
        %702 = vmatpush1.bf16.msra.mxu0 0
        %703 = vmatprep.subr.bf16.mxu0 0
        %704 = vmatpush1.bf16.msra.mxu0 0
        %705 = vmatprep.subr.bf16.mxu0 0
        %706 = vmatpush1.bf16.msra.mxu0 0
        %707 = vmatprep.subr.bf16.mxu0 0
        %708 = vmatpush1.bf16.msra.mxu0 0
        %709 = vmatprep.subr.bf16.mxu0 0
        %710 = vmatpush1.bf16.msra.mxu0 0
        %711 = vmatprep.subr.bf16.mxu0 0
        %712 = vmatpush1.bf16.msra.mxu0 0
        %713 = vmatprep.subr.bf16.mxu0 0
        %714 = vmatpush1.bf16.msra.mxu0 0
        %715 = vmatprep.subr.bf16.mxu0 0
        %716 = vmatpush1.bf16.msra.mxu0 0
        %717 = vmatprep.subr.bf16.mxu0 0
        %718 = vmatpush1.bf16.msra.mxu0 0
        %719 = vmatprep.subr.bf16.mxu0 0
        %720 = vmatpush1.bf16.msra.mxu0 0
        %721 = vmatprep.subr.bf16.mxu0 0
        %722 = vmatpush1.bf16.msra.mxu0 0
        %723 = vmatprep.subr.bf16.mxu0 0
        %724 = vmatpush1.bf16.msra.mxu0 0
        %725 = vmatprep.subr.bf16.mxu0 0
        %726 = vmatpush1.bf16.msra.mxu0 0
        %727 = vmatprep.mubr.bf16.mxu0 0
        %728 = vmatmul.mubr.bf16.gmra.mrb[0].mxu0 %v693
        %v729 = vpop.f32.mrb[0].mxu0
        %v730 = vadd.f32 %v678, %v729
        %v731 = vpop.f32.mrb[0].mxu0
        %v732 = vpop.f32.mrb[0].mxu0
        %v733 = vpop.f32.mrb[0].mxu0
        %734 = vdwg.mxu0
        %v735 = vld [vmem:[%s6] sm:$0xf]
        %v736 = vld [vmem:[%s6 + $0x4] sm:$0xf]
        %v737 = vld [vmem:[%s6 + $0x8] sm:$0xf]
        %v738 = vld [vmem:[%s6 + $0xc] sm:$0xf]
        %v739 = vld [vmem:[%s7] sm:$0x1]
        %v741 = vlaneseq
        %v742 = vshrl.u32 %v741, 7
        %v743 = vsub.s32 0, %v742
        %v744 = vrot.slane %v739, %v743
        %v750 = vunpack.c.l.b16 %v735
        %v751 = vunpack.c.l.b16 %v736
        %v752 = vunpack.c.l.b16 %v737
        %v753 = vunpack.c.l.b16 %v738
        %v754 = vpack.c.b16 %v751, %v750
        %v755 = vpack.c.b16 %v753, %v752
        %758 = vmatprep.subr.bf16.mxu0 0
        %759 = vmatpush1.bf16.msra.mxu0 %v754
        %760 = vmatprep.subr.bf16.mxu0 0
        %761 = vmatpush1.bf16.msra.mxu0 %v755
        %762 = vmatprep.subr.bf16.mxu0 0
        %763 = vmatpush1.bf16.msra.mxu0 0
        %764 = vmatprep.subr.bf16.mxu0 0
        %765 = vmatpush1.bf16.msra.mxu0 0
        %766 = vmatprep.subr.bf16.mxu0 0
        %767 = vmatpush1.bf16.msra.mxu0 0
        %768 = vmatprep.subr.bf16.mxu0 0
        %769 = vmatpush1.bf16.msra.mxu0 0
        %770 = vmatprep.subr.bf16.mxu0 0
        %771 = vmatpush1.bf16.msra.mxu0 0
        %772 = vmatprep.subr.bf16.mxu0 0
        %773 = vmatpush1.bf16.msra.mxu0 0
        %774 = vmatprep.subr.bf16.mxu0 0
        %775 = vmatpush1.bf16.msra.mxu0 0
        %776 = vmatprep.subr.bf16.mxu0 0
        %777 = vmatpush1.bf16.msra.mxu0 0
        %778 = vmatprep.subr.bf16.mxu0 0
        %779 = vmatpush1.bf16.msra.mxu0 0
        %780 = vmatprep.subr.bf16.mxu0 0
        %781 = vmatpush1.bf16.msra.mxu0 0
        %782 = vmatprep.subr.bf16.mxu0 0
        %783 = vmatpush1.bf16.msra.mxu0 0
        %784 = vmatprep.subr.bf16.mxu0 0
        %785 = vmatpush1.bf16.msra.mxu0 0
        %786 = vmatprep.subr.bf16.mxu0 0
        %787 = vmatpush1.bf16.msra.mxu0 0
        %788 = vmatprep.subr.bf16.mxu0 0
        %789 = vmatpush1.bf16.msra.mxu0 0
        %790 = vmatprep.mubr.bf16.mxu0 0
        %791 = vmatmul.mubr.bf16.gmra.mrb[0].mxu0 %v693
        %v792 = vpop.f32.mrb[0].mxu0
        %v793 = vadd.f32 %v744, %v792
        %v794 = vpop.f32.mrb[0].mxu0
        %v795 = vpop.f32.mrb[0].mxu0
        %v796 = vpop.f32.mrb[0].mxu0
        %797 = vdwg.mxu0
        %v798 = vld [vmem:[%s8] sm:$0xf]
        %v799 = vld [vmem:[%s8 + $0x4] sm:$0xf]
        %v800 = vld [vmem:[%s8 + $0x8] sm:$0xf]
        %v801 = vld [vmem:[%s8 + $0xc] sm:$0xf]
        %v802 = vld [vmem:[%s9] sm:$0x1]
        %v804 = vlaneseq
        %v805 = vshrl.u32 %v804, 7
        %v806 = vsub.s32 0, %v805
        %v807 = vrot.slane %v802, %v806
        %v813 = vunpack.c.l.b16 %v798
        %v814 = vunpack.c.l.b16 %v799
        %v815 = vunpack.c.l.b16 %v800
        %v816 = vunpack.c.l.b16 %v801
        %v817 = vpack.c.b16 %v814, %v813
        %v818 = vpack.c.b16 %v816, %v815
        %821 = vmatprep.subr.bf16.mxu0 0
        %822 = vmatpush1.bf16.msra.mxu0 %v817
        %823 = vmatprep.subr.bf16.mxu0 0
        %824 = vmatpush1.bf16.msra.mxu0 %v818
        %825 = vmatprep.subr.bf16.mxu0 0
        %826 = vmatpush1.bf16.msra.mxu0 0
        %827 = vmatprep.subr.bf16.mxu0 0
        %828 = vmatpush1.bf16.msra.mxu0 0
        %829 = vmatprep.subr.bf16.mxu0 0
        %830 = vmatpush1.bf16.msra.mxu0 0
        %831 = vmatprep.subr.bf16.mxu0 0
        %832 = vmatpush1.bf16.msra.mxu0 0
        %833 = vmatprep.subr.bf16.mxu0 0
        %834 = vmatpush1.bf16.msra.mxu0 0
        %835 = vmatprep.subr.bf16.mxu0 0
        %836 = vmatpush1.bf16.msra.mxu0 0
        %837 = vmatprep.subr.bf16.mxu0 0
        %838 = vmatpush1.bf16.msra.mxu0 0
        %839 = vmatprep.subr.bf16.mxu0 0
        %840 = vmatpush1.bf16.msra.mxu0 0
        %841 = vmatprep.subr.bf16.mxu0 0
        %842 = vmatpush1.bf16.msra.mxu0 0
        %843 = vmatprep.subr.bf16.mxu0 0
        %844 = vmatpush1.bf16.msra.mxu0 0
        %845 = vmatprep.subr.bf16.mxu0 0
        %846 = vmatpush1.bf16.msra.mxu0 0
        %847 = vmatprep.subr.bf16.mxu0 0
        %848 = vmatpush1.bf16.msra.mxu0 0
        %849 = vmatprep.subr.bf16.mxu0 0
        %850 = vmatpush1.bf16.msra.mxu0 0
        %851 = vmatprep.subr.bf16.mxu0 0
        %852 = vmatpush1.bf16.msra.mxu0 0
        %853 = vmatprep.mubr.bf16.mxu0 0
        %854 = vmatmul.mubr.bf16.gmra.mrb[0].mxu0 %v693
        %v855 = vpop.f32.mrb[0].mxu0
        %v856 = vadd.f32 %v807, %v855
        %v857 = vpop.f32.mrb[0].mxu0
        %v858 = vpop.f32.mrb[0].mxu0
        %v859 = vpop.f32.mrb[0].mxu0
        %860 = vdwg.mxu0
        %v861 = vmul.f32 %v730, 0.35355338
        %863 = vrot.lane.b32.xlu0 %v861, 120
        %v864 = vpop.permute.xlu0 %863
        %866 = vrot.lane.b32.xlu0 %v861, 112
        %v867 = vpop.permute.xlu0 %866
        %869 = vrot.lane.b32.xlu0 %v861, 104
        %v870 = vpop.permute.xlu0 %869
        %v872 = vcombine.low %v861, %v867
        %v873 = vcombine.high %v861, %v867
        %v875 = vunpack.c.l.s4 1983009808
        %v876 = vunpack.c.0.s8 %v875
        %v877 = vlaneseq
        %v878 = vshrl.u32 %v877, 7
        %v879 = vsub.s32 %v876, %v878
        %v880 = vrot.slane %v872, %v879
        %v882 = vunpack.c.l.s4 1983009808
        %v883 = vunpack.c.0.s8 %v882
        %v884 = vlaneseq
        %v885 = vshrl.u32 %v884, 7
        %v886 = vsub.s32 %v883, %v885
        %v887 = vrot.slane %v873, %v886
        %v888 = vcombine.low %v864, %v870
        %v889 = vcombine.high %v864, %v870
        %v891 = vunpack.c.l.s4 1983009808
        %v892 = vunpack.c.0.s8 %v891
        %v893 = vlaneseq
        %v894 = vshrl.u32 %v893, 7
        %v895 = vsub.s32 %v892, %v894
        %v896 = vrot.slane %v888, %v895
        %v898 = vunpack.c.l.s4 1983009808
        %v899 = vunpack.c.0.s8 %v898
        %v900 = vlaneseq
        %v901 = vshrl.u32 %v900, 7
        %v902 = vsub.s32 %v899, %v901
        %v903 = vrot.slane %v889, %v902
        %v904 = vcombine.low %v880, %v896
        %v905 = vcombine.high %v880, %v896
        %v907 = vunpack.c.l.s4 1934713408
        %v908 = vunpack.c.0.s8 %v907
        %v909 = vlaneseq
        %v910 = vshrl.u32 %v909, 7
        %v911 = vsub.s32 %v908, %v910
        %v912 = vrot.slane %v904, %v911
        %v914 = vunpack.c.l.s4 1934713408
        %v915 = vunpack.c.0.s8 %v914
        %v916 = vlaneseq
        %v917 = vshrl.u32 %v916, 7
        %v918 = vsub.s32 %v915, %v917
        %v919 = vrot.slane %v905, %v918
        %v920 = vcombine.low %v887, %v903
        %v921 = vcombine.high %v887, %v903
        %v923 = vunpack.c.l.s4 1934713408
        %v924 = vunpack.c.0.s8 %v923
        %v925 = vlaneseq
        %v926 = vshrl.u32 %v925, 7
        %v927 = vsub.s32 %v924, %v926
        %v928 = vrot.slane %v920, %v927
        %v930 = vunpack.c.l.s4 1934713408
        %v931 = vunpack.c.0.s8 %v930
        %v932 = vlaneseq
        %v933 = vshrl.u32 %v932, 7
        %v934 = vsub.s32 %v931, %v933
        %v935 = vrot.slane %v921, %v934
        %v936 = vcombine.high %v912, 0.0
        %v937 = vcombine.high %v919, 0.0
        %v938 = vcombine.high %v928, 0.0
        %v939 = vcombine.high %v935, 0.0
        %v940 = vcombine.low %v912, %v919
        %v942 = vunpack.c.l.s4 1983009808
        %v943 = vunpack.c.0.s8 %v942
        %v944 = vlaneseq
        %v945 = vshrl.u32 %v944, 7
        %v946 = vsub.s32 %v943, %v945
        %v947 = vrot.slane %v940, %v946
        %v948 = vcombine.low %v936, %v937
        %v950 = vunpack.c.l.s4 1983009808
        %v951 = vunpack.c.0.s8 %v950
        %v952 = vlaneseq
        %v953 = vshrl.u32 %v952, 7
        %v954 = vsub.s32 %v951, %v953
        %v955 = vrot.slane %v948, %v954
        %v956 = vcombine.low %v928, %v935
        %v958 = vunpack.c.l.s4 1983009808
        %v959 = vunpack.c.0.s8 %v958
        %v960 = vlaneseq
        %v961 = vshrl.u32 %v960, 7
        %v962 = vsub.s32 %v959, %v961
        %v963 = vrot.slane %v956, %v962
        %v964 = vcombine.low %v938, %v939
        %v966 = vunpack.c.l.s4 1983009808
        %v967 = vunpack.c.0.s8 %v966
        %v968 = vlaneseq
        %v969 = vshrl.u32 %v968, 7
        %v970 = vsub.s32 %v967, %v969
        %v971 = vrot.slane %v964, %v970
        %v972 = vcombine.low %v947, %v955
        %v973 = vcombine.high %v947, %v955
        %v975 = vunpack.c.l.s4 1934713408
        %v976 = vunpack.c.0.s8 %v975
        %v977 = vlaneseq
        %v978 = vshrl.u32 %v977, 7
        %v979 = vsub.s32 %v976, %v978
        %v980 = vrot.slane %v972, %v979
        %v982 = vunpack.c.l.s4 1934713408
        %v983 = vunpack.c.0.s8 %v982
        %v984 = vlaneseq
        %v985 = vshrl.u32 %v984, 7
        %v986 = vsub.s32 %v983, %v985
        %v987 = vrot.slane %v973, %v986
        %v988 = vcombine.low %v963, %v971
        %v989 = vcombine.high %v963, %v971
        %v991 = vunpack.c.l.s4 1934713408
        %v992 = vunpack.c.0.s8 %v991
        %v993 = vlaneseq
        %v994 = vshrl.u32 %v993, 7
        %v995 = vsub.s32 %v992, %v994
        %v996 = vrot.slane %v988, %v995
        %v998 = vunpack.c.l.s4 1934713408
        %v999 = vunpack.c.0.s8 %v998
        %v1000 = vlaneseq
        %v1001 = vshrl.u32 %v1000, 7
        %v1002 = vsub.s32 %v999, %v1001
        %v1003 = vrot.slane %v989, %v1002
        %v1004 = vcombine.low %v980, %v996
        %v1005 = vcombine.high %v980, %v996
        %v1006 = vcombine.low %v987, %v1003
        %v1007 = vcombine.high %v987, %v1003
        %v1008 = vpack.c.bf16 %v1004, %v1004
        %v1009 = vpack.c.bf16 %v1005, %v1005
        %v1010 = vpack.c.bf16 %v1006, %v1006
        %v1011 = vpack.c.bf16 %v1007, %v1007
        %1013 = vrot.lane.b32.xlu0 %v793, 120
        %v1014 = vpop.permute.xlu0 %1013
        %1016 = vrot.lane.b32.xlu0 %v793, 112
        %v1017 = vpop.permute.xlu0 %1016
        %1019 = vrot.lane.b32.xlu0 %v793, 104
        %v1020 = vpop.permute.xlu0 %1019
        %v1022 = vcombine.low %v793, %v1017
        %v1023 = vcombine.high %v793, %v1017
        %v1025 = vunpack.c.l.s4 1983009808
        %v1026 = vunpack.c.0.s8 %v1025
        %v1027 = vlaneseq
        %v1028 = vshrl.u32 %v1027, 7
        %v1029 = vsub.s32 %v1026, %v1028
        %v1030 = vrot.slane %v1022, %v1029
        %v1032 = vunpack.c.l.s4 1983009808
        %v1033 = vunpack.c.0.s8 %v1032
        %v1034 = vlaneseq
        %v1035 = vshrl.u32 %v1034, 7
        %v1036 = vsub.s32 %v1033, %v1035
        %v1037 = vrot.slane %v1023, %v1036
        %v1038 = vcombine.low %v1014, %v1020
        %v1039 = vcombine.high %v1014, %v1020
        %v1041 = vunpack.c.l.s4 1983009808
        %v1042 = vunpack.c.0.s8 %v1041
        %v1043 = vlaneseq
        %v1044 = vshrl.u32 %v1043, 7
        %v1045 = vsub.s32 %v1042, %v1044
        %v1046 = vrot.slane %v1038, %v1045
        %v1048 = vunpack.c.l.s4 1983009808
        %v1049 = vunpack.c.0.s8 %v1048
        %v1050 = vlaneseq
        %v1051 = vshrl.u32 %v1050, 7
        %v1052 = vsub.s32 %v1049, %v1051
        %v1053 = vrot.slane %v1039, %v1052
        %v1054 = vcombine.low %v1030, %v1046
        %v1055 = vcombine.high %v1030, %v1046
        %v1057 = vunpack.c.l.s4 1934713408
        %v1058 = vunpack.c.0.s8 %v1057
        %v1059 = vlaneseq
        %v1060 = vshrl.u32 %v1059, 7
        %v1061 = vsub.s32 %v1058, %v1060
        %v1062 = vrot.slane %v1054, %v1061
        %v1064 = vunpack.c.l.s4 1934713408
        %v1065 = vunpack.c.0.s8 %v1064
        %v1066 = vlaneseq
        %v1067 = vshrl.u32 %v1066, 7
        %v1068 = vsub.s32 %v1065, %v1067
        %v1069 = vrot.slane %v1055, %v1068
        %v1070 = vcombine.low %v1037, %v1053
        %v1071 = vcombine.high %v1037, %v1053
        %v1073 = vunpack.c.l.s4 1934713408
        %v1074 = vunpack.c.0.s8 %v1073
        %v1075 = vlaneseq
        %v1076 = vshrl.u32 %v1075, 7
        %v1077 = vsub.s32 %v1074, %v1076
        %v1078 = vrot.slane %v1070, %v1077
        %v1080 = vunpack.c.l.s4 1934713408
        %v1081 = vunpack.c.0.s8 %v1080
        %v1082 = vlaneseq
        %v1083 = vshrl.u32 %v1082, 7
        %v1084 = vsub.s32 %v1081, %v1083
        %v1085 = vrot.slane %v1071, %v1084
        %v1086 = vcombine.high %v1062, 0.0
        %v1087 = vcombine.high %v1069, 0.0
        %v1088 = vcombine.high %v1078, 0.0
        %v1089 = vcombine.high %v1085, 0.0
        %v1090 = vcombine.low %v1062, %v1069
        %v1092 = vunpack.c.l.s4 1983009808
        %v1093 = vunpack.c.0.s8 %v1092
        %v1094 = vlaneseq
        %v1095 = vshrl.u32 %v1094, 7
        %v1096 = vsub.s32 %v1093, %v1095
        %v1097 = vrot.slane %v1090, %v1096
        %v1098 = vcombine.low %v1086, %v1087
        %v1100 = vunpack.c.l.s4 1983009808
        %v1101 = vunpack.c.0.s8 %v1100
        %v1102 = vlaneseq
        %v1103 = vshrl.u32 %v1102, 7
        %v1104 = vsub.s32 %v1101, %v1103
        %v1105 = vrot.slane %v1098, %v1104
        %v1106 = vcombine.low %v1078, %v1085
        %v1108 = vunpack.c.l.s4 1983009808
        %v1109 = vunpack.c.0.s8 %v1108
        %v1110 = vlaneseq
        %v1111 = vshrl.u32 %v1110, 7
        %v1112 = vsub.s32 %v1109, %v1111
        %v1113 = vrot.slane %v1106, %v1112
        %v1114 = vcombine.low %v1088, %v1089
        %v1116 = vunpack.c.l.s4 1983009808
        %v1117 = vunpack.c.0.s8 %v1116
        %v1118 = vlaneseq
        %v1119 = vshrl.u32 %v1118, 7
        %v1120 = vsub.s32 %v1117, %v1119
        %v1121 = vrot.slane %v1114, %v1120
        %v1122 = vcombine.low %v1097, %v1105
        %v1123 = vcombine.high %v1097, %v1105
        %v1125 = vunpack.c.l.s4 1934713408
        %v1126 = vunpack.c.0.s8 %v1125
        %v1127 = vlaneseq
        %v1128 = vshrl.u32 %v1127, 7
        %v1129 = vsub.s32 %v1126, %v1128
        %v1130 = vrot.slane %v1122, %v1129
        %v1132 = vunpack.c.l.s4 1934713408
        %v1133 = vunpack.c.0.s8 %v1132
        %v1134 = vlaneseq
        %v1135 = vshrl.u32 %v1134, 7
        %v1136 = vsub.s32 %v1133, %v1135
        %v1137 = vrot.slane %v1123, %v1136
        %v1138 = vcombine.low %v1113, %v1121
        %v1139 = vcombine.high %v1113, %v1121
        %v1141 = vunpack.c.l.s4 1934713408
        %v1142 = vunpack.c.0.s8 %v1141
        %v1143 = vlaneseq
        %v1144 = vshrl.u32 %v1143, 7
        %v1145 = vsub.s32 %v1142, %v1144
        %v1146 = vrot.slane %v1138, %v1145
        %v1148 = vunpack.c.l.s4 1934713408
        %v1149 = vunpack.c.0.s8 %v1148
        %v1150 = vlaneseq
        %v1151 = vshrl.u32 %v1150, 7
        %v1152 = vsub.s32 %v1149, %v1151
        %v1153 = vrot.slane %v1139, %v1152
        %v1154 = vcombine.low %v1130, %v1146
        %v1155 = vcombine.high %v1130, %v1146
        %v1156 = vcombine.low %v1137, %v1153
        %v1157 = vcombine.high %v1137, %v1153
        %v1158 = vpack.c.bf16 %v1154, %v1154
        %v1159 = vpack.c.bf16 %v1155, %v1155
        %v1160 = vpack.c.bf16 %v1156, %v1156
        %v1161 = vpack.c.bf16 %v1157, %v1157
        %1163 = vrot.lane.b32.xlu0 %v856, 120
        %v1164 = vpop.permute.xlu0 %1163
        %1166 = vrot.lane.b32.xlu0 %v856, 112
        %v1167 = vpop.permute.xlu0 %1166
        %1169 = vrot.lane.b32.xlu0 %v856, 104
        %v1170 = vpop.permute.xlu0 %1169
        %v1172 = vcombine.low %v856, %v1167
        %v1173 = vcombine.high %v856, %v1167
        %v1175 = vunpack.c.l.s4 1983009808
        %v1176 = vunpack.c.0.s8 %v1175
        %v1177 = vlaneseq
        %v1178 = vshrl.u32 %v1177, 7
        %v1179 = vsub.s32 %v1176, %v1178
        %v1180 = vrot.slane %v1172, %v1179
        %v1182 = vunpack.c.l.s4 1983009808
        %v1183 = vunpack.c.0.s8 %v1182
        %v1184 = vlaneseq
        %v1185 = vshrl.u32 %v1184, 7
        %v1186 = vsub.s32 %v1183, %v1185
        %v1187 = vrot.slane %v1173, %v1186
        %v1188 = vcombine.low %v1164, %v1170
        %v1189 = vcombine.high %v1164, %v1170
        %v1191 = vunpack.c.l.s4 1983009808
        %v1192 = vunpack.c.0.s8 %v1191
        %v1193 = vlaneseq
        %v1194 = vshrl.u32 %v1193, 7
        %v1195 = vsub.s32 %v1192, %v1194
        %v1196 = vrot.slane %v1188, %v1195
        %v1198 = vunpack.c.l.s4 1983009808
        %v1199 = vunpack.c.0.s8 %v1198
        %v1200 = vlaneseq
        %v1201 = vshrl.u32 %v1200, 7
        %v1202 = vsub.s32 %v1199, %v1201
        %v1203 = vrot.slane %v1189, %v1202
        %v1204 = vcombine.low %v1180, %v1196
        %v1205 = vcombine.high %v1180, %v1196
        %v1207 = vunpack.c.l.s4 1934713408
        %v1208 = vunpack.c.0.s8 %v1207
        %v1209 = vlaneseq
        %v1210 = vshrl.u32 %v1209, 7
        %v1211 = vsub.s32 %v1208, %v1210
        %v1212 = vrot.slane %v1204, %v1211
        %v1214 = vunpack.c.l.s4 1934713408
        %v1215 = vunpack.c.0.s8 %v1214
        %v1216 = vlaneseq
        %v1217 = vshrl.u32 %v1216, 7
        %v1218 = vsub.s32 %v1215, %v1217
        %v1219 = vrot.slane %v1205, %v1218
        %v1220 = vcombine.low %v1187, %v1203
        %v1221 = vcombine.high %v1187, %v1203
        %v1223 = vunpack.c.l.s4 1934713408
        %v1224 = vunpack.c.0.s8 %v1223
        %v1225 = vlaneseq
        %v1226 = vshrl.u32 %v1225, 7
        %v1227 = vsub.s32 %v1224, %v1226
        %v1228 = vrot.slane %v1220, %v1227
        %v1230 = vunpack.c.l.s4 1934713408
        %v1231 = vunpack.c.0.s8 %v1230
        %v1232 = vlaneseq
        %v1233 = vshrl.u32 %v1232, 7
        %v1234 = vsub.s32 %v1231, %v1233
        %v1235 = vrot.slane %v1221, %v1234
        %v1236 = vcombine.high %v1212, 0.0
        %v1237 = vcombine.high %v1219, 0.0
        %v1238 = vcombine.high %v1228, 0.0
        %v1239 = vcombine.high %v1235, 0.0
        %v1240 = vcombine.low %v1212, %v1219
        %v1242 = vunpack.c.l.s4 1983009808
        %v1243 = vunpack.c.0.s8 %v1242
        %v1244 = vlaneseq
        %v1245 = vshrl.u32 %v1244, 7
        %v1246 = vsub.s32 %v1243, %v1245
        %v1247 = vrot.slane %v1240, %v1246
        %v1248 = vcombine.low %v1236, %v1237
        %v1250 = vunpack.c.l.s4 1983009808
        %v1251 = vunpack.c.0.s8 %v1250
        %v1252 = vlaneseq
        %v1253 = vshrl.u32 %v1252, 7
        %v1254 = vsub.s32 %v1251, %v1253
        %v1255 = vrot.slane %v1248, %v1254
        %v1256 = vcombine.low %v1228, %v1235
        %v1258 = vunpack.c.l.s4 1983009808
        %v1259 = vunpack.c.0.s8 %v1258
        %v1260 = vlaneseq
        %v1261 = vshrl.u32 %v1260, 7
        %v1262 = vsub.s32 %v1259, %v1261
        %v1263 = vrot.slane %v1256, %v1262
        %v1264 = vcombine.low %v1238, %v1239
        %v1266 = vunpack.c.l.s4 1983009808
        %v1267 = vunpack.c.0.s8 %v1266
        %v1268 = vlaneseq
        %v1269 = vshrl.u32 %v1268, 7
        %v1270 = vsub.s32 %v1267, %v1269
        %v1271 = vrot.slane %v1264, %v1270
        %v1272 = vcombine.low %v1247, %v1255
        %v1273 = vcombine.high %v1247, %v1255
        %v1275 = vunpack.c.l.s4 1934713408
        %v1276 = vunpack.c.0.s8 %v1275
        %v1277 = vlaneseq
        %v1278 = vshrl.u32 %v1277, 7
        %v1279 = vsub.s32 %v1276, %v1278
        %v1280 = vrot.slane %v1272, %v1279
        %v1282 = vunpack.c.l.s4 1934713408
        %v1283 = vunpack.c.0.s8 %v1282
        %v1284 = vlaneseq
        %v1285 = vshrl.u32 %v1284, 7
        %v1286 = vsub.s32 %v1283, %v1285
        %v1287 = vrot.slane %v1273, %v1286
        %v1288 = vcombine.low %v1263, %v1271
        %v1289 = vcombine.high %v1263, %v1271
        %v1291 = vunpack.c.l.s4 1934713408
        %v1292 = vunpack.c.0.s8 %v1291
        %v1293 = vlaneseq
        %v1294 = vshrl.u32 %v1293, 7
        %v1295 = vsub.s32 %v1292, %v1294
        %v1296 = vrot.slane %v1288, %v1295
        %v1298 = vunpack.c.l.s4 1934713408
        %v1299 = vunpack.c.0.s8 %v1298
        %v1300 = vlaneseq
        %v1301 = vshrl.u32 %v1300, 7
        %v1302 = vsub.s32 %v1299, %v1301
        %v1303 = vrot.slane %v1289, %v1302
        %v1304 = vcombine.low %v1280, %v1296
        %v1305 = vcombine.high %v1280, %v1296
        %v1306 = vcombine.low %v1287, %v1303
        %v1307 = vcombine.high %v1287, %v1303
        %v1308 = vpack.c.bf16 %v1304, %v1304
        %v1309 = vpack.c.bf16 %v1305, %v1305
        %v1310 = vpack.c.bf16 %v1306, %v1306
        %v1311 = vpack.c.bf16 %v1307, %v1307
        %vm1312 = vcmask 64512
        %v1314 = vsel %vm1312, %v1008, 0
        %v1317 = vsel %vm1312, %v1158, 0
        %1319 = vmatprep.subr.bf16.mxu0 0
        %1320 = vmatpush1.bf16.xpose.msra.mxu0 %v1317
        %1321 = vmatprep.subr.bf16.mxu0 0
        %1322 = vmatpush1.bf16.xpose.msra.mxu0 0
        %1323 = vmatprep.subr.bf16.mxu0 0
        %1324 = vmatpush1.bf16.xpose.msra.mxu0 0
        %1325 = vmatprep.subr.bf16.mxu0 0
        %1326 = vmatpush1.bf16.xpose.msra.mxu0 0
        %1327 = vmatprep.subr.bf16.mxu0 0
        %1328 = vmatpush1.bf16.xpose.msra.mxu0 0
        %1329 = vmatprep.subr.bf16.mxu0 0
        %1330 = vmatpush1.bf16.xpose.msra.mxu0 0
        %1331 = vmatprep.subr.bf16.mxu0 0
        %1332 = vmatpush1.bf16.xpose.msra.mxu0 0
        %1333 = vmatprep.subr.bf16.mxu0 0
        %1334 = vmatpush1.bf16.xpose.msra.mxu0 0
        %1335 = vmatprep.subr.bf16.mxu0 0
        %1336 = vmatpush1.bf16.xpose.msra.mxu0 0
        %1337 = vmatprep.subr.bf16.mxu0 0
        %1338 = vmatpush1.bf16.xpose.msra.mxu0 0
        %1339 = vmatprep.subr.bf16.mxu0 0
        %1340 = vmatpush1.bf16.xpose.msra.mxu0 0
        %1341 = vmatprep.subr.bf16.mxu0 0
        %1342 = vmatpush1.bf16.xpose.msra.mxu0 0
        %1343 = vmatprep.subr.bf16.mxu0 0
        %1344 = vmatpush1.bf16.xpose.msra.mxu0 0
        %1345 = vmatprep.subr.bf16.mxu0 0
        %1346 = vmatpush1.bf16.xpose.msra.mxu0 0
        %1347 = vmatprep.subr.bf16.mxu0 0
        %1348 = vmatpush1.bf16.xpose.msra.mxu0 0
        %1349 = vmatprep.subr.bf16.mxu0 0
        %1350 = vmatpush1.bf16.xpose.msra.mxu0 0
        %1351 = vmatprep.mubr.bf16.mxu0 0
        %1352 = vmatmul.mubr.bf16.gmra.mrb[0].mxu0 %v1314
        %v1353 = vpop.f32.mrb[0].mxu0
        %v1354 = vadd.f32 0.0, %v1353
        %v1355 = vpop.f32.mrb[0].mxu0
        %v1356 = vpop.f32.mrb[0].mxu0
        %v1357 = vpop.f32.mrb[0].mxu0
        %1358 = vdwg.mxu0
        %v1360 = vsel %vm1312, %v1009, 0
        %v1363 = vsel %vm1312, %v1159, 0
        %1365 = vmatprep.subr.bf16.mxu0 0
        %1366 = vmatpush1.bf16.xpose.msra.mxu0 %v1363
        %1367 = vmatprep.subr.bf16.mxu0 0
        %1368 = vmatpush1.bf16.xpose.msra.mxu0 0
        %1369 = vmatprep.subr.bf16.mxu0 0
        %1370 = vmatpush1.bf16.xpose.msra.mxu0 0
        %1371 = vmatprep.subr.bf16.mxu0 0
        %1372 = vmatpush1.bf16.xpose.msra.mxu0 0
        %1373 = vmatprep.subr.bf16.mxu0 0
        %1374 = vmatpush1.bf16.xpose.msra.mxu0 0
        %1375 = vmatprep.subr.bf16.mxu0 0
        %1376 = vmatpush1.bf16.xpose.msra.mxu0 0
        %1377 = vmatprep.subr.bf16.mxu0 0
        %1378 = vmatpush1.bf16.xpose.msra.mxu0 0
        %1379 = vmatprep.subr.bf16.mxu0 0
        %1380 = vmatpush1.bf16.xpose.msra.mxu0 0
        %1381 = vmatprep.subr.bf16.mxu0 0
        %1382 = vmatpush1.bf16.xpose.msra.mxu0 0
        %1383 = vmatprep.subr.bf16.mxu0 0
        %1384 = vmatpush1.bf16.xpose.msra.mxu0 0
        %1385 = vmatprep.subr.bf16.mxu0 0
        %1386 = vmatpush1.bf16.xpose.msra.mxu0 0
        %1387 = vmatprep.subr.bf16.mxu0 0
        %1388 = vmatpush1.bf16.xpose.msra.mxu0 0
        %1389 = vmatprep.subr.bf16.mxu0 0
        %1390 = vmatpush1.bf16.xpose.msra.mxu0 0
        %1391 = vmatprep.subr.bf16.mxu0 0
        %1392 = vmatpush1.bf16.xpose.msra.mxu0 0
        %1393 = vmatprep.subr.bf16.mxu0 0
        %1394 = vmatpush1.bf16.xpose.msra.mxu0 0
        %1395 = vmatprep.subr.bf16.mxu0 0
        %1396 = vmatpush1.bf16.xpose.msra.mxu0 0
        %1397 = vmatprep.mubr.bf16.mxu0 0
        %1398 = vmatmul.mubr.bf16.gmra.mrb[0].mxu0 %v1360
        %v1399 = vpop.f32.mrb[0].mxu0
        %v1400 = vadd.f32 0.0, %v1399
        %v1401 = vpop.f32.mrb[0].mxu0
        %v1402 = vpop.f32.mrb[0].mxu0
        %v1403 = vpop.f32.mrb[0].mxu0
        %1404 = vdwg.mxu0
        %v1406 = vsel %vm1312, %v1010, 0
        %v1409 = vsel %vm1312, %v1160, 0
        %1411 = vmatprep.subr.bf16.mxu0 0
        %1412 = vmatpush1.bf16.xpose.msra.mxu0 %v1409
        %1413 = vmatprep.subr.bf16.mxu0 0
        %1414 = vmatpush1.bf16.xpose.msra.mxu0 0
        %1415 = vmatprep.subr.bf16.mxu0 0
        %1416 = vmatpush1.bf16.xpose.msra.mxu0 0
        %1417 = vmatprep.subr.bf16.mxu0 0
        %1418 = vmatpush1.bf16.xpose.msra.mxu0 0
        %1419 = vmatprep.subr.bf16.mxu0 0
        %1420 = vmatpush1.bf16.xpose.msra.mxu0 0
        %1421 = vmatprep.subr.bf16.mxu0 0
        %1422 = vmatpush1.bf16.xpose.msra.mxu0 0
        %1423 = vmatprep.subr.bf16.mxu0 0
        %1424 = vmatpush1.bf16.xpose.msra.mxu0 0
        %1425 = vmatprep.subr.bf16.mxu0 0
        %1426 = vmatpush1.bf16.xpose.msra.mxu0 0
        %1427 = vmatprep.subr.bf16.mxu0 0
        %1428 = vmatpush1.bf16.xpose.msra.mxu0 0
        %1429 = vmatprep.subr.bf16.mxu0 0
        %1430 = vmatpush1.bf16.xpose.msra.mxu0 0
        %1431 = vmatprep.subr.bf16.mxu0 0
        %1432 = vmatpush1.bf16.xpose.msra.mxu0 0
        %1433 = vmatprep.subr.bf16.mxu0 0
        %1434 = vmatpush1.bf16.xpose.msra.mxu0 0
        %1435 = vmatprep.subr.bf16.mxu0 0
        %1436 = vmatpush1.bf16.xpose.msra.mxu0 0
        %1437 = vmatprep.subr.bf16.mxu0 0
        %1438 = vmatpush1.bf16.xpose.msra.mxu0 0
        %1439 = vmatprep.subr.bf16.mxu0 0
        %1440 = vmatpush1.bf16.xpose.msra.mxu0 0
        %1441 = vmatprep.subr.bf16.mxu0 0
        %1442 = vmatpush1.bf16.xpose.msra.mxu0 0
        %1443 = vmatprep.mubr.bf16.mxu0 0
        %1444 = vmatmul.mubr.bf16.gmra.mrb[0].mxu0 %v1406
        %v1445 = vpop.f32.mrb[0].mxu0
        %v1446 = vadd.f32 0.0, %v1445
        %v1447 = vpop.f32.mrb[0].mxu0
        %v1448 = vpop.f32.mrb[0].mxu0
        %v1449 = vpop.f32.mrb[0].mxu0
        %1450 = vdwg.mxu0
        %v1452 = vsel %vm1312, %v1011, 0
        %v1455 = vsel %vm1312, %v1161, 0
        %1457 = vmatprep.subr.bf16.mxu0 0
        %1458 = vmatpush1.bf16.xpose.msra.mxu0 %v1455
        %1459 = vmatprep.subr.bf16.mxu0 0
        %1460 = vmatpush1.bf16.xpose.msra.mxu0 0
        %1461 = vmatprep.subr.bf16.mxu0 0
        %1462 = vmatpush1.bf16.xpose.msra.mxu0 0
        %1463 = vmatprep.subr.bf16.mxu0 0
        %1464 = vmatpush1.bf16.xpose.msra.mxu0 0
        %1465 = vmatprep.subr.bf16.mxu0 0
        %1466 = vmatpush1.bf16.xpose.msra.mxu0 0
        %1467 = vmatprep.subr.bf16.mxu0 0
        %1468 = vmatpush1.bf16.xpose.msra.mxu0 0
        %1469 = vmatprep.subr.bf16.mxu0 0
        %1470 = vmatpush1.bf16.xpose.msra.mxu0 0
        %1471 = vmatprep.subr.bf16.mxu0 0
        %1472 = vmatpush1.bf16.xpose.msra.mxu0 0
        %1473 = vmatprep.subr.bf16.mxu0 0
        %1474 = vmatpush1.bf16.xpose.msra.mxu0 0
        %1475 = vmatprep.subr.bf16.mxu0 0
        %1476 = vmatpush1.bf16.xpose.msra.mxu0 0
        %1477 = vmatprep.subr.bf16.mxu0 0
        %1478 = vmatpush1.bf16.xpose.msra.mxu0 0
        %1479 = vmatprep.subr.bf16.mxu0 0
        %1480 = vmatpush1.bf16.xpose.msra.mxu0 0
        %1481 = vmatprep.subr.bf16.mxu0 0
        %1482 = vmatpush1.bf16.xpose.msra.mxu0 0
        %1483 = vmatprep.subr.bf16.mxu0 0
        %1484 = vmatpush1.bf16.xpose.msra.mxu0 0
        %1485 = vmatprep.subr.bf16.mxu0 0
        %1486 = vmatpush1.bf16.xpose.msra.mxu0 0
        %1487 = vmatprep.subr.bf16.mxu0 0
        %1488 = vmatpush1.bf16.xpose.msra.mxu0 0
        %1489 = vmatprep.mubr.bf16.mxu0 0
        %1490 = vmatmul.mubr.bf16.gmra.mrb[0].mxu0 %v1452
        %v1491 = vpop.f32.mrb[0].mxu0
        %v1492 = vadd.f32 0.0, %v1491
        %v1493 = vpop.f32.mrb[0].mxu0
        %v1494 = vpop.f32.mrb[0].mxu0
        %v1495 = vpop.f32.mrb[0].mxu0
        %1496 = vdwg.mxu0
        %v1497 = vsel %vm1312, %v1354, -inf
        %1498 = vmax.xlane.f32.xlu0 %v1497
        %v1499 = vpop.xlane.xlu0 %1498
        %v1500 = vsel %vm1312, %v1400, -inf
        %1501 = vmax.xlane.f32.xlu0 %v1500
        %v1502 = vpop.xlane.xlu0 %1501
        %v1503 = vsel %vm1312, %v1446, -inf
        %1504 = vmax.xlane.f32.xlu0 %v1503
        %v1505 = vpop.xlane.xlu0 %1504
        %v1506 = vsel %vm1312, %v1492, -inf
        %1507 = vmax.xlane.f32.xlu0 %v1506
        %v1508 = vpop.xlane.xlu0 %1507
        %v1509 = vsub.f32 %v1354, %v1499
        %v1510 = vsub.f32 %v1400, %v1502
        %v1511 = vsub.f32 %v1446, %v1505
        %v1512 = vsub.f32 %v1492, %v1508
        %v1513 = vmul.f32 %v1509, 1.442695
        %v1514 = vpow.pop %v1513
        %v1515 = vmul.f32 %v1510, 1.442695
        %v1516 = vpow.pop %v1515
        %v1517 = vmul.f32 %v1511, 1.442695
        %v1518 = vpow.pop %v1517
        %v1519 = vmul.f32 %v1512, 1.442695
        %v1520 = vpow.pop %v1519
        %v1521 = vsel %vm1312, %v1514, 0.0
        %1522 = vadd.xlane.f32.xlu0 %v1521
        %v1523 = vpop.xlane.xlu0 %1522
        %v1524 = vsel %vm1312, %v1516, 0.0
        %1525 = vadd.xlane.f32.xlu0 %v1524
        %v1526 = vpop.xlane.xlu0 %1525
        %v1527 = vsel %vm1312, %v1518, 0.0
        %1528 = vadd.xlane.f32.xlu0 %v1527
        %v1529 = vpop.xlane.xlu0 %1528
        %v1530 = vsel %vm1312, %v1520, 0.0
        %1531 = vadd.xlane.f32.xlu0 %v1530
        %v1532 = vpop.xlane.xlu0 %1531
        %v1533 = vrcp.pop %v1523
        %v1534 = vrcp.pop %v1526
        %v1535 = vrcp.pop %v1529
        %v1536 = vrcp.pop %v1532
        %v1537 = vmul.f32 %v1514, %v1533
        %v1538 = vmul.f32 %v1516, %v1534
        %v1539 = vmul.f32 %v1518, %v1535
        %v1540 = vmul.f32 %v1520, %v1536
        %v1541 = vpack.c.bf16 %v1537, %v1537
        %v1542 = vpack.c.bf16 %v1538, %v1538
        %v1543 = vpack.c.bf16 %v1539, %v1539
        %v1544 = vpack.c.bf16 %v1540, %v1540
        %v1546 = vsel %vm1312, %v1541, 0
        %vm1548 = vcmask 1043456
        %v1550 = vsel %vm1548, %v1308, 0
        %1552 = vmatprep.subr.bf16.mxu0 0
        %1553 = vmatpush1.bf16.msra.mxu0 %v1550
        %1554 = vmatprep.subr.bf16.mxu0 0
        %1555 = vmatpush1.bf16.msra.mxu0 0
        %1556 = vmatprep.subr.bf16.mxu0 0
        %1557 = vmatpush1.bf16.msra.mxu0 0
        %1558 = vmatprep.subr.bf16.mxu0 0
        %1559 = vmatpush1.bf16.msra.mxu0 0
        %1560 = vmatprep.subr.bf16.mxu0 0
        %1561 = vmatpush1.bf16.msra.mxu0 0
        %1562 = vmatprep.subr.bf16.mxu0 0
        %1563 = vmatpush1.bf16.msra.mxu0 0
        %1564 = vmatprep.subr.bf16.mxu0 0
        %1565 = vmatpush1.bf16.msra.mxu0 0
        %1566 = vmatprep.subr.bf16.mxu0 0
        %1567 = vmatpush1.bf16.msra.mxu0 0
        %1568 = vmatprep.subr.bf16.mxu0 0
        %1569 = vmatpush1.bf16.msra.mxu0 0
        %1570 = vmatprep.subr.bf16.mxu0 0
        %1571 = vmatpush1.bf16.msra.mxu0 0
        %1572 = vmatprep.subr.bf16.mxu0 0
        %1573 = vmatpush1.bf16.msra.mxu0 0
        %1574 = vmatprep.subr.bf16.mxu0 0
        %1575 = vmatpush1.bf16.msra.mxu0 0
        %1576 = vmatprep.subr.bf16.mxu0 0
        %1577 = vmatpush1.bf16.msra.mxu0 0
        %1578 = vmatprep.subr.bf16.mxu0 0
        %1579 = vmatpush1.bf16.msra.mxu0 0
        %1580 = vmatprep.subr.bf16.mxu0 0
        %1581 = vmatpush1.bf16.msra.mxu0 0
        %1582 = vmatprep.subr.bf16.mxu0 0
        %1583 = vmatpush1.bf16.msra.mxu0 0
        %1584 = vmatprep.mubr.bf16.mxu0 0
        %1585 = vmatmul.mubr.bf16.gmra.mrb[0].mxu0 %v1546
        %v1586 = vpop.f32.mrb[0].mxu0
        %v1587 = vadd.f32 0.0, %v1586
        %v1588 = vpop.f32.mrb[0].mxu0
        %v1589 = vpop.f32.mrb[0].mxu0
        %v1590 = vpop.f32.mrb[0].mxu0
        %1591 = vdwg.mxu0
        %v1593 = vsel %vm1312, %v1542, 0
        %v1596 = vsel %vm1548, %v1309, 0
        %1598 = vmatprep.subr.bf16.mxu0 0
        %1599 = vmatpush1.bf16.msra.mxu0 %v1596
        %1600 = vmatprep.subr.bf16.mxu0 0
        %1601 = vmatpush1.bf16.msra.mxu0 0
        %1602 = vmatprep.subr.bf16.mxu0 0
        %1603 = vmatpush1.bf16.msra.mxu0 0
        %1604 = vmatprep.subr.bf16.mxu0 0
        %1605 = vmatpush1.bf16.msra.mxu0 0
        %1606 = vmatprep.subr.bf16.mxu0 0
        %1607 = vmatpush1.bf16.msra.mxu0 0
        %1608 = vmatprep.subr.bf16.mxu0 0
        %1609 = vmatpush1.bf16.msra.mxu0 0
        %1610 = vmatprep.subr.bf16.mxu0 0
        %1611 = vmatpush1.bf16.msra.mxu0 0
        %1612 = vmatprep.subr.bf16.mxu0 0
        %1613 = vmatpush1.bf16.msra.mxu0 0
        %1614 = vmatprep.subr.bf16.mxu0 0
        %1615 = vmatpush1.bf16.msra.mxu0 0
        %1616 = vmatprep.subr.bf16.mxu0 0
        %1617 = vmatpush1.bf16.msra.mxu0 0
        %1618 = vmatprep.subr.bf16.mxu0 0
        %1619 = vmatpush1.bf16.msra.mxu0 0
        %1620 = vmatprep.subr.bf16.mxu0 0
        %1621 = vmatpush1.bf16.msra.mxu0 0
        %1622 = vmatprep.subr.bf16.mxu0 0
        %1623 = vmatpush1.bf16.msra.mxu0 0
        %1624 = vmatprep.subr.bf16.mxu0 0
        %1625 = vmatpush1.bf16.msra.mxu0 0
        %1626 = vmatprep.subr.bf16.mxu0 0
        %1627 = vmatpush1.bf16.msra.mxu0 0
        %1628 = vmatprep.subr.bf16.mxu0 0
        %1629 = vmatpush1.bf16.msra.mxu0 0
        %1630 = vmatprep.mubr.bf16.mxu0 0
        %1631 = vmatmul.mubr.bf16.gmra.mrb[0].mxu0 %v1593
        %v1632 = vpop.f32.mrb[0].mxu0
        %v1633 = vadd.f32 0.0, %v1632
        %v1634 = vpop.f32.mrb[0].mxu0
        %v1635 = vpop.f32.mrb[0].mxu0
        %v1636 = vpop.f32.mrb[0].mxu0
        %1637 = vdwg.mxu0
        %v1639 = vsel %vm1312, %v1543, 0
        %v1642 = vsel %vm1548, %v1310, 0
        %1644 = vmatprep.subr.bf16.mxu0 0
        %1645 = vmatpush1.bf16.msra.mxu0 %v1642
        %1646 = vmatprep.subr.bf16.mxu0 0
        %1647 = vmatpush1.bf16.msra.mxu0 0
        %1648 = vmatprep.subr.bf16.mxu0 0
        %1649 = vmatpush1.bf16.msra.mxu0 0
        %1650 = vmatprep.subr.bf16.mxu0 0
        %1651 = vmatpush1.bf16.msra.mxu0 0
        %1652 = vmatprep.subr.bf16.mxu0 0
        %1653 = vmatpush1.bf16.msra.mxu0 0
        %1654 = vmatprep.subr.bf16.mxu0 0
        %1655 = vmatpush1.bf16.msra.mxu0 0
        %1656 = vmatprep.subr.bf16.mxu0 0
        %1657 = vmatpush1.bf16.msra.mxu0 0
        %1658 = vmatprep.subr.bf16.mxu0 0
        %1659 = vmatpush1.bf16.msra.mxu0 0
        %1660 = vmatprep.subr.bf16.mxu0 0
        %1661 = vmatpush1.bf16.msra.mxu0 0
        %1662 = vmatprep.subr.bf16.mxu0 0
        %1663 = vmatpush1.bf16.msra.mxu0 0
        %1664 = vmatprep.subr.bf16.mxu0 0
        %1665 = vmatpush1.bf16.msra.mxu0 0
        %1666 = vmatprep.subr.bf16.mxu0 0
        %1667 = vmatpush1.bf16.msra.mxu0 0
        %1668 = vmatprep.subr.bf16.mxu0 0
        %1669 = vmatpush1.bf16.msra.mxu0 0
        %1670 = vmatprep.subr.bf16.mxu0 0
        %1671 = vmatpush1.bf16.msra.mxu0 0
        %1672 = vmatprep.subr.bf16.mxu0 0
        %1673 = vmatpush1.bf16.msra.mxu0 0
        %1674 = vmatprep.subr.bf16.mxu0 0
        %1675 = vmatpush1.bf16.msra.mxu0 0
        %1676 = vmatprep.mubr.bf16.mxu0 0
        %1677 = vmatmul.mubr.bf16.gmra.mrb[0].mxu0 %v1639
        %v1678 = vpop.f32.mrb[0].mxu0
        %v1679 = vadd.f32 0.0, %v1678
        %v1680 = vpop.f32.mrb[0].mxu0
        %v1681 = vpop.f32.mrb[0].mxu0
        %v1682 = vpop.f32.mrb[0].mxu0
        %1683 = vdwg.mxu0
        %v1685 = vsel %vm1312, %v1544, 0
        %v1688 = vsel %vm1548, %v1311, 0
        %1690 = vmatprep.subr.bf16.mxu0 0
        %1691 = vmatpush1.bf16.msra.mxu0 %v1688
        %1692 = vmatprep.subr.bf16.mxu0 0
        %1693 = vmatpush1.bf16.msra.mxu0 0
        %1694 = vmatprep.subr.bf16.mxu0 0
        %1695 = vmatpush1.bf16.msra.mxu0 0
        %1696 = vmatprep.subr.bf16.mxu0 0
        %1697 = vmatpush1.bf16.msra.mxu0 0
        %1698 = vmatprep.subr.bf16.mxu0 0
        %1699 = vmatpush1.bf16.msra.mxu0 0
        %1700 = vmatprep.subr.bf16.mxu0 0
        %1701 = vmatpush1.bf16.msra.mxu0 0
        %1702 = vmatprep.subr.bf16.mxu0 0
        %1703 = vmatpush1.bf16.msra.mxu0 0
        %1704 = vmatprep.subr.bf16.mxu0 0
        %1705 = vmatpush1.bf16.msra.mxu0 0
        %1706 = vmatprep.subr.bf16.mxu0 0
        %1707 = vmatpush1.bf16.msra.mxu0 0
        %1708 = vmatprep.subr.bf16.mxu0 0
        %1709 = vmatpush1.bf16.msra.mxu0 0
        %1710 = vmatprep.subr.bf16.mxu0 0
        %1711 = vmatpush1.bf16.msra.mxu0 0
        %1712 = vmatprep.subr.bf16.mxu0 0
        %1713 = vmatpush1.bf16.msra.mxu0 0
        %1714 = vmatprep.subr.bf16.mxu0 0
        %1715 = vmatpush1.bf16.msra.mxu0 0
        %1716 = vmatprep.subr.bf16.mxu0 0
        %1717 = vmatpush1.bf16.msra.mxu0 0
        %1718 = vmatprep.subr.bf16.mxu0 0
        %1719 = vmatpush1.bf16.msra.mxu0 0
        %1720 = vmatprep.subr.bf16.mxu0 0
        %1721 = vmatpush1.bf16.msra.mxu0 0
        %1722 = vmatprep.mubr.bf16.mxu0 0
        %1723 = vmatmul.mubr.bf16.gmra.mrb[0].mxu0 %v1685
        %v1724 = vpop.f32.mrb[0].mxu0
        %v1725 = vadd.f32 0.0, %v1724
        %v1726 = vpop.f32.mrb[0].mxu0
        %v1727 = vpop.f32.mrb[0].mxu0
        %v1728 = vpop.f32.mrb[0].mxu0
        %1729 = vdwg.mxu0
        %v1730 = vcombine.low %v1587, %v1679
        %v1731 = vcombine.high %v1587, %v1679
        %v1733 = vunpack.c.l.s4 1983009808
        %v1734 = vunpack.c.0.s8 %v1733
        %v1735 = vlaneseq
        %v1736 = vshrl.u32 %v1735, 7
        %v1737 = vsub.s32 %v1734, %v1736
        %v1738 = vrot.slane %v1730, %v1737
        %v1740 = vunpack.c.l.s4 1983009808
        %v1741 = vunpack.c.0.s8 %v1740
        %v1742 = vlaneseq
        %v1743 = vshrl.u32 %v1742, 7
        %v1744 = vsub.s32 %v1741, %v1743
        %v1745 = vrot.slane %v1731, %v1744
        %v1746 = vcombine.low %v1633, %v1725
        %v1747 = vcombine.high %v1633, %v1725
        %v1749 = vunpack.c.l.s4 1983009808
        %v1750 = vunpack.c.0.s8 %v1749
        %v1751 = vlaneseq
        %v1752 = vshrl.u32 %v1751, 7
        %v1753 = vsub.s32 %v1750, %v1752
        %v1754 = vrot.slane %v1746, %v1753
        %v1756 = vunpack.c.l.s4 1983009808
        %v1757 = vunpack.c.0.s8 %v1756
        %v1758 = vlaneseq
        %v1759 = vshrl.u32 %v1758, 7
        %v1760 = vsub.s32 %v1757, %v1759
        %v1761 = vrot.slane %v1747, %v1760
        %v1762 = vcombine.low %v1738, %v1754
        %v1763 = vcombine.high %v1738, %v1754
        %v1765 = vunpack.c.l.s4 1934713408
        %v1766 = vunpack.c.0.s8 %v1765
        %v1767 = vlaneseq
        %v1768 = vshrl.u32 %v1767, 7
        %v1769 = vsub.s32 %v1766, %v1768
        %v1770 = vrot.slane %v1762, %v1769
        %v1772 = vunpack.c.l.s4 1934713408
        %v1773 = vunpack.c.0.s8 %v1772
        %v1774 = vlaneseq
        %v1775 = vshrl.u32 %v1774, 7
        %v1776 = vsub.s32 %v1773, %v1775
        %v1777 = vrot.slane %v1763, %v1776
        %v1778 = vcombine.low %v1745, %v1761
        %v1779 = vcombine.high %v1745, %v1761
        %v1781 = vunpack.c.l.s4 1934713408
        %v1782 = vunpack.c.0.s8 %v1781
        %v1783 = vlaneseq
        %v1784 = vshrl.u32 %v1783, 7
        %v1785 = vsub.s32 %v1782, %v1784
        %v1786 = vrot.slane %v1778, %v1785
        %v1788 = vunpack.c.l.s4 1934713408
        %v1789 = vunpack.c.0.s8 %v1788
        %v1790 = vlaneseq
        %v1791 = vshrl.u32 %v1790, 7
        %v1792 = vsub.s32 %v1789, %v1791
        %v1793 = vrot.slane %v1779, %v1792
        %v1794 = vcombine.high %v1770, 0.0
        %v1795 = vcombine.high %v1777, 0.0
        %v1796 = vcombine.high %v1786, 0.0
        %v1797 = vcombine.high %v1793, 0.0
        %v1798 = vcombine.low %v1770, %v1777
        %v1800 = vunpack.c.l.s4 1983009808
        %v1801 = vunpack.c.0.s8 %v1800
        %v1802 = vlaneseq
        %v1803 = vshrl.u32 %v1802, 7
        %v1804 = vsub.s32 %v1801, %v1803
        %v1805 = vrot.slane %v1798, %v1804
        %v1806 = vcombine.low %v1794, %v1795
        %v1808 = vunpack.c.l.s4 1983009808
        %v1809 = vunpack.c.0.s8 %v1808
        %v1810 = vlaneseq
        %v1811 = vshrl.u32 %v1810, 7
        %v1812 = vsub.s32 %v1809, %v1811
        %v1813 = vrot.slane %v1806, %v1812
        %v1814 = vcombine.low %v1786, %v1793
        %v1816 = vunpack.c.l.s4 1983009808
        %v1817 = vunpack.c.0.s8 %v1816
        %v1818 = vlaneseq
        %v1819 = vshrl.u32 %v1818, 7
        %v1820 = vsub.s32 %v1817, %v1819
        %v1821 = vrot.slane %v1814, %v1820
        %v1822 = vcombine.low %v1796, %v1797
        %v1824 = vunpack.c.l.s4 1983009808
        %v1825 = vunpack.c.0.s8 %v1824
        %v1826 = vlaneseq
        %v1827 = vshrl.u32 %v1826, 7
        %v1828 = vsub.s32 %v1825, %v1827
        %v1829 = vrot.slane %v1822, %v1828
        %v1830 = vcombine.low %v1805, %v1813
        %v1831 = vcombine.high %v1805, %v1813
        %v1833 = vunpack.c.l.s4 1934713408
        %v1834 = vunpack.c.0.s8 %v1833
        %v1835 = vlaneseq
        %v1836 = vshrl.u32 %v1835, 7
        %v1837 = vsub.s32 %v1834, %v1836
        %v1838 = vrot.slane %v1830, %v1837
        %v1840 = vunpack.c.l.s4 1934713408
        %v1841 = vunpack.c.0.s8 %v1840
        %v1842 = vlaneseq
        %v1843 = vshrl.u32 %v1842, 7
        %v1844 = vsub.s32 %v1841, %v1843
        %v1845 = vrot.slane %v1831, %v1844
        %v1846 = vcombine.low %v1821, %v1829
        %v1847 = vcombine.high %v1821, %v1829
        %v1849 = vunpack.c.l.s4 1934713408
        %v1850 = vunpack.c.0.s8 %v1849
        %v1851 = vlaneseq
        %v1852 = vshrl.u32 %v1851, 7
        %v1853 = vsub.s32 %v1850, %v1852
        %v1854 = vrot.slane %v1846, %v1853
        %v1856 = vunpack.c.l.s4 1934713408
        %v1857 = vunpack.c.0.s8 %v1856
        %v1858 = vlaneseq
        %v1859 = vshrl.u32 %v1858, 7
        %v1860 = vsub.s32 %v1857, %v1859
        %v1861 = vrot.slane %v1847, %v1860
        %v1862 = vcombine.low %v1838, %v1854
        %v1863 = vcombine.high %v1838, %v1854
        %v1864 = vcombine.low %v1845, %v1861
        %v1865 = vcombine.high %v1845, %v1861
        %1867 = vrot.lane.b32.xlu0 %v1863, 8
        %v1868 = vpop.permute.xlu0 %1867
        %1871 = vrot.lane.b32.xlu0 %v1864, 16
        %v1872 = vpop.permute.xlu0 %1871
        %1875 = vrot.lane.b32.xlu0 %v1865, 24
        %v1876 = vpop.permute.xlu0 %1875
        %v1878 = vsel %vm1312, %v1862, %v1868
        %vm1879 = vcmask 130048
        %v1880 = vsel %vm1879, %v1878, %v1872
        %vm1881 = vcmask 195584
        %v1882 = vsel %vm1881, %v1880, %v1876
        %v1883 = vpack.c.bf16 %v1882, %v1882
        %v1884 = vld [vmem:[#allocation7] sm:$0xf]
        %v1885 = vld [vmem:[#allocation7 + $0x4] sm:$0xf]
        %v1886 = vld [vmem:[#allocation7 + $0x8] sm:$0xf]
        %v1887 = vld [vmem:[#allocation7 + $0xc] sm:$0xf]
        %v1888 = vld [vmem:[%s11] sm:$0x1]
        %v1890 = vlaneseq
        %v1891 = vshrl.u32 %v1890, 7
        %v1892 = vsub.s32 0, %v1891
        %v1893 = vrot.slane %v1888, %v1892
        %v1899 = vunpack.c.l.b16 %v1884
        %v1900 = vunpack.c.l.b16 %v1885
        %v1901 = vunpack.c.l.b16 %v1886
        %v1902 = vunpack.c.l.b16 %v1887
        %v1903 = vpack.c.b16 %v1900, %v1899
        %v1904 = vpack.c.b16 %v1902, %v1901
        %v1908 = vsel %vm639, %v1883, 0
        %1910 = vmatprep.subr.bf16.mxu0 0
        %1911 = vmatpush1.bf16.msra.mxu0 %v1903
        %1912 = vmatprep.subr.bf16.mxu0 0
        %1913 = vmatpush1.bf16.msra.mxu0 %v1904
        %1914 = vmatprep.subr.bf16.mxu0 0
        %1915 = vmatpush1.bf16.msra.mxu0 0
        %1916 = vmatprep.subr.bf16.mxu0 0
        %1917 = vmatpush1.bf16.msra.mxu0 0
        %1918 = vmatprep.subr.bf16.mxu0 0
        %1919 = vmatpush1.bf16.msra.mxu0 0
        %1920 = vmatprep.subr.bf16.mxu0 0
        %1921 = vmatpush1.bf16.msra.mxu0 0
        %1922 = vmatprep.subr.bf16.mxu0 0
        %1923 = vmatpush1.bf16.msra.mxu0 0
        %1924 = vmatprep.subr.bf16.mxu0 0
        %1925 = vmatpush1.bf16.msra.mxu0 0
        %1926 = vmatprep.subr.bf16.mxu0 0
        %1927 = vmatpush1.bf16.msra.mxu0 0
        %1928 = vmatprep.subr.bf16.mxu0 0
        %1929 = vmatpush1.bf16.msra.mxu0 0
        %1930 = vmatprep.subr.bf16.mxu0 0
        %1931 = vmatpush1.bf16.msra.mxu0 0
        %1932 = vmatprep.subr.bf16.mxu0 0
        %1933 = vmatpush1.bf16.msra.mxu0 0
        %1934 = vmatprep.subr.bf16.mxu0 0
        %1935 = vmatpush1.bf16.msra.mxu0 0
        %1936 = vmatprep.subr.bf16.mxu0 0
        %1937 = vmatpush1.bf16.msra.mxu0 0
        %1938 = vmatprep.subr.bf16.mxu0 0
        %1939 = vmatpush1.bf16.msra.mxu0 0
        %1940 = vmatprep.subr.bf16.mxu0 0
        %1941 = vmatpush1.bf16.msra.mxu0 0
        %1942 = vmatprep.mubr.bf16.mxu0 0
        %1943 = vmatmul.mubr.bf16.gmra.mrb[0].mxu0 %v1908
        %v1944 = vpop.f32.mrb[0].mxu0
        %v1945 = vadd.f32 %v1893, %v1944
        %v1946 = vpop.f32.mrb[0].mxu0
        %v1947 = vpop.f32.mrb[0].mxu0
        %v1948 = vpop.f32.mrb[0].mxu0
        %1949 = vdwg.mxu0
        %v1950 = vadd.f32 %v636, %v1945
        %v1951 = vld [vmem:[%s12] sm:$0x1]
        %v1952 = vld [vmem:[%s13] sm:$0x1]
        %v1953 = vsel %vm639, %v1950, 0.0
        %1954 = vadd.xlane.f32.xlu0 %v1953
        %v1955 = vpop.xlane.xlu0 %1954
        %v1956 = vmul.f32 %v1955, %v643
        %v1957 = vsub.f32 %v1950, %v1956
        %v1958 = vmul.f32 %v1957, %v1957
        %v1959 = vsel %vm639, %v1958, 0.0
        %1960 = vadd.xlane.f32.xlu0 %v1959
        %v1961 = vpop.xlane.xlu0 %1960
        %v1962 = vmul.f32 %v1961, %v643
        %v1963 = vadd.f32 %v1962, 1e-05
        %v1964 = vrsqrt.pop %v1963
        %v1965 = vmul.f32 %v1957, %v1964
        %v1967 = vlaneseq
        %v1968 = vshrl.u32 %v1967, 7
        %v1969 = vsub.s32 0, %v1968
        %v1970 = vrot.slane %v1951, %v1969
        %v1972 = vmul.f32 %v1965, %v1970
        %v1974 = vlaneseq
        %v1975 = vshrl.u32 %v1974, 7
        %v1976 = vsub.s32 0, %v1975
        %v1977 = vrot.slane %v1952, %v1976
        %v1979 = vadd.f32 %v1972, %v1977
        %v1980 = vpack.c.bf16 %v1979, %v1979
        %v1981 = vld [vmem:[#allocation8] sm:$0xf]
        %v1982 = vld [vmem:[#allocation8 + $0x4] sm:$0xf]
        %v1983 = vld [vmem:[#allocation8 + $0x8] sm:$0xf]
        %v1984 = vld [vmem:[#allocation8 + $0xc] sm:$0xf]
        %v1985 = vld [vmem:[%s15] sm:$0x1]
        %v1987 = vlaneseq
        %v1988 = vshrl.u32 %v1987, 7
        %v1989 = vsub.s32 0, %v1988
        %v1990 = vrot.slane %v1985, %v1989
        %v1996 = vunpack.c.l.b16 %v1981
        %v1997 = vunpack.c.l.b16 %v1982
        %v1998 = vunpack.c.l.b16 %v1983
        %v1999 = vunpack.c.l.b16 %v1984
        %v2000 = vpack.c.b16 %v1997, %v1996
        %v2001 = vpack.c.b16 %v1999, %v1998
        %v2005 = vsel %vm639, %v1980, 0
        %2007 = vmatprep.subr.bf16.mxu0 0
        %2008 = vmatpush1.bf16.msra.mxu0 %v2000
        %2009 = vmatprep.subr.bf16.mxu0 0
        %2010 = vmatpush1.bf16.msra.mxu0 %v2001
        %2011 = vmatprep.subr.bf16.mxu0 0
        %2012 = vmatpush1.bf16.msra.mxu0 0
        %2013 = vmatprep.subr.bf16.mxu0 0
        %2014 = vmatpush1.bf16.msra.mxu0 0
        %2015 = vmatprep.subr.bf16.mxu0 0
        %2016 = vmatpush1.bf16.msra.mxu0 0
        %2017 = vmatprep.subr.bf16.mxu0 0
        %2018 = vmatpush1.bf16.msra.mxu0 0
        %2019 = vmatprep.subr.bf16.mxu0 0
        %2020 = vmatpush1.bf16.msra.mxu0 0
        %2021 = vmatprep.subr.bf16.mxu0 0
        %2022 = vmatpush1.bf16.msra.mxu0 0
        %2023 = vmatprep.subr.bf16.mxu0 0
        %2024 = vmatpush1.bf16.msra.mxu0 0
        %2025 = vmatprep.subr.bf16.mxu0 0
        %2026 = vmatpush1.bf16.msra.mxu0 0
        %2027 = vmatprep.subr.bf16.mxu0 0
        %2028 = vmatpush1.bf16.msra.mxu0 0
        %2029 = vmatprep.subr.bf16.mxu0 0
        %2030 = vmatpush1.bf16.msra.mxu0 0
        %2031 = vmatprep.subr.bf16.mxu0 0
        %2032 = vmatpush1.bf16.msra.mxu0 0
        %2033 = vmatprep.subr.bf16.mxu0 0
        %2034 = vmatpush1.bf16.msra.mxu0 0
        %2035 = vmatprep.subr.bf16.mxu0 0
        %2036 = vmatpush1.bf16.msra.mxu0 0
        %2037 = vmatprep.subr.bf16.mxu0 0
        %2038 = vmatpush1.bf16.msra.mxu0 0
        %2039 = vmatprep.mubr.bf16.mxu0 0
        %2040 = vmatmul.mubr.bf16.gmra.mrb[0].mxu0 %v2005
        %v2041 = vpop.f32.mrb[0].mxu0
        %v2042 = vadd.f32 %v1990, %v2041
        %v2043 = vpop.f32.mrb[0].mxu0
        %v2044 = vpop.f32.mrb[0].mxu0
        %v2045 = vpop.f32.mrb[0].mxu0
        %2046 = vdwg.mxu0
        %v2047 = vmax.f32 %v2042, 0.0
        %v2048 = vpack.c.bf16 %v2047, %v2047
        %v2049 = vld [vmem:[%s16] sm:$0xf]
        %v2050 = vld [vmem:[%s16 + $0x4] sm:$0xf]
        %v2051 = vld [vmem:[%s16 + $0x8] sm:$0xf]
        %v2052 = vld [vmem:[%s16 + $0xc] sm:$0xf]
        %v2053 = vld [vmem:[%s16 + $0x10] sm:$0xf]
        %v2054 = vld [vmem:[%s16 + $0x14] sm:$0xf]
        %v2055 = vld [vmem:[%s16 + $0x18] sm:$0xf]
        %v2056 = vld [vmem:[%s16 + $0x1c] sm:$0xf]
        %v2057 = vld [vmem:[%s17] sm:$0x1]
        %v2059 = vlaneseq
        %v2060 = vshrl.u32 %v2059, 7
        %v2061 = vsub.s32 0, %v2060
        %v2062 = vrot.slane %v2057, %v2061
        %v2072 = vunpack.c.l.b16 %v2049
        %v2073 = vunpack.c.l.b16 %v2050
        %v2074 = vunpack.c.l.b16 %v2051
        %v2075 = vunpack.c.l.b16 %v2052
        %v2076 = vunpack.c.l.b16 %v2053
        %v2077 = vunpack.c.l.b16 %v2054
        %v2078 = vunpack.c.l.b16 %v2055
        %v2079 = vunpack.c.l.b16 %v2056
        %v2080 = vpack.c.b16 %v2073, %v2072
        %v2081 = vpack.c.b16 %v2075, %v2074
        %v2082 = vpack.c.b16 %v2077, %v2076
        %v2083 = vpack.c.b16 %v2079, %v2078
        %vm2088 = vcmask 523264
        %v2090 = vsel %vm2088, %v2048, 0
        %2092 = vmatprep.subr.bf16.mxu0 0
        %2093 = vmatpush1.bf16.msra.mxu0 %v2080
        %2094 = vmatprep.subr.bf16.mxu0 0
        %2095 = vmatpush1.bf16.msra.mxu0 %v2081
        %2096 = vmatprep.subr.bf16.mxu0 0
        %2097 = vmatpush1.bf16.msra.mxu0 %v2082
        %2098 = vmatprep.subr.bf16.mxu0 0
        %2099 = vmatpush1.bf16.msra.mxu0 %v2083
        %2100 = vmatprep.subr.bf16.mxu0 0
        %2101 = vmatpush1.bf16.msra.mxu0 0
        %2102 = vmatprep.subr.bf16.mxu0 0
        %2103 = vmatpush1.bf16.msra.mxu0 0
        %2104 = vmatprep.subr.bf16.mxu0 0
        %2105 = vmatpush1.bf16.msra.mxu0 0
        %2106 = vmatprep.subr.bf16.mxu0 0
        %2107 = vmatpush1.bf16.msra.mxu0 0
        %2108 = vmatprep.subr.bf16.mxu0 0
        %2109 = vmatpush1.bf16.msra.mxu0 0
        %2110 = vmatprep.subr.bf16.mxu0 0
        %2111 = vmatpush1.bf16.msra.mxu0 0
        %2112 = vmatprep.subr.bf16.mxu0 0
        %2113 = vmatpush1.bf16.msra.mxu0 0
        %2114 = vmatprep.subr.bf16.mxu0 0
        %2115 = vmatpush1.bf16.msra.mxu0 0
        %2116 = vmatprep.subr.bf16.mxu0 0
        %2117 = vmatpush1.bf16.msra.mxu0 0
        %2118 = vmatprep.subr.bf16.mxu0 0
        %2119 = vmatpush1.bf16.msra.mxu0 0
        %2120 = vmatprep.subr.bf16.mxu0 0
        %2121 = vmatpush1.bf16.msra.mxu0 0
        %2122 = vmatprep.subr.bf16.mxu0 0
        %2123 = vmatpush1.bf16.msra.mxu0 0
        %2124 = vmatprep.mubr.bf16.mxu0 0
        %2125 = vmatmul.mubr.bf16.gmra.mrb[0].mxu0 %v2090
        %v2126 = vpop.f32.mrb[0].mxu0
        %v2127 = vadd.f32 %v2062, %v2126
        %v2128 = vpop.f32.mrb[0].mxu0
        %v2129 = vpop.f32.mrb[0].mxu0
        %v2130 = vpop.f32.mrb[0].mxu0
        %2131 = vdwg.mxu0
        %v2132 = vadd.f32 %v1950, %v2127
        %s2133 = scalar_lea.vmem %s2, 1
        %v2134 = vld [vmem:[%s2133] sm:$0x1]
        %s2135 = scalar_lea.vmem %s3, 1
        %v2136 = vld [vmem:[%s2135] sm:$0x1]
        %v2137 = vsel %vm639, %v2132, 0.0
        %2138 = vadd.xlane.f32.xlu0 %v2137
        %v2139 = vpop.xlane.xlu0 %2138
        %v2140 = vmul.f32 %v2139, %v643
        %v2141 = vsub.f32 %v2132, %v2140
        %v2142 = vmul.f32 %v2141, %v2141
        %v2143 = vsel %vm639, %v2142, 0.0
        %2144 = vadd.xlane.f32.xlu0 %v2143
        %v2145 = vpop.xlane.xlu0 %2144
        %v2146 = vmul.f32 %v2145, %v643
        %v2147 = vadd.f32 %v2146, 1e-05
        %v2148 = vrsqrt.pop %v2147
        %v2149 = vmul.f32 %v2141, %v2148
        %v2151 = vlaneseq
        %v2152 = vshrl.u32 %v2151, 7
        %v2153 = vsub.s32 0, %v2152
        %v2154 = vrot.slane %v2134, %v2153
        %v2156 = vmul.f32 %v2149, %v2154
        %v2158 = vlaneseq
        %v2159 = vshrl.u32 %v2158, 7
        %v2160 = vsub.s32 0, %v2159
        %v2161 = vrot.slane %v2136, %v2160
        %v2163 = vadd.f32 %v2156, %v2161
        %v2164 = vpack.c.bf16 %v2163, %v2163
        %s2165 = scalar_lea.vmem %s4, 16
        %v2166 = vld [vmem:[%s2165] sm:$0xf]
        %v2167 = vld [vmem:[%s2165 + $0x4] sm:$0xf]
        %v2168 = vld [vmem:[%s2165 + $0x8] sm:$0xf]
        %v2169 = vld [vmem:[%s2165 + $0xc] sm:$0xf]
        %s2170 = scalar_lea.vmem %s5, 1
        %v2171 = vld [vmem:[%s2170] sm:$0x1]
        %v2173 = vlaneseq
        %v2174 = vshrl.u32 %v2173, 7
        %v2175 = vsub.s32 0, %v2174
        %v2176 = vrot.slane %v2171, %v2175
        %v2182 = vunpack.c.l.b16 %v2166
        %v2183 = vunpack.c.l.b16 %v2167
        %v2184 = vunpack.c.l.b16 %v2168
        %v2185 = vunpack.c.l.b16 %v2169
        %v2186 = vpack.c.b16 %v2183, %v2182
        %v2187 = vpack.c.b16 %v2185, %v2184
        %v2191 = vsel %vm639, %v2164, 0
        %2193 = vmatprep.subr.bf16.mxu0 0
        %2194 = vmatpush1.bf16.msra.mxu0 %v2186
        %2195 = vmatprep.subr.bf16.mxu0 0
        %2196 = vmatpush1.bf16.msra.mxu0 %v2187
        %2197 = vmatprep.subr.bf16.mxu0 0
        %2198 = vmatpush1.bf16.msra.mxu0 0
        %2199 = vmatprep.subr.bf16.mxu0 0
        %2200 = vmatpush1.bf16.msra.mxu0 0
        %2201 = vmatprep.subr.bf16.mxu0 0
        %2202 = vmatpush1.bf16.msra.mxu0 0
        %2203 = vmatprep.subr.bf16.mxu0 0
        %2204 = vmatpush1.bf16.msra.mxu0 0
        %2205 = vmatprep.subr.bf16.mxu0 0
        %2206 = vmatpush1.bf16.msra.mxu0 0
        %2207 = vmatprep.subr.bf16.mxu0 0
        %2208 = vmatpush1.bf16.msra.mxu0 0
        %2209 = vmatprep.subr.bf16.mxu0 0
        %2210 = vmatpush1.bf16.msra.mxu0 0
        %2211 = vmatprep.subr.bf16.mxu0 0
        %2212 = vmatpush1.bf16.msra.mxu0 0
        %2213 = vmatprep.subr.bf16.mxu0 0
        %2214 = vmatpush1.bf16.msra.mxu0 0
        %2215 = vmatprep.subr.bf16.mxu0 0
        %2216 = vmatpush1.bf16.msra.mxu0 0
        %2217 = vmatprep.subr.bf16.mxu0 0
        %2218 = vmatpush1.bf16.msra.mxu0 0
        %2219 = vmatprep.subr.bf16.mxu0 0
        %2220 = vmatpush1.bf16.msra.mxu0 0
        %2221 = vmatprep.subr.bf16.mxu0 0
        %2222 = vmatpush1.bf16.msra.mxu0 0
        %2223 = vmatprep.subr.bf16.mxu0 0
        %2224 = vmatpush1.bf16.msra.mxu0 0
        %2225 = vmatprep.mubr.bf16.mxu0 0
        %2226 = vmatmul.mubr.bf16.gmra.mrb[0].mxu0 %v2191
        %v2227 = vpop.f32.mrb[0].mxu0
        %v2228 = vadd.f32 %v2176, %v2227
        %v2229 = vpop.f32.mrb[0].mxu0
        %v2230 = vpop.f32.mrb[0].mxu0
        %v2231 = vpop.f32.mrb[0].mxu0
        %2232 = vdwg.mxu0
        %s2233 = scalar_lea.vmem %s6, 16
        %v2234 = vld [vmem:[%s2233] sm:$0xf]
        %v2235 = vld [vmem:[%s2233 + $0x4] sm:$0xf]
        %v2236 = vld [vmem:[%s2233 + $0x8] sm:$0xf]
        %v2237 = vld [vmem:[%s2233 + $0xc] sm:$0xf]
        %s2238 = scalar_lea.vmem %s7, 1
        %v2239 = vld [vmem:[%s2238] sm:$0x1]
        %v2241 = vlaneseq
        %v2242 = vshrl.u32 %v2241, 7
        %v2243 = vsub.s32 0, %v2242
        %v2244 = vrot.slane %v2239, %v2243
        %v2250 = vunpack.c.l.b16 %v2234
        %v2251 = vunpack.c.l.b16 %v2235
        %v2252 = vunpack.c.l.b16 %v2236
        %v2253 = vunpack.c.l.b16 %v2237
        %v2254 = vpack.c.b16 %v2251, %v2250
        %v2255 = vpack.c.b16 %v2253, %v2252
        %2258 = vmatprep.subr.bf16.mxu0 0
        %2259 = vmatpush1.bf16.msra.mxu0 %v2254
        %2260 = vmatprep.subr.bf16.mxu0 0
        %2261 = vmatpush1.bf16.msra.mxu0 %v2255
        %2262 = vmatprep.subr.bf16.mxu0 0
        %2263 = vmatpush1.bf16.msra.mxu0 0
        %2264 = vmatprep.subr.bf16.mxu0 0
        %2265 = vmatpush1.bf16.msra.mxu0 0
        %2266 = vmatprep.subr.bf16.mxu0 0
        %2267 = vmatpush1.bf16.msra.mxu0 0
        %2268 = vmatprep.subr.bf16.mxu0 0
        %2269 = vmatpush1.bf16.msra.mxu0 0
        %2270 = vmatprep.subr.bf16.mxu0 0
        %2271 = vmatpush1.bf16.msra.mxu0 0
        %2272 = vmatprep.subr.bf16.mxu0 0
        %2273 = vmatpush1.bf16.msra.mxu0 0
        %2274 = vmatprep.subr.bf16.mxu0 0
        %2275 = vmatpush1.bf16.msra.mxu0 0
        %2276 = vmatprep.subr.bf16.mxu0 0
        %2277 = vmatpush1.bf16.msra.mxu0 0
        %2278 = vmatprep.subr.bf16.mxu0 0
        %2279 = vmatpush1.bf16.msra.mxu0 0
        %2280 = vmatprep.subr.bf16.mxu0 0
        %2281 = vmatpush1.bf16.msra.mxu0 0
        %2282 = vmatprep.subr.bf16.mxu0 0
        %2283 = vmatpush1.bf16.msra.mxu0 0
        %2284 = vmatprep.subr.bf16.mxu0 0
        %2285 = vmatpush1.bf16.msra.mxu0 0
        %2286 = vmatprep.subr.bf16.mxu0 0
        %2287 = vmatpush1.bf16.msra.mxu0 0
        %2288 = vmatprep.subr.bf16.mxu0 0
        %2289 = vmatpush1.bf16.msra.mxu0 0
        %2290 = vmatprep.mubr.bf16.mxu0 0
        %2291 = vmatmul.mubr.bf16.gmra.mrb[0].mxu0 %v2191
        %v2292 = vpop.f32.mrb[0].mxu0
        %v2293 = vadd.f32 %v2244, %v2292
        %v2294 = vpop.f32.mrb[0].mxu0
        %v2295 = vpop.f32.mrb[0].mxu0
        %v2296 = vpop.f32.mrb[0].mxu0
        %2297 = vdwg.mxu0
        %s2298 = scalar_lea.vmem %s8, 16
        %v2299 = vld [vmem:[%s2298] sm:$0xf]
        %v2300 = vld [vmem:[%s2298 + $0x4] sm:$0xf]
        %v2301 = vld [vmem:[%s2298 + $0x8] sm:$0xf]
        %v2302 = vld [vmem:[%s2298 + $0xc] sm:$0xf]
        %s2303 = scalar_lea.vmem %s9, 1
        %v2304 = vld [vmem:[%s2303] sm:$0x1]
        %v2306 = vlaneseq
        %v2307 = vshrl.u32 %v2306, 7
        %v2308 = vsub.s32 0, %v2307
        %v2309 = vrot.slane %v2304, %v2308
        %v2315 = vunpack.c.l.b16 %v2299
        %v2316 = vunpack.c.l.b16 %v2300
        %v2317 = vunpack.c.l.b16 %v2301
        %v2318 = vunpack.c.l.b16 %v2302
        %v2319 = vpack.c.b16 %v2316, %v2315
        %v2320 = vpack.c.b16 %v2318, %v2317
        %2323 = vmatprep.subr.bf16.mxu0 0
        %2324 = vmatpush1.bf16.msra.mxu0 %v2319
        %2325 = vmatprep.subr.bf16.mxu0 0
        %2326 = vmatpush1.bf16.msra.mxu0 %v2320
        %2327 = vmatprep.subr.bf16.mxu0 0
        %2328 = vmatpush1.bf16.msra.mxu0 0
        %2329 = vmatprep.subr.bf16.mxu0 0
        %2330 = vmatpush1.bf16.msra.mxu0 0
        %2331 = vmatprep.subr.bf16.mxu0 0
        %2332 = vmatpush1.bf16.msra.mxu0 0
        %2333 = vmatprep.subr.bf16.mxu0 0
        %2334 = vmatpush1.bf16.msra.mxu0 0
        %2335 = vmatprep.subr.bf16.mxu0 0
        %2336 = vmatpush1.bf16.msra.mxu0 0
        %2337 = vmatprep.subr.bf16.mxu0 0
        %2338 = vmatpush1.bf16.msra.mxu0 0
        %2339 = vmatprep.subr.bf16.mxu0 0
        %2340 = vmatpush1.bf16.msra.mxu0 0
        %2341 = vmatprep.subr.bf16.mxu0 0
        %2342 = vmatpush1.bf16.msra.mxu0 0
        %2343 = vmatprep.subr.bf16.mxu0 0
        %2344 = vmatpush1.bf16.msra.mxu0 0
        %2345 = vmatprep.subr.bf16.mxu0 0
        %2346 = vmatpush1.bf16.msra.mxu0 0
        %2347 = vmatprep.subr.bf16.mxu0 0
        %2348 = vmatpush1.bf16.msra.mxu0 0
        %2349 = vmatprep.subr.bf16.mxu0 0
        %2350 = vmatpush1.bf16.msra.mxu0 0
        %2351 = vmatprep.subr.bf16.mxu0 0
        %2352 = vmatpush1.bf16.msra.mxu0 0
        %2353 = vmatprep.subr.bf16.mxu0 0
        %2354 = vmatpush1.bf16.msra.mxu0 0
        %2355 = vmatprep.mubr.bf16.mxu0 0
        %2356 = vmatmul.mubr.bf16.gmra.mrb[0].mxu0 %v2191
        %v2357 = vpop.f32.mrb[0].mxu0
        %v2358 = vadd.f32 %v2309, %v2357
        %v2359 = vpop.f32.mrb[0].mxu0
        %v2360 = vpop.f32.mrb[0].mxu0
        %v2361 = vpop.f32.mrb[0].mxu0
        %2362 = vdwg.mxu0
        %v2363 = vmul.f32 %v2228, 0.35355338
        %2365 = vrot.lane.b32.xlu0 %v2363, 120
        %v2366 = vpop.permute.xlu0 %2365
        %2368 = vrot.lane.b32.xlu0 %v2363, 112
        %v2369 = vpop.permute.xlu0 %2368
        %2371 = vrot.lane.b32.xlu0 %v2363, 104
        %v2372 = vpop.permute.xlu0 %2371
        %v2374 = vcombine.low %v2363, %v2369
        %v2375 = vcombine.high %v2363, %v2369
        %v2377 = vunpack.c.l.s4 1983009808
        %v2378 = vunpack.c.0.s8 %v2377
        %v2379 = vlaneseq
        %v2380 = vshrl.u32 %v2379, 7
        %v2381 = vsub.s32 %v2378, %v2380
        %v2382 = vrot.slane %v2374, %v2381
        %v2384 = vunpack.c.l.s4 1983009808
        %v2385 = vunpack.c.0.s8 %v2384
        %v2386 = vlaneseq
        %v2387 = vshrl.u32 %v2386, 7
        %v2388 = vsub.s32 %v2385, %v2387
        %v2389 = vrot.slane %v2375, %v2388
        %v2390 = vcombine.low %v2366, %v2372
        %v2391 = vcombine.high %v2366, %v2372
        %v2393 = vunpack.c.l.s4 1983009808
        %v2394 = vunpack.c.0.s8 %v2393
        %v2395 = vlaneseq
        %v2396 = vshrl.u32 %v2395, 7
        %v2397 = vsub.s32 %v2394, %v2396
        %v2398 = vrot.slane %v2390, %v2397
        %v2400 = vunpack.c.l.s4 1983009808
        %v2401 = vunpack.c.0.s8 %v2400
        %v2402 = vlaneseq
        %v2403 = vshrl.u32 %v2402, 7
        %v2404 = vsub.s32 %v2401, %v2403
        %v2405 = vrot.slane %v2391, %v2404
        %v2406 = vcombine.low %v2382, %v2398
        %v2407 = vcombine.high %v2382, %v2398
        %v2409 = vunpack.c.l.s4 1934713408
        %v2410 = vunpack.c.0.s8 %v2409
        %v2411 = vlaneseq
        %v2412 = vshrl.u32 %v2411, 7
        %v2413 = vsub.s32 %v2410, %v2412
        %v2414 = vrot.slane %v2406, %v2413
        %v2416 = vunpack.c.l.s4 1934713408
        %v2417 = vunpack.c.0.s8 %v2416
        %v2418 = vlaneseq
        %v2419 = vshrl.u32 %v2418, 7
        %v2420 = vsub.s32 %v2417, %v2419
        %v2421 = vrot.slane %v2407, %v2420
        %v2422 = vcombine.low %v2389, %v2405
        %v2423 = vcombine.high %v2389, %v2405
        %v2425 = vunpack.c.l.s4 1934713408
        %v2426 = vunpack.c.0.s8 %v2425
        %v2427 = vlaneseq
        %v2428 = vshrl.u32 %v2427, 7
        %v2429 = vsub.s32 %v2426, %v2428
        %v2430 = vrot.slane %v2422, %v2429
        %v2432 = vunpack.c.l.s4 1934713408
        %v2433 = vunpack.c.0.s8 %v2432
        %v2434 = vlaneseq
        %v2435 = vshrl.u32 %v2434, 7
        %v2436 = vsub.s32 %v2433, %v2435
        %v2437 = vrot.slane %v2423, %v2436
        %v2438 = vcombine.high %v2414, 0.0
        %v2439 = vcombine.high %v2421, 0.0
        %v2440 = vcombine.high %v2430, 0.0
        %v2441 = vcombine.high %v2437, 0.0
        %v2442 = vcombine.low %v2414, %v2421
        %v2444 = vunpack.c.l.s4 1983009808
        %v2445 = vunpack.c.0.s8 %v2444
        %v2446 = vlaneseq
        %v2447 = vshrl.u32 %v2446, 7
        %v2448 = vsub.s32 %v2445, %v2447
        %v2449 = vrot.slane %v2442, %v2448
        %v2450 = vcombine.low %v2438, %v2439
        %v2452 = vunpack.c.l.s4 1983009808
        %v2453 = vunpack.c.0.s8 %v2452
        %v2454 = vlaneseq
        %v2455 = vshrl.u32 %v2454, 7
        %v2456 = vsub.s32 %v2453, %v2455
        %v2457 = vrot.slane %v2450, %v2456
        %v2458 = vcombine.low %v2430, %v2437
        %v2460 = vunpack.c.l.s4 1983009808
        %v2461 = vunpack.c.0.s8 %v2460
        %v2462 = vlaneseq
        %v2463 = vshrl.u32 %v2462, 7
        %v2464 = vsub.s32 %v2461, %v2463
        %v2465 = vrot.slane %v2458, %v2464
        %v2466 = vcombine.low %v2440, %v2441
        %v2468 = vunpack.c.l.s4 1983009808
        %v2469 = vunpack.c.0.s8 %v2468
        %v2470 = vlaneseq
        %v2471 = vshrl.u32 %v2470, 7
        %v2472 = vsub.s32 %v2469, %v2471
        %v2473 = vrot.slane %v2466, %v2472
        %v2474 = vcombine.low %v2449, %v2457
        %v2475 = vcombine.high %v2449, %v2457
        %v2477 = vunpack.c.l.s4 1934713408
        %v2478 = vunpack.c.0.s8 %v2477
        %v2479 = vlaneseq
        %v2480 = vshrl.u32 %v2479, 7
        %v2481 = vsub.s32 %v2478, %v2480
        %v2482 = vrot.slane %v2474, %v2481
        %v2484 = vunpack.c.l.s4 1934713408
        %v2485 = vunpack.c.0.s8 %v2484
        %v2486 = vlaneseq
        %v2487 = vshrl.u32 %v2486, 7
        %v2488 = vsub.s32 %v2485, %v2487
        %v2489 = vrot.slane %v2475, %v2488
        %v2490 = vcombine.low %v2465, %v2473
        %v2491 = vcombine.high %v2465, %v2473
        %v2493 = vunpack.c.l.s4 1934713408
        %v2494 = vunpack.c.0.s8 %v2493
        %v2495 = vlaneseq
        %v2496 = vshrl.u32 %v2495, 7
        %v2497 = vsub.s32 %v2494, %v2496
        %v2498 = vrot.slane %v2490, %v2497
        %v2500 = vunpack.c.l.s4 1934713408
        %v2501 = vunpack.c.0.s8 %v2500
        %v2502 = vlaneseq
        %v2503 = vshrl.u32 %v2502, 7
        %v2504 = vsub.s32 %v2501, %v2503
        %v2505 = vrot.slane %v2491, %v2504
        %v2506 = vcombine.low %v2482, %v2498
        %v2507 = vcombine.high %v2482, %v2498
        %v2508 = vcombine.low %v2489, %v2505
        %v2509 = vcombine.high %v2489, %v2505
        %v2510 = vpack.c.bf16 %v2506, %v2506
        %v2511 = vpack.c.bf16 %v2507, %v2507
        %v2512 = vpack.c.bf16 %v2508, %v2508
        %v2513 = vpack.c.bf16 %v2509, %v2509
        %2515 = vrot.lane.b32.xlu0 %v2293, 120
        %v2516 = vpop.permute.xlu0 %2515
        %2518 = vrot.lane.b32.xlu0 %v2293, 112
        %v2519 = vpop.permute.xlu0 %2518
        %2521 = vrot.lane.b32.xlu0 %v2293, 104
        %v2522 = vpop.permute.xlu0 %2521
        %v2524 = vcombine.low %v2293, %v2519
        %v2525 = vcombine.high %v2293, %v2519
        %v2527 = vunpack.c.l.s4 1983009808
        %v2528 = vunpack.c.0.s8 %v2527
        %v2529 = vlaneseq
        %v2530 = vshrl.u32 %v2529, 7
        %v2531 = vsub.s32 %v2528, %v2530
        %v2532 = vrot.slane %v2524, %v2531
        %v2534 = vunpack.c.l.s4 1983009808
        %v2535 = vunpack.c.0.s8 %v2534
        %v2536 = vlaneseq
        %v2537 = vshrl.u32 %v2536, 7
        %v2538 = vsub.s32 %v2535, %v2537
        %v2539 = vrot.slane %v2525, %v2538
        %v2540 = vcombine.low %v2516, %v2522
        %v2541 = vcombine.high %v2516, %v2522
        %v2543 = vunpack.c.l.s4 1983009808
        %v2544 = vunpack.c.0.s8 %v2543
        %v2545 = vlaneseq
        %v2546 = vshrl.u32 %v2545, 7
        %v2547 = vsub.s32 %v2544, %v2546
        %v2548 = vrot.slane %v2540, %v2547
        %v2550 = vunpack.c.l.s4 1983009808
        %v2551 = vunpack.c.0.s8 %v2550
        %v2552 = vlaneseq
        %v2553 = vshrl.u32 %v2552, 7
        %v2554 = vsub.s32 %v2551, %v2553
        %v2555 = vrot.slane %v2541, %v2554
        %v2556 = vcombine.low %v2532, %v2548
        %v2557 = vcombine.high %v2532, %v2548
        %v2559 = vunpack.c.l.s4 1934713408
        %v2560 = vunpack.c.0.s8 %v2559
        %v2561 = vlaneseq
        %v2562 = vshrl.u32 %v2561, 7
        %v2563 = vsub.s32 %v2560, %v2562
        %v2564 = vrot.slane %v2556, %v2563
        %v2566 = vunpack.c.l.s4 1934713408
        %v2567 = vunpack.c.0.s8 %v2566
        %v2568 = vlaneseq
        %v2569 = vshrl.u32 %v2568, 7
        %v2570 = vsub.s32 %v2567, %v2569
        %v2571 = vrot.slane %v2557, %v2570
        %v2572 = vcombine.low %v2539, %v2555
        %v2573 = vcombine.high %v2539, %v2555
        %v2575 = vunpack.c.l.s4 1934713408
        %v2576 = vunpack.c.0.s8 %v2575
        %v2577 = vlaneseq
        %v2578 = vshrl.u32 %v2577, 7
        %v2579 = vsub.s32 %v2576, %v2578
        %v2580 = vrot.slane %v2572, %v2579
        %v2582 = vunpack.c.l.s4 1934713408
        %v2583 = vunpack.c.0.s8 %v2582
        %v2584 = vlaneseq
        %v2585 = vshrl.u32 %v2584, 7
        %v2586 = vsub.s32 %v2583, %v2585
        %v2587 = vrot.slane %v2573, %v2586
        %v2588 = vcombine.high %v2564, 0.0
        %v2589 = vcombine.high %v2571, 0.0
        %v2590 = vcombine.high %v2580, 0.0
        %v2591 = vcombine.high %v2587, 0.0
        %v2592 = vcombine.low %v2564, %v2571
        %v2594 = vunpack.c.l.s4 1983009808
        %v2595 = vunpack.c.0.s8 %v2594
        %v2596 = vlaneseq
        %v2597 = vshrl.u32 %v2596, 7
        %v2598 = vsub.s32 %v2595, %v2597
        %v2599 = vrot.slane %v2592, %v2598
        %v2600 = vcombine.low %v2588, %v2589
        %v2602 = vunpack.c.l.s4 1983009808
        %v2603 = vunpack.c.0.s8 %v2602
        %v2604 = vlaneseq
        %v2605 = vshrl.u32 %v2604, 7
        %v2606 = vsub.s32 %v2603, %v2605
        %v2607 = vrot.slane %v2600, %v2606
        %v2608 = vcombine.low %v2580, %v2587
        %v2610 = vunpack.c.l.s4 1983009808
        %v2611 = vunpack.c.0.s8 %v2610
        %v2612 = vlaneseq
        %v2613 = vshrl.u32 %v2612, 7
        %v2614 = vsub.s32 %v2611, %v2613
        %v2615 = vrot.slane %v2608, %v2614
        %v2616 = vcombine.low %v2590, %v2591
        %v2618 = vunpack.c.l.s4 1983009808
        %v2619 = vunpack.c.0.s8 %v2618
        %v2620 = vlaneseq
        %v2621 = vshrl.u32 %v2620, 7
        %v2622 = vsub.s32 %v2619, %v2621
        %v2623 = vrot.slane %v2616, %v2622
        %v2624 = vcombine.low %v2599, %v2607
        %v2625 = vcombine.high %v2599, %v2607
        %v2627 = vunpack.c.l.s4 1934713408
        %v2628 = vunpack.c.0.s8 %v2627
        %v2629 = vlaneseq
        %v2630 = vshrl.u32 %v2629, 7
        %v2631 = vsub.s32 %v2628, %v2630
        %v2632 = vrot.slane %v2624, %v2631
        %v2634 = vunpack.c.l.s4 1934713408
        %v2635 = vunpack.c.0.s8 %v2634
        %v2636 = vlaneseq
        %v2637 = vshrl.u32 %v2636, 7
        %v2638 = vsub.s32 %v2635, %v2637
        %v2639 = vrot.slane %v2625, %v2638
        %v2640 = vcombine.low %v2615, %v2623
        %v2641 = vcombine.high %v2615, %v2623
        %v2643 = vunpack.c.l.s4 1934713408
        %v2644 = vunpack.c.0.s8 %v2643
        %v2645 = vlaneseq
        %v2646 = vshrl.u32 %v2645, 7
        %v2647 = vsub.s32 %v2644, %v2646
        %v2648 = vrot.slane %v2640, %v2647
        %v2650 = vunpack.c.l.s4 1934713408
        %v2651 = vunpack.c.0.s8 %v2650
        %v2652 = vlaneseq
        %v2653 = vshrl.u32 %v2652, 7
        %v2654 = vsub.s32 %v2651, %v2653
        %v2655 = vrot.slane %v2641, %v2654
        %v2656 = vcombine.low %v2632, %v2648
        %v2657 = vcombine.high %v2632, %v2648
        %v2658 = vcombine.low %v2639, %v2655
        %v2659 = vcombine.high %v2639, %v2655
        %v2660 = vpack.c.bf16 %v2656, %v2656
        %v2661 = vpack.c.bf16 %v2657, %v2657
        %v2662 = vpack.c.bf16 %v2658, %v2658
        %v2663 = vpack.c.bf16 %v2659, %v2659
        %2665 = vrot.lane.b32.xlu0 %v2358, 120
        %v2666 = vpop.permute.xlu0 %2665
        %2668 = vrot.lane.b32.xlu0 %v2358, 112
        %v2669 = vpop.permute.xlu0 %2668
        %2671 = vrot.lane.b32.xlu0 %v2358, 104
        %v2672 = vpop.permute.xlu0 %2671
        %v2674 = vcombine.low %v2358, %v2669
        %v2675 = vcombine.high %v2358, %v2669
        %v2677 = vunpack.c.l.s4 1983009808
        %v2678 = vunpack.c.0.s8 %v2677
        %v2679 = vlaneseq
        %v2680 = vshrl.u32 %v2679, 7
        %v2681 = vsub.s32 %v2678, %v2680
        %v2682 = vrot.slane %v2674, %v2681
        %v2684 = vunpack.c.l.s4 1983009808
        %v2685 = vunpack.c.0.s8 %v2684
        %v2686 = vlaneseq
        %v2687 = vshrl.u32 %v2686, 7
        %v2688 = vsub.s32 %v2685, %v2687
        %v2689 = vrot.slane %v2675, %v2688
        %v2690 = vcombine.low %v2666, %v2672
        %v2691 = vcombine.high %v2666, %v2672
        %v2693 = vunpack.c.l.s4 1983009808
        %v2694 = vunpack.c.0.s8 %v2693
        %v2695 = vlaneseq
        %v2696 = vshrl.u32 %v2695, 7
        %v2697 = vsub.s32 %v2694, %v2696
        %v2698 = vrot.slane %v2690, %v2697
        %v2700 = vunpack.c.l.s4 1983009808
        %v2701 = vunpack.c.0.s8 %v2700
        %v2702 = vlaneseq
        %v2703 = vshrl.u32 %v2702, 7
        %v2704 = vsub.s32 %v2701, %v2703
        %v2705 = vrot.slane %v2691, %v2704
        %v2706 = vcombine.low %v2682, %v2698
        %v2707 = vcombine.high %v2682, %v2698
        %v2709 = vunpack.c.l.s4 1934713408
        %v2710 = vunpack.c.0.s8 %v2709
        %v2711 = vlaneseq
        %v2712 = vshrl.u32 %v2711, 7
        %v2713 = vsub.s32 %v2710, %v2712
        %v2714 = vrot.slane %v2706, %v2713
        %v2716 = vunpack.c.l.s4 1934713408
        %v2717 = vunpack.c.0.s8 %v2716
        %v2718 = vlaneseq
        %v2719 = vshrl.u32 %v2718, 7
        %v2720 = vsub.s32 %v2717, %v2719
        %v2721 = vrot.slane %v2707, %v2720
        %v2722 = vcombine.low %v2689, %v2705
        %v2723 = vcombine.high %v2689, %v2705
        %v2725 = vunpack.c.l.s4 1934713408
        %v2726 = vunpack.c.0.s8 %v2725
        %v2727 = vlaneseq
        %v2728 = vshrl.u32 %v2727, 7
        %v2729 = vsub.s32 %v2726, %v2728
        %v2730 = vrot.slane %v2722, %v2729
        %v2732 = vunpack.c.l.s4 1934713408
        %v2733 = vunpack.c.0.s8 %v2732
        %v2734 = vlaneseq
        %v2735 = vshrl.u32 %v2734, 7
        %v2736 = vsub.s32 %v2733, %v2735
        %v2737 = vrot.slane %v2723, %v2736
        %v2738 = vcombine.high %v2714, 0.0
        %v2739 = vcombine.high %v2721, 0.0
        %v2740 = vcombine.high %v2730, 0.0
        %v2741 = vcombine.high %v2737, 0.0
        %v2742 = vcombine.low %v2714, %v2721
        %v2744 = vunpack.c.l.s4 1983009808
        %v2745 = vunpack.c.0.s8 %v2744
        %v2746 = vlaneseq
        %v2747 = vshrl.u32 %v2746, 7
        %v2748 = vsub.s32 %v2745, %v2747
        %v2749 = vrot.slane %v2742, %v2748
        %v2750 = vcombine.low %v2738, %v2739
        %v2752 = vunpack.c.l.s4 1983009808
        %v2753 = vunpack.c.0.s8 %v2752
        %v2754 = vlaneseq
        %v2755 = vshrl.u32 %v2754, 7
        %v2756 = vsub.s32 %v2753, %v2755
        %v2757 = vrot.slane %v2750, %v2756
        %v2758 = vcombine.low %v2730, %v2737
        %v2760 = vunpack.c.l.s4 1983009808
        %v2761 = vunpack.c.0.s8 %v2760
        %v2762 = vlaneseq
        %v2763 = vshrl.u32 %v2762, 7
        %v2764 = vsub.s32 %v2761, %v2763
        %v2765 = vrot.slane %v2758, %v2764
        %v2766 = vcombine.low %v2740, %v2741
        %v2768 = vunpack.c.l.s4 1983009808
        %v2769 = vunpack.c.0.s8 %v2768
        %v2770 = vlaneseq
        %v2771 = vshrl.u32 %v2770, 7
        %v2772 = vsub.s32 %v2769, %v2771
        %v2773 = vrot.slane %v2766, %v2772
        %v2774 = vcombine.low %v2749, %v2757
        %v2775 = vcombine.high %v2749, %v2757
        %v2777 = vunpack.c.l.s4 1934713408
        %v2778 = vunpack.c.0.s8 %v2777
        %v2779 = vlaneseq
        %v2780 = vshrl.u32 %v2779, 7
        %v2781 = vsub.s32 %v2778, %v2780
        %v2782 = vrot.slane %v2774, %v2781
        %v2784 = vunpack.c.l.s4 1934713408
        %v2785 = vunpack.c.0.s8 %v2784
        %v2786 = vlaneseq
        %v2787 = vshrl.u32 %v2786, 7
        %v2788 = vsub.s32 %v2785, %v2787
        %v2789 = vrot.slane %v2775, %v2788
        %v2790 = vcombine.low %v2765, %v2773
        %v2791 = vcombine.high %v2765, %v2773
        %v2793 = vunpack.c.l.s4 1934713408
        %v2794 = vunpack.c.0.s8 %v2793
        %v2795 = vlaneseq
        %v2796 = vshrl.u32 %v2795, 7
        %v2797 = vsub.s32 %v2794, %v2796
        %v2798 = vrot.slane %v2790, %v2797
        %v2800 = vunpack.c.l.s4 1934713408
        %v2801 = vunpack.c.0.s8 %v2800
        %v2802 = vlaneseq
        %v2803 = vshrl.u32 %v2802, 7
        %v2804 = vsub.s32 %v2801, %v2803
        %v2805 = vrot.slane %v2791, %v2804
        %v2806 = vcombine.low %v2782, %v2798
        %v2807 = vcombine.high %v2782, %v2798
        %v2808 = vcombine.low %v2789, %v2805
        %v2809 = vcombine.high %v2789, %v2805
        %v2810 = vpack.c.bf16 %v2806, %v2806
        %v2811 = vpack.c.bf16 %v2807, %v2807
        %v2812 = vpack.c.bf16 %v2808, %v2808
        %v2813 = vpack.c.bf16 %v2809, %v2809
        %v2815 = vsel %vm1312, %v2510, 0
        %v2818 = vsel %vm1312, %v2660, 0
        %2820 = vmatprep.subr.bf16.mxu0 0
        %2821 = vmatpush1.bf16.xpose.msra.mxu0 %v2818
        %2822 = vmatprep.subr.bf16.mxu0 0
        %2823 = vmatpush1.bf16.xpose.msra.mxu0 0
        %2824 = vmatprep.subr.bf16.mxu0 0
        %2825 = vmatpush1.bf16.xpose.msra.mxu0 0
        %2826 = vmatprep.subr.bf16.mxu0 0
        %2827 = vmatpush1.bf16.xpose.msra.mxu0 0
        %2828 = vmatprep.subr.bf16.mxu0 0
        %2829 = vmatpush1.bf16.xpose.msra.mxu0 0
        %2830 = vmatprep.subr.bf16.mxu0 0
        %2831 = vmatpush1.bf16.xpose.msra.mxu0 0
        %2832 = vmatprep.subr.bf16.mxu0 0
        %2833 = vmatpush1.bf16.xpose.msra.mxu0 0
        %2834 = vmatprep.subr.bf16.mxu0 0
        %2835 = vmatpush1.bf16.xpose.msra.mxu0 0
        %2836 = vmatprep.subr.bf16.mxu0 0
        %2837 = vmatpush1.bf16.xpose.msra.mxu0 0
        %2838 = vmatprep.subr.bf16.mxu0 0
        %2839 = vmatpush1.bf16.xpose.msra.mxu0 0
        %2840 = vmatprep.subr.bf16.mxu0 0
        %2841 = vmatpush1.bf16.xpose.msra.mxu0 0
        %2842 = vmatprep.subr.bf16.mxu0 0
        %2843 = vmatpush1.bf16.xpose.msra.mxu0 0
        %2844 = vmatprep.subr.bf16.mxu0 0
        %2845 = vmatpush1.bf16.xpose.msra.mxu0 0
        %2846 = vmatprep.subr.bf16.mxu0 0
        %2847 = vmatpush1.bf16.xpose.msra.mxu0 0
        %2848 = vmatprep.subr.bf16.mxu0 0
        %2849 = vmatpush1.bf16.xpose.msra.mxu0 0
        %2850 = vmatprep.subr.bf16.mxu0 0
        %2851 = vmatpush1.bf16.xpose.msra.mxu0 0
        %2852 = vmatprep.mubr.bf16.mxu0 0
        %2853 = vmatmul.mubr.bf16.gmra.mrb[0].mxu0 %v2815
        %v2854 = vpop.f32.mrb[0].mxu0
        %v2855 = vadd.f32 0.0, %v2854
        %v2856 = vpop.f32.mrb[0].mxu0
        %v2857 = vpop.f32.mrb[0].mxu0
        %v2858 = vpop.f32.mrb[0].mxu0
        %2859 = vdwg.mxu0
        %v2861 = vsel %vm1312, %v2511, 0
        %v2864 = vsel %vm1312, %v2661, 0
        %2866 = vmatprep.subr.bf16.mxu0 0
        %2867 = vmatpush1.bf16.xpose.msra.mxu0 %v2864
        %2868 = vmatprep.subr.bf16.mxu0 0
        %2869 = vmatpush1.bf16.xpose.msra.mxu0 0
        %2870 = vmatprep.subr.bf16.mxu0 0
        %2871 = vmatpush1.bf16.xpose.msra.mxu0 0
        %2872 = vmatprep.subr.bf16.mxu0 0
        %2873 = vmatpush1.bf16.xpose.msra.mxu0 0
        %2874 = vmatprep.subr.bf16.mxu0 0
        %2875 = vmatpush1.bf16.xpose.msra.mxu0 0
        %2876 = vmatprep.subr.bf16.mxu0 0
        %2877 = vmatpush1.bf16.xpose.msra.mxu0 0
        %2878 = vmatprep.subr.bf16.mxu0 0
        %2879 = vmatpush1.bf16.xpose.msra.mxu0 0
        %2880 = vmatprep.subr.bf16.mxu0 0
        %2881 = vmatpush1.bf16.xpose.msra.mxu0 0
        %2882 = vmatprep.subr.bf16.mxu0 0
        %2883 = vmatpush1.bf16.xpose.msra.mxu0 0
        %2884 = vmatprep.subr.bf16.mxu0 0
        %2885 = vmatpush1.bf16.xpose.msra.mxu0 0
        %2886 = vmatprep.subr.bf16.mxu0 0
        %2887 = vmatpush1.bf16.xpose.msra.mxu0 0
        %2888 = vmatprep.subr.bf16.mxu0 0
        %2889 = vmatpush1.bf16.xpose.msra.mxu0 0
        %2890 = vmatprep.subr.bf16.mxu0 0
        %2891 = vmatpush1.bf16.xpose.msra.mxu0 0
        %2892 = vmatprep.subr.bf16.mxu0 0
        %2893 = vmatpush1.bf16.xpose.msra.mxu0 0
        %2894 = vmatprep.subr.bf16.mxu0 0
        %2895 = vmatpush1.bf16.xpose.msra.mxu0 0
        %2896 = vmatprep.subr.bf16.mxu0 0
        %2897 = vmatpush1.bf16.xpose.msra.mxu0 0
        %2898 = vmatprep.mubr.bf16.mxu0 0
        %2899 = vmatmul.mubr.bf16.gmra.mrb[0].mxu0 %v2861
        %v2900 = vpop.f32.mrb[0].mxu0
        %v2901 = vadd.f32 0.0, %v2900
        %v2902 = vpop.f32.mrb[0].mxu0
        %v2903 = vpop.f32.mrb[0].mxu0
        %v2904 = vpop.f32.mrb[0].mxu0
        %2905 = vdwg.mxu0
        %v2907 = vsel %vm1312, %v2512, 0
        %v2910 = vsel %vm1312, %v2662, 0
        %2912 = vmatprep.subr.bf16.mxu0 0
        %2913 = vmatpush1.bf16.xpose.msra.mxu0 %v2910
        %2914 = vmatprep.subr.bf16.mxu0 0
        %2915 = vmatpush1.bf16.xpose.msra.mxu0 0
        %2916 = vmatprep.subr.bf16.mxu0 0
        %2917 = vmatpush1.bf16.xpose.msra.mxu0 0
        %2918 = vmatprep.subr.bf16.mxu0 0
        %2919 = vmatpush1.bf16.xpose.msra.mxu0 0
        %2920 = vmatprep.subr.bf16.mxu0 0
        %2921 = vmatpush1.bf16.xpose.msra.mxu0 0
        %2922 = vmatprep.subr.bf16.mxu0 0
        %2923 = vmatpush1.bf16.xpose.msra.mxu0 0
        %2924 = vmatprep.subr.bf16.mxu0 0
        %2925 = vmatpush1.bf16.xpose.msra.mxu0 0
        %2926 = vmatprep.subr.bf16.mxu0 0
        %2927 = vmatpush1.bf16.xpose.msra.mxu0 0
        %2928 = vmatprep.subr.bf16.mxu0 0
        %2929 = vmatpush1.bf16.xpose.msra.mxu0 0
        %2930 = vmatprep.subr.bf16.mxu0 0
        %2931 = vmatpush1.bf16.xpose.msra.mxu0 0
        %2932 = vmatprep.subr.bf16.mxu0 0
        %2933 = vmatpush1.bf16.xpose.msra.mxu0 0
        %2934 = vmatprep.subr.bf16.mxu0 0
        %2935 = vmatpush1.bf16.xpose.msra.mxu0 0
        %2936 = vmatprep.subr.bf16.mxu0 0
        %2937 = vmatpush1.bf16.xpose.msra.mxu0 0
        %2938 = vmatprep.subr.bf16.mxu0 0
        %2939 = vmatpush1.bf16.xpose.msra.mxu0 0
        %2940 = vmatprep.subr.bf16.mxu0 0
        %2941 = vmatpush1.bf16.xpose.msra.mxu0 0
        %2942 = vmatprep.subr.bf16.mxu0 0
        %2943 = vmatpush1.bf16.xpose.msra.mxu0 0
        %2944 = vmatprep.mubr.bf16.mxu0 0
        %2945 = vmatmul.mubr.bf16.gmra.mrb[0].mxu0 %v2907
        %v2946 = vpop.f32.mrb[0].mxu0
        %v2947 = vadd.f32 0.0, %v2946
        %v2948 = vpop.f32.mrb[0].mxu0
        %v2949 = vpop.f32.mrb[0].mxu0
        %v2950 = vpop.f32.mrb[0].mxu0
        %2951 = vdwg.mxu0
        %v2953 = vsel %vm1312, %v2513, 0
        %v2956 = vsel %vm1312, %v2663, 0
        %2958 = vmatprep.subr.bf16.mxu0 0
        %2959 = vmatpush1.bf16.xpose.msra.mxu0 %v2956
        %2960 = vmatprep.subr.bf16.mxu0 0
        %2961 = vmatpush1.bf16.xpose.msra.mxu0 0
        %2962 = vmatprep.subr.bf16.mxu0 0
        %2963 = vmatpush1.bf16.xpose.msra.mxu0 0
        %2964 = vmatprep.subr.bf16.mxu0 0
        %2965 = vmatpush1.bf16.xpose.msra.mxu0 0
        %2966 = vmatprep.subr.bf16.mxu0 0
        %2967 = vmatpush1.bf16.xpose.msra.mxu0 0
        %2968 = vmatprep.subr.bf16.mxu0 0
        %2969 = vmatpush1.bf16.xpose.msra.mxu0 0
        %2970 = vmatprep.subr.bf16.mxu0 0
        %2971 = vmatpush1.bf16.xpose.msra.mxu0 0
        %2972 = vmatprep.subr.bf16.mxu0 0
        %2973 = vmatpush1.bf16.xpose.msra.mxu0 0
        %2974 = vmatprep.subr.bf16.mxu0 0
        %2975 = vmatpush1.bf16.xpose.msra.mxu0 0
        %2976 = vmatprep.subr.bf16.mxu0 0
        %2977 = vmatpush1.bf16.xpose.msra.mxu0 0
        %2978 = vmatprep.subr.bf16.mxu0 0
        %2979 = vmatpush1.bf16.xpose.msra.mxu0 0
        %2980 = vmatprep.subr.bf16.mxu0 0
        %2981 = vmatpush1.bf16.xpose.msra.mxu0 0
        %2982 = vmatprep.subr.bf16.mxu0 0
        %2983 = vmatpush1.bf16.xpose.msra.mxu0 0
        %2984 = vmatprep.subr.bf16.mxu0 0
        %2985 = vmatpush1.bf16.xpose.msra.mxu0 0
        %2986 = vmatprep.subr.bf16.mxu0 0
        %2987 = vmatpush1.bf16.xpose.msra.mxu0 0
        %2988 = vmatprep.subr.bf16.mxu0 0
        %2989 = vmatpush1.bf16.xpose.msra.mxu0 0
        %2990 = vmatprep.mubr.bf16.mxu0 0
        %2991 = vmatmul.mubr.bf16.gmra.mrb[0].mxu0 %v2953
        %v2992 = vpop.f32.mrb[0].mxu0
        %v2993 = vadd.f32 0.0, %v2992
        %v2994 = vpop.f32.mrb[0].mxu0
        %v2995 = vpop.f32.mrb[0].mxu0
        %v2996 = vpop.f32.mrb[0].mxu0
        %2997 = vdwg.mxu0
        %v2998 = vsel %vm1312, %v2855, -inf
        %2999 = vmax.xlane.f32.xlu0 %v2998
        %v3000 = vpop.xlane.xlu0 %2999
        %v3001 = vsel %vm1312, %v2901, -inf
        %3002 = vmax.xlane.f32.xlu0 %v3001
        %v3003 = vpop.xlane.xlu0 %3002
        %v3004 = vsel %vm1312, %v2947, -inf
        %3005 = vmax.xlane.f32.xlu0 %v3004
        %v3006 = vpop.xlane.xlu0 %3005
        %v3007 = vsel %vm1312, %v2993, -inf
        %3008 = vmax.xlane.f32.xlu0 %v3007
        %v3009 = vpop.xlane.xlu0 %3008
        %v3010 = vsub.f32 %v2855, %v3000
        %v3011 = vsub.f32 %v2901, %v3003
        %v3012 = vsub.f32 %v2947, %v3006
        %v3013 = vsub.f32 %v2993, %v3009
        %v3014 = vmul.f32 %v3010, 1.442695
        %v3015 = vpow.pop %v3014
        %v3016 = vmul.f32 %v3011, 1.442695
        %v3017 = vpow.pop %v3016
        %v3018 = vmul.f32 %v3012, 1.442695
        %v3019 = vpow.pop %v3018
        %v3020 = vmul.f32 %v3013, 1.442695
        %v3021 = vpow.pop %v3020
        %v3022 = vsel %vm1312, %v3015, 0.0
        %3023 = vadd.xlane.f32.xlu0 %v3022
        %v3024 = vpop.xlane.xlu0 %3023
        %v3025 = vsel %vm1312, %v3017, 0.0
        %3026 = vadd.xlane.f32.xlu0 %v3025
        %v3027 = vpop.xlane.xlu0 %3026
        %v3028 = vsel %vm1312, %v3019, 0.0
        %3029 = vadd.xlane.f32.xlu0 %v3028
        %v3030 = vpop.xlane.xlu0 %3029
        %v3031 = vsel %vm1312, %v3021, 0.0
        %3032 = vadd.xlane.f32.xlu0 %v3031
        %v3033 = vpop.xlane.xlu0 %3032
        %v3034 = vrcp.pop %v3024
        %v3035 = vrcp.pop %v3027
        %v3036 = vrcp.pop %v3030
        %v3037 = vrcp.pop %v3033
        %v3038 = vmul.f32 %v3015, %v3034
        %v3039 = vmul.f32 %v3017, %v3035
        %v3040 = vmul.f32 %v3019, %v3036
        %v3041 = vmul.f32 %v3021, %v3037
        %v3042 = vpack.c.bf16 %v3038, %v3038
        %v3043 = vpack.c.bf16 %v3039, %v3039
        %v3044 = vpack.c.bf16 %v3040, %v3040
        %v3045 = vpack.c.bf16 %v3041, %v3041
        %v3047 = vsel %vm1312, %v3042, 0
        %v3050 = vsel %vm1548, %v2810, 0
        %3052 = vmatprep.subr.bf16.mxu0 0
        %3053 = vmatpush1.bf16.msra.mxu0 %v3050
        %3054 = vmatprep.subr.bf16.mxu0 0
        %3055 = vmatpush1.bf16.msra.mxu0 0
        %3056 = vmatprep.subr.bf16.mxu0 0
        %3057 = vmatpush1.bf16.msra.mxu0 0
        %3058 = vmatprep.subr.bf16.mxu0 0
        %3059 = vmatpush1.bf16.msra.mxu0 0
        %3060 = vmatprep.subr.bf16.mxu0 0
        %3061 = vmatpush1.bf16.msra.mxu0 0
        %3062 = vmatprep.subr.bf16.mxu0 0
        %3063 = vmatpush1.bf16.msra.mxu0 0
        %3064 = vmatprep.subr.bf16.mxu0 0
        %3065 = vmatpush1.bf16.msra.mxu0 0
        %3066 = vmatprep.subr.bf16.mxu0 0
        %3067 = vmatpush1.bf16.msra.mxu0 0
        %3068 = vmatprep.subr.bf16.mxu0 0
        %3069 = vmatpush1.bf16.msra.mxu0 0
        %3070 = vmatprep.subr.bf16.mxu0 0
        %3071 = vmatpush1.bf16.msra.mxu0 0
        %3072 = vmatprep.subr.bf16.mxu0 0
        %3073 = vmatpush1.bf16.msra.mxu0 0
        %3074 = vmatprep.subr.bf16.mxu0 0
        %3075 = vmatpush1.bf16.msra.mxu0 0
        %3076 = vmatprep.subr.bf16.mxu0 0
        %3077 = vmatpush1.bf16.msra.mxu0 0
        %3078 = vmatprep.subr.bf16.mxu0 0
        %3079 = vmatpush1.bf16.msra.mxu0 0
        %3080 = vmatprep.subr.bf16.mxu0 0
        %3081 = vmatpush1.bf16.msra.mxu0 0
        %3082 = vmatprep.subr.bf16.mxu0 0
        %3083 = vmatpush1.bf16.msra.mxu0 0
        %3084 = vmatprep.mubr.bf16.mxu0 0
        %3085 = vmatmul.mubr.bf16.gmra.mrb[0].mxu0 %v3047
        %v3086 = vpop.f32.mrb[0].mxu0
        %v3087 = vadd.f32 0.0, %v3086
        %v3088 = vpop.f32.mrb[0].mxu0
        %v3089 = vpop.f32.mrb[0].mxu0
        %v3090 = vpop.f32.mrb[0].mxu0
        %3091 = vdwg.mxu0
        %v3093 = vsel %vm1312, %v3043, 0
        %v3096 = vsel %vm1548, %v2811, 0
        %3098 = vmatprep.subr.bf16.mxu0 0
        %3099 = vmatpush1.bf16.msra.mxu0 %v3096
        %3100 = vmatprep.subr.bf16.mxu0 0
        %3101 = vmatpush1.bf16.msra.mxu0 0
        %3102 = vmatprep.subr.bf16.mxu0 0
        %3103 = vmatpush1.bf16.msra.mxu0 0
        %3104 = vmatprep.subr.bf16.mxu0 0
        %3105 = vmatpush1.bf16.msra.mxu0 0
        %3106 = vmatprep.subr.bf16.mxu0 0
        %3107 = vmatpush1.bf16.msra.mxu0 0
        %3108 = vmatprep.subr.bf16.mxu0 0
        %3109 = vmatpush1.bf16.msra.mxu0 0
        %3110 = vmatprep.subr.bf16.mxu0 0
        %3111 = vmatpush1.bf16.msra.mxu0 0
        %3112 = vmatprep.subr.bf16.mxu0 0
        %3113 = vmatpush1.bf16.msra.mxu0 0
        %3114 = vmatprep.subr.bf16.mxu0 0
        %3115 = vmatpush1.bf16.msra.mxu0 0
        %3116 = vmatprep.subr.bf16.mxu0 0
        %3117 = vmatpush1.bf16.msra.mxu0 0
        %3118 = vmatprep.subr.bf16.mxu0 0
        %3119 = vmatpush1.bf16.msra.mxu0 0
        %3120 = vmatprep.subr.bf16.mxu0 0
        %3121 = vmatpush1.bf16.msra.mxu0 0
        %3122 = vmatprep.subr.bf16.mxu0 0
        %3123 = vmatpush1.bf16.msra.mxu0 0
        %3124 = vmatprep.subr.bf16.mxu0 0
        %3125 = vmatpush1.bf16.msra.mxu0 0
        %3126 = vmatprep.subr.bf16.mxu0 0
        %3127 = vmatpush1.bf16.msra.mxu0 0
        %3128 = vmatprep.subr.bf16.mxu0 0
        %3129 = vmatpush1.bf16.msra.mxu0 0
        %3130 = vmatprep.mubr.bf16.mxu0 0
        %3131 = vmatmul.mubr.bf16.gmra.mrb[0].mxu0 %v3093
        %v3132 = vpop.f32.mrb[0].mxu0
        %v3133 = vadd.f32 0.0, %v3132
        %v3134 = vpop.f32.mrb[0].mxu0
        %v3135 = vpop.f32.mrb[0].mxu0
        %v3136 = vpop.f32.mrb[0].mxu0
        %3137 = vdwg.mxu0
        %v3139 = vsel %vm1312, %v3044, 0
        %v3142 = vsel %vm1548, %v2812, 0
        %3144 = vmatprep.subr.bf16.mxu0 0
        %3145 = vmatpush1.bf16.msra.mxu0 %v3142
        %3146 = vmatprep.subr.bf16.mxu0 0
        %3147 = vmatpush1.bf16.msra.mxu0 0
        %3148 = vmatprep.subr.bf16.mxu0 0
        %3149 = vmatpush1.bf16.msra.mxu0 0
        %3150 = vmatprep.subr.bf16.mxu0 0
        %3151 = vmatpush1.bf16.msra.mxu0 0
        %3152 = vmatprep.subr.bf16.mxu0 0
        %3153 = vmatpush1.bf16.msra.mxu0 0
        %3154 = vmatprep.subr.bf16.mxu0 0
        %3155 = vmatpush1.bf16.msra.mxu0 0
        %3156 = vmatprep.subr.bf16.mxu0 0
        %3157 = vmatpush1.bf16.msra.mxu0 0
        %3158 = vmatprep.subr.bf16.mxu0 0
        %3159 = vmatpush1.bf16.msra.mxu0 0
        %3160 = vmatprep.subr.bf16.mxu0 0
        %3161 = vmatpush1.bf16.msra.mxu0 0
        %3162 = vmatprep.subr.bf16.mxu0 0
        %3163 = vmatpush1.bf16.msra.mxu0 0
        %3164 = vmatprep.subr.bf16.mxu0 0
        %3165 = vmatpush1.bf16.msra.mxu0 0
        %3166 = vmatprep.subr.bf16.mxu0 0
        %3167 = vmatpush1.bf16.msra.mxu0 0
        %3168 = vmatprep.subr.bf16.mxu0 0
        %3169 = vmatpush1.bf16.msra.mxu0 0
        %3170 = vmatprep.subr.bf16.mxu0 0
        %3171 = vmatpush1.bf16.msra.mxu0 0
        %3172 = vmatprep.subr.bf16.mxu0 0
        %3173 = vmatpush1.bf16.msra.mxu0 0
        %3174 = vmatprep.subr.bf16.mxu0 0
        %3175 = vmatpush1.bf16.msra.mxu0 0
        %3176 = vmatprep.mubr.bf16.mxu0 0
        %3177 = vmatmul.mubr.bf16.gmra.mrb[0].mxu0 %v3139
        %v3178 = vpop.f32.mrb[0].mxu0
        %v3179 = vadd.f32 0.0, %v3178
        %v3180 = vpop.f32.mrb[0].mxu0
        %v3181 = vpop.f32.mrb[0].mxu0
        %v3182 = vpop.f32.mrb[0].mxu0
        %3183 = vdwg.mxu0
        %v3185 = vsel %vm1312, %v3045, 0
        %v3188 = vsel %vm1548, %v2813, 0
        %3190 = vmatprep.subr.bf16.mxu0 0
        %3191 = vmatpush1.bf16.msra.mxu0 %v3188
        %3192 = vmatprep.subr.bf16.mxu0 0
        %3193 = vmatpush1.bf16.msra.mxu0 0
        %3194 = vmatprep.subr.bf16.mxu0 0
        %3195 = vmatpush1.bf16.msra.mxu0 0
        %3196 = vmatprep.subr.bf16.mxu0 0
        %3197 = vmatpush1.bf16.msra.mxu0 0
        %3198 = vmatprep.subr.bf16.mxu0 0
        %3199 = vmatpush1.bf16.msra.mxu0 0
        %3200 = vmatprep.subr.bf16.mxu0 0
        %3201 = vmatpush1.bf16.msra.mxu0 0
        %3202 = vmatprep.subr.bf16.mxu0 0
        %3203 = vmatpush1.bf16.msra.mxu0 0
        %3204 = vmatprep.subr.bf16.mxu0 0
        %3205 = vmatpush1.bf16.msra.mxu0 0
        %3206 = vmatprep.subr.bf16.mxu0 0
        %3207 = vmatpush1.bf16.msra.mxu0 0
        %3208 = vmatprep.subr.bf16.mxu0 0
        %3209 = vmatpush1.bf16.msra.mxu0 0
        %3210 = vmatprep.subr.bf16.mxu0 0
        %3211 = vmatpush1.bf16.msra.mxu0 0
        %3212 = vmatprep.subr.bf16.mxu0 0
        %3213 = vmatpush1.bf16.msra.mxu0 0
        %3214 = vmatprep.subr.bf16.mxu0 0
        %3215 = vmatpush1.bf16.msra.mxu0 0
        %3216 = vmatprep.subr.bf16.mxu0 0
        %3217 = vmatpush1.bf16.msra.mxu0 0
        %3218 = vmatprep.subr.bf16.mxu0 0
        %3219 = vmatpush1.bf16.msra.mxu0 0
        %3220 = vmatprep.subr.bf16.mxu0 0
        %3221 = vmatpush1.bf16.msra.mxu0 0
        %3222 = vmatprep.mubr.bf16.mxu0 0
        %3223 = vmatmul.mubr.bf16.gmra.mrb[0].mxu0 %v3185
        %v3224 = vpop.f32.mrb[0].mxu0
        %v3225 = vadd.f32 0.0, %v3224
        %v3226 = vpop.f32.mrb[0].mxu0
        %v3227 = vpop.f32.mrb[0].mxu0
        %v3228 = vpop.f32.mrb[0].mxu0
        %3229 = vdwg.mxu0
        %v3230 = vcombine.low %v3087, %v3179
        %v3231 = vcombine.high %v3087, %v3179
        %v3233 = vunpack.c.l.s4 1983009808
        %v3234 = vunpack.c.0.s8 %v3233
        %v3235 = vlaneseq
        %v3236 = vshrl.u32 %v3235, 7
        %v3237 = vsub.s32 %v3234, %v3236
        %v3238 = vrot.slane %v3230, %v3237
        %v3240 = vunpack.c.l.s4 1983009808
        %v3241 = vunpack.c.0.s8 %v3240
        %v3242 = vlaneseq
        %v3243 = vshrl.u32 %v3242, 7
        %v3244 = vsub.s32 %v3241, %v3243
        %v3245 = vrot.slane %v3231, %v3244
        %v3246 = vcombine.low %v3133, %v3225
        %v3247 = vcombine.high %v3133, %v3225
        %v3249 = vunpack.c.l.s4 1983009808
        %v3250 = vunpack.c.0.s8 %v3249
        %v3251 = vlaneseq
        %v3252 = vshrl.u32 %v3251, 7
        %v3253 = vsub.s32 %v3250, %v3252
        %v3254 = vrot.slane %v3246, %v3253
        %v3256 = vunpack.c.l.s4 1983009808
        %v3257 = vunpack.c.0.s8 %v3256
        %v3258 = vlaneseq
        %v3259 = vshrl.u32 %v3258, 7
        %v3260 = vsub.s32 %v3257, %v3259
        %v3261 = vrot.slane %v3247, %v3260
        %v3262 = vcombine.low %v3238, %v3254
        %v3263 = vcombine.high %v3238, %v3254
        %v3265 = vunpack.c.l.s4 1934713408
        %v3266 = vunpack.c.0.s8 %v3265
        %v3267 = vlaneseq
        %v3268 = vshrl.u32 %v3267, 7
        %v3269 = vsub.s32 %v3266, %v3268
        %v3270 = vrot.slane %v3262, %v3269
        %v3272 = vunpack.c.l.s4 1934713408
        %v3273 = vunpack.c.0.s8 %v3272
        %v3274 = vlaneseq
        %v3275 = vshrl.u32 %v3274, 7
        %v3276 = vsub.s32 %v3273, %v3275
        %v3277 = vrot.slane %v3263, %v3276
        %v3278 = vcombine.low %v3245, %v3261
        %v3279 = vcombine.high %v3245, %v3261
        %v3281 = vunpack.c.l.s4 1934713408
        %v3282 = vunpack.c.0.s8 %v3281
        %v3283 = vlaneseq
        %v3284 = vshrl.u32 %v3283, 7
        %v3285 = vsub.s32 %v3282, %v3284
        %v3286 = vrot.slane %v3278, %v3285
        %v3288 = vunpack.c.l.s4 1934713408
        %v3289 = vunpack.c.0.s8 %v3288
        %v3290 = vlaneseq
        %v3291 = vshrl.u32 %v3290, 7
        %v3292 = vsub.s32 %v3289, %v3291
        %v3293 = vrot.slane %v3279, %v3292
        %v3294 = vcombine.high %v3270, 0.0
        %v3295 = vcombine.high %v3277, 0.0
        %v3296 = vcombine.high %v3286, 0.0
        %v3297 = vcombine.high %v3293, 0.0
        %v3298 = vcombine.low %v3270, %v3277
        %v3300 = vunpack.c.l.s4 1983009808
        %v3301 = vunpack.c.0.s8 %v3300
        %v3302 = vlaneseq
        %v3303 = vshrl.u32 %v3302, 7
        %v3304 = vsub.s32 %v3301, %v3303
        %v3305 = vrot.slane %v3298, %v3304
        %v3306 = vcombine.low %v3294, %v3295
        %v3308 = vunpack.c.l.s4 1983009808
        %v3309 = vunpack.c.0.s8 %v3308
        %v3310 = vlaneseq
        %v3311 = vshrl.u32 %v3310, 7
        %v3312 = vsub.s32 %v3309, %v3311
        %v3313 = vrot.slane %v3306, %v3312
        %v3314 = vcombine.low %v3286, %v3293
        %v3316 = vunpack.c.l.s4 1983009808
        %v3317 = vunpack.c.0.s8 %v3316
        %v3318 = vlaneseq
        %v3319 = vshrl.u32 %v3318, 7
        %v3320 = vsub.s32 %v3317, %v3319
        %v3321 = vrot.slane %v3314, %v3320
        %v3322 = vcombine.low %v3296, %v3297
        %v3324 = vunpack.c.l.s4 1983009808
        %v3325 = vunpack.c.0.s8 %v3324
        %v3326 = vlaneseq
        %v3327 = vshrl.u32 %v3326, 7
        %v3328 = vsub.s32 %v3325, %v3327
        %v3329 = vrot.slane %v3322, %v3328
        %v3330 = vcombine.low %v3305, %v3313
        %v3331 = vcombine.high %v3305, %v3313
        %v3333 = vunpack.c.l.s4 1934713408
        %v3334 = vunpack.c.0.s8 %v3333
        %v3335 = vlaneseq
        %v3336 = vshrl.u32 %v3335, 7
        %v3337 = vsub.s32 %v3334, %v3336
        %v3338 = vrot.slane %v3330, %v3337
        %v3340 = vunpack.c.l.s4 1934713408
        %v3341 = vunpack.c.0.s8 %v3340
        %v3342 = vlaneseq
        %v3343 = vshrl.u32 %v3342, 7
        %v3344 = vsub.s32 %v3341, %v3343
        %v3345 = vrot.slane %v3331, %v3344
        %v3346 = vcombine.low %v3321, %v3329
        %v3347 = vcombine.high %v3321, %v3329
        %v3349 = vunpack.c.l.s4 1934713408
        %v3350 = vunpack.c.0.s8 %v3349
        %v3351 = vlaneseq
        %v3352 = vshrl.u32 %v3351, 7
        %v3353 = vsub.s32 %v3350, %v3352
        %v3354 = vrot.slane %v3346, %v3353
        %v3356 = vunpack.c.l.s4 1934713408
        %v3357 = vunpack.c.0.s8 %v3356
        %v3358 = vlaneseq
        %v3359 = vshrl.u32 %v3358, 7
        %v3360 = vsub.s32 %v3357, %v3359
        %v3361 = vrot.slane %v3347, %v3360
        %v3362 = vcombine.low %v3338, %v3354
        %v3363 = vcombine.high %v3338, %v3354
        %v3364 = vcombine.low %v3345, %v3361
        %v3365 = vcombine.high %v3345, %v3361
        %3367 = vrot.lane.b32.xlu0 %v3363, 8
        %v3368 = vpop.permute.xlu0 %3367
        %3371 = vrot.lane.b32.xlu0 %v3364, 16
        %v3372 = vpop.permute.xlu0 %3371
        %3375 = vrot.lane.b32.xlu0 %v3365, 24
        %v3376 = vpop.permute.xlu0 %3375
        %v3378 = vsel %vm1312, %v3362, %v3368
        %v3379 = vsel %vm1879, %v3378, %v3372
        %v3380 = vsel %vm1881, %v3379, %v3376
        %v3381 = vpack.c.bf16 %v3380, %v3380
        %s3382 = scalar_lea.vmem [#allocation7], 16
        %v3383 = vld [vmem:[%s3382] sm:$0xf]
        %v3384 = vld [vmem:[%s3382 + $0x4] sm:$0xf]
        %v3385 = vld [vmem:[%s3382 + $0x8] sm:$0xf]
        %v3386 = vld [vmem:[%s3382 + $0xc] sm:$0xf]
        %s3387 = scalar_lea.vmem %s11, 1
        %v3388 = vld [vmem:[%s3387] sm:$0x1]
        %v3390 = vlaneseq
        %v3391 = vshrl.u32 %v3390, 7
        %v3392 = vsub.s32 0, %v3391
        %v3393 = vrot.slane %v3388, %v3392
        %v3399 = vunpack.c.l.b16 %v3383
        %v3400 = vunpack.c.l.b16 %v3384
        %v3401 = vunpack.c.l.b16 %v3385
        %v3402 = vunpack.c.l.b16 %v3386
        %v3403 = vpack.c.b16 %v3400, %v3399
        %v3404 = vpack.c.b16 %v3402, %v3401
        %v3408 = vsel %vm639, %v3381, 0
        %3410 = vmatprep.subr.bf16.mxu0 0
        %3411 = vmatpush1.bf16.msra.mxu0 %v3403
        %3412 = vmatprep.subr.bf16.mxu0 0
        %3413 = vmatpush1.bf16.msra.mxu0 %v3404
        %3414 = vmatprep.subr.bf16.mxu0 0
        %3415 = vmatpush1.bf16.msra.mxu0 0
        %3416 = vmatprep.subr.bf16.mxu0 0
        %3417 = vmatpush1.bf16.msra.mxu0 0
        %3418 = vmatprep.subr.bf16.mxu0 0
        %3419 = vmatpush1.bf16.msra.mxu0 0
        %3420 = vmatprep.subr.bf16.mxu0 0
        %3421 = vmatpush1.bf16.msra.mxu0 0
        %3422 = vmatprep.subr.bf16.mxu0 0
        %3423 = vmatpush1.bf16.msra.mxu0 0
        %3424 = vmatprep.subr.bf16.mxu0 0
        %3425 = vmatpush1.bf16.msra.mxu0 0
        %3426 = vmatprep.subr.bf16.mxu0 0
        %3427 = vmatpush1.bf16.msra.mxu0 0
        %3428 = vmatprep.subr.bf16.mxu0 0
        %3429 = vmatpush1.bf16.msra.mxu0 0
        %3430 = vmatprep.subr.bf16.mxu0 0
        %3431 = vmatpush1.bf16.msra.mxu0 0
        %3432 = vmatprep.subr.bf16.mxu0 0
        %3433 = vmatpush1.bf16.msra.mxu0 0
        %3434 = vmatprep.subr.bf16.mxu0 0
        %3435 = vmatpush1.bf16.msra.mxu0 0
        %3436 = vmatprep.subr.bf16.mxu0 0
        %3437 = vmatpush1.bf16.msra.mxu0 0
        %3438 = vmatprep.subr.bf16.mxu0 0
        %3439 = vmatpush1.bf16.msra.mxu0 0
        %3440 = vmatprep.subr.bf16.mxu0 0
        %3441 = vmatpush1.bf16.msra.mxu0 0
        %3442 = vmatprep.mubr.bf16.mxu0 0
        %3443 = vmatmul.mubr.bf16.gmra.mrb[0].mxu0 %v3408
        %v3444 = vpop.f32.mrb[0].mxu0
        %v3445 = vadd.f32 %v3393, %v3444
        %v3446 = vpop.f32.mrb[0].mxu0
        %v3447 = vpop.f32.mrb[0].mxu0
        %v3448 = vpop.f32.mrb[0].mxu0
        %3449 = vdwg.mxu0
        %v3450 = vadd.f32 %v2132, %v3445
        %s3451 = scalar_lea.vmem %s12, 1
        %v3452 = vld [vmem:[%s3451] sm:$0x1]
        %s3453 = scalar_lea.vmem %s13, 1
        %v3454 = vld [vmem:[%s3453] sm:$0x1]
        %v3455 = vsel %vm639, %v3450, 0.0
        %3456 = vadd.xlane.f32.xlu0 %v3455
        %v3457 = vpop.xlane.xlu0 %3456
        %v3458 = vmul.f32 %v3457, %v643
        %v3459 = vsub.f32 %v3450, %v3458
        %v3460 = vmul.f32 %v3459, %v3459
        %v3461 = vsel %vm639, %v3460, 0.0
        %3462 = vadd.xlane.f32.xlu0 %v3461
        %v3463 = vpop.xlane.xlu0 %3462
        %v3464 = vmul.f32 %v3463, %v643
        %v3465 = vadd.f32 %v3464, 1e-05
        %v3466 = vrsqrt.pop %v3465
        %v3467 = vmul.f32 %v3459, %v3466
        %v3469 = vlaneseq
        %v3470 = vshrl.u32 %v3469, 7
        %v3471 = vsub.s32 0, %v3470
        %v3472 = vrot.slane %v3452, %v3471
        %v3474 = vmul.f32 %v3467, %v3472
        %v3476 = vlaneseq
        %v3477 = vshrl.u32 %v3476, 7
        %v3478 = vsub.s32 0, %v3477
        %v3479 = vrot.slane %v3454, %v3478
        %v3481 = vadd.f32 %v3474, %v3479
        %v3482 = vpack.c.bf16 %v3481, %v3481
        %s3483 = scalar_lea.vmem [#allocation8], 16
        %v3484 = vld [vmem:[%s3483] sm:$0xf]
        %v3485 = vld [vmem:[%s3483 + $0x4] sm:$0xf]
        %v3486 = vld [vmem:[%s3483 + $0x8] sm:$0xf]
        %v3487 = vld [vmem:[%s3483 + $0xc] sm:$0xf]
        %s3488 = scalar_lea.vmem %s15, 1
        %v3489 = vld [vmem:[%s3488] sm:$0x1]
        %v3491 = vlaneseq
        %v3492 = vshrl.u32 %v3491, 7
        %v3493 = vsub.s32 0, %v3492
        %v3494 = vrot.slane %v3489, %v3493
        %v3500 = vunpack.c.l.b16 %v3484
        %v3501 = vunpack.c.l.b16 %v3485
        %v3502 = vunpack.c.l.b16 %v3486
        %v3503 = vunpack.c.l.b16 %v3487
        %v3504 = vpack.c.b16 %v3501, %v3500
        %v3505 = vpack.c.b16 %v3503, %v3502
        %v3509 = vsel %vm639, %v3482, 0
        %3511 = vmatprep.subr.bf16.mxu0 0
        %3512 = vmatpush1.bf16.msra.mxu0 %v3504
        %3513 = vmatprep.subr.bf16.mxu0 0
        %3514 = vmatpush1.bf16.msra.mxu0 %v3505
        %3515 = vmatprep.subr.bf16.mxu0 0
        %3516 = vmatpush1.bf16.msra.mxu0 0
        %3517 = vmatprep.subr.bf16.mxu0 0
        %3518 = vmatpush1.bf16.msra.mxu0 0
        %3519 = vmatprep.subr.bf16.mxu0 0
        %3520 = vmatpush1.bf16.msra.mxu0 0
        %3521 = vmatprep.subr.bf16.mxu0 0
        %3522 = vmatpush1.bf16.msra.mxu0 0
        %3523 = vmatprep.subr.bf16.mxu0 0
        %3524 = vmatpush1.bf16.msra.mxu0 0
        %3525 = vmatprep.subr.bf16.mxu0 0
        %3526 = vmatpush1.bf16.msra.mxu0 0
        %3527 = vmatprep.subr.bf16.mxu0 0
        %3528 = vmatpush1.bf16.msra.mxu0 0
        %3529 = vmatprep.subr.bf16.mxu0 0
        %3530 = vmatpush1.bf16.msra.mxu0 0
        %3531 = vmatprep.subr.bf16.mxu0 0
        %3532 = vmatpush1.bf16.msra.mxu0 0
        %3533 = vmatprep.subr.bf16.mxu0 0
        %3534 = vmatpush1.bf16.msra.mxu0 0
        %3535 = vmatprep.subr.bf16.mxu0 0
        %3536 = vmatpush1.bf16.msra.mxu0 0
        %3537 = vmatprep.subr.bf16.mxu0 0
        %3538 = vmatpush1.bf16.msra.mxu0 0
        %3539 = vmatprep.subr.bf16.mxu0 0
        %3540 = vmatpush1.bf16.msra.mxu0 0
        %3541 = vmatprep.subr.bf16.mxu0 0
        %3542 = vmatpush1.bf16.msra.mxu0 0
        %3543 = vmatprep.mubr.bf16.mxu0 0
        %3544 = vmatmul.mubr.bf16.gmra.mrb[0].mxu0 %v3509
        %v3545 = vpop.f32.mrb[0].mxu0
        %v3546 = vadd.f32 %v3494, %v3545
        %v3547 = vpop.f32.mrb[0].mxu0
        %v3548 = vpop.f32.mrb[0].mxu0
        %v3549 = vpop.f32.mrb[0].mxu0
        %3550 = vdwg.mxu0
        %v3551 = vmax.f32 %v3546, 0.0
        %v3552 = vpack.c.bf16 %v3551, %v3551
        %s3553 = scalar_lea.vmem %s16, 32
        %v3554 = vld [vmem:[%s3553] sm:$0xf]
        %v3555 = vld [vmem:[%s3553 + $0x4] sm:$0xf]
        %v3556 = vld [vmem:[%s3553 + $0x8] sm:$0xf]
        %v3557 = vld [vmem:[%s3553 + $0xc] sm:$0xf]
        %v3558 = vld [vmem:[%s3553 + $0x10] sm:$0xf]
        %v3559 = vld [vmem:[%s3553 + $0x14] sm:$0xf]
        %v3560 = vld [vmem:[%s3553 + $0x18] sm:$0xf]
        %v3561 = vld [vmem:[%s3553 + $0x1c] sm:$0xf]
        %s3562 = scalar_lea.vmem %s17, 1
        %v3563 = vld [vmem:[%s3562] sm:$0x1]
        %v3565 = vlaneseq
        %v3566 = vshrl.u32 %v3565, 7
        %v3567 = vsub.s32 0, %v3566
        %v3568 = vrot.slane %v3563, %v3567
        %v3578 = vunpack.c.l.b16 %v3554
        %v3579 = vunpack.c.l.b16 %v3555
        %v3580 = vunpack.c.l.b16 %v3556
        %v3581 = vunpack.c.l.b16 %v3557
        %v3582 = vunpack.c.l.b16 %v3558
        %v3583 = vunpack.c.l.b16 %v3559
        %v3584 = vunpack.c.l.b16 %v3560
        %v3585 = vunpack.c.l.b16 %v3561
        %v3586 = vpack.c.b16 %v3579, %v3578
        %v3587 = vpack.c.b16 %v3581, %v3580
        %v3588 = vpack.c.b16 %v3583, %v3582
        %v3589 = vpack.c.b16 %v3585, %v3584
        %v3595 = vsel %vm2088, %v3552, 0
        %3597 = vmatprep.subr.bf16.mxu0 0
        %3598 = vmatpush1.bf16.msra.mxu0 %v3586
        %3599 = vmatprep.subr.bf16.mxu0 0
        %3600 = vmatpush1.bf16.msra.mxu0 %v3587
        %3601 = vmatprep.subr.bf16.mxu0 0
        %3602 = vmatpush1.bf16.msra.mxu0 %v3588
        %3603 = vmatprep.subr.bf16.mxu0 0
        %3604 = vmatpush1.bf16.msra.mxu0 %v3589
        %3605 = vmatprep.subr.bf16.mxu0 0
        %3606 = vmatpush1.bf16.msra.mxu0 0
        %3607 = vmatprep.subr.bf16.mxu0 0
        %3608 = vmatpush1.bf16.msra.mxu0 0
        %3609 = vmatprep.subr.bf16.mxu0 0
        %3610 = vmatpush1.bf16.msra.mxu0 0
        %3611 = vmatprep.subr.bf16.mxu0 0
        %3612 = vmatpush1.bf16.msra.mxu0 0
        %3613 = vmatprep.subr.bf16.mxu0 0
        %3614 = vmatpush1.bf16.msra.mxu0 0
        %3615 = vmatprep.subr.bf16.mxu0 0
        %3616 = vmatpush1.bf16.msra.mxu0 0
        %3617 = vmatprep.subr.bf16.mxu0 0
        %3618 = vmatpush1.bf16.msra.mxu0 0
        %3619 = vmatprep.subr.bf16.mxu0 0
        %3620 = vmatpush1.bf16.msra.mxu0 0
        %3621 = vmatprep.subr.bf16.mxu0 0
        %3622 = vmatpush1.bf16.msra.mxu0 0
        %3623 = vmatprep.subr.bf16.mxu0 0
        %3624 = vmatpush1.bf16.msra.mxu0 0
        %3625 = vmatprep.subr.bf16.mxu0 0
        %3626 = vmatpush1.bf16.msra.mxu0 0
        %3627 = vmatprep.subr.bf16.mxu0 0
        %3628 = vmatpush1.bf16.msra.mxu0 0
        %3629 = vmatprep.mubr.bf16.mxu0 0
        %3630 = vmatmul.mubr.bf16.gmra.mrb[0].mxu0 %v3595
        %v3631 = vpop.f32.mrb[0].mxu0
        %v3632 = vadd.f32 %v3568, %v3631
        %v3633 = vpop.f32.mrb[0].mxu0
        %v3634 = vpop.f32.mrb[0].mxu0
        %v3635 = vpop.f32.mrb[0].mxu0
        %3636 = vdwg.mxu0
        %v3637 = vadd.f32 %v3450, %v3632
        %3638 = vst.msk [vmem:[%s632] sm:$0xff] %vm639, %v3637
        %s3639 = sand.u32 %s428, 1
        %s3640 = scalar_lea.sflag [#allocation4], %s3639
        %s3641 = sand.u32 %s428, 1
        %s3642 = smul.addr %s3641, 8
        %s3643 = scalar_lea.vmem [#allocation10], %s3642
        // Predicated region
        $region109: #{tpu_custom_call.1} parent=91 // pred_check
          %p3644 = pneg %p438
        $region110: #{tpu_custom_call.1} parent=91 // pred_check_branch
          %3646 = sbr.rel (%p3644) target = $region112
        $region111: #{tpu_custom_call.1} parent=91 // pred_region
          %s3648 = ssub.s32 128, 128
          %3649 = vsyncadd %s3640, %s3648
          %s3650 = smul.addr %s37, 128
          %s3651 = scalar_lea.hbm %s18, %s3650
          %s3653 = sshll.u32 %s3643, 4
          %s3654 = int_to_ptr.vmem [resolvable:$true] %s3653
          %3656 = dma.vmem_to_hbm [thread:$0]  %s3654, 128, %s3651, %s3640
        $region112: #{tpu_custom_call.1} parent=91 // pred_fallthru
          _
      $region92: #{tpu_custom_call.1} parent=5 // pred_fallthru
        _
      %p3657 = scmp.le.s32.totalorder 2, %s32
      // Predicated region
      $region113: #{tpu_custom_call.1} parent=5 // pred_check
        %p3658 = pneg %p3657
      $region114: #{tpu_custom_call.1} parent=5 // pred_check_branch
        %3660 = sbr.rel (%p3658) target = $region116
      $region115: #{tpu_custom_call.1} parent=5 // pred_region
        %s3661 = ssub.s32 %s32, 2
        // Predicated region
        $region117: #{tpu_custom_call.1} parent=115 // pred_check
          %p3662 = pneg %p444
        $region118: #{tpu_custom_call.1} parent=115 // pred_check_branch
          %3664 = sbr.rel (%p3662) target = $region120
        $region119: #{tpu_custom_call.1} parent=115 // pred_region
          %s3665 = sand.u32 %s429, 1
          %s3666 = scalar_lea.sflag [#allocation4], %s3665
          %s3667 = sand.u32 %s429, 1
          %s3668 = smul.addr %s3667, 8
          %s3669 = scalar_lea.vmem [#allocation10], %s3668
          %3670 = dma.done %s3666, 128
        $region120: #{tpu_custom_call.1} parent=115 // pred_fallthru
          _
      $region116: #{tpu_custom_call.1} parent=5 // pred_fallthru
        _
    $region6: #{tpu_custom_call.1} parent=1 // loop_footer
      %s36 = sadd.s32 1, %s32
    $region7: #{tpu_custom_call.1} parent=1 // loop_footer_branch
      %31 = sbr.rel target = $region3
    $region8: #{tpu_custom_call.1} parent=1 // loop_exit
      _
    %3671 = vsyncpa [#allocation3], 1
    %s3672 = scalar_lea.sflag [#allocation3], 1
    %3673 = vsyncpa %s3672, 1
    %3674 = vsyncpa [#allocation6], 1
    %3675 = vsyncpa [#allocation9], 1
    %3676 = vsyncpa [#allocation4], 1
    %s3677 = scalar_lea.sflag [#allocation4], 1
    %3678 = vsyncpa %s3677, 1

</llo_original>
